<compile_context>
chip_gen: v5e
topology: v5e:2x2
jax: 0.10.0
libtpu: 0.0.40
codegen_flags: <defaults>
</compile_context>

<pallas_src>
import functools

import jax
import jax.numpy as jnp
from jax import lax
from jax.experimental import pallas as pl
from jax.experimental.pallas import tpu as pltpu

N_BLOCKS = 5
LEAKY_SLOPE = 0.2
_TILE_CANDIDATES = (128, 256, 384, 512)


def _round_up(x, m):
    return ((x + m - 1) // m) * m


def _choose_tile_t(t, b):
    """Lane-dense (multiple-of-128) row tile that minimizes padding of T.

    Ties go to the largest tile (fewest ~0.35us grid steps), unless that would
    leave a single grid step in total: then prefer >= 2 steps so both v7x
    TensorCores get work (same padded length, so no extra FLOPs on 1-TC chips).
    """
    t = max(int(t), 1)
    pads = {c: _round_up(t, c) for c in _TILE_CANDIDATES}
    best_pad = min(pads.values())
    achieving = [c for c in _TILE_CANDIDATES if pads[c] == best_pad]
    tile = max(achieving)
    if b * (best_pad // tile) < 2:
        multi = [c for c in achieving if best_pad // c >= 2]
        if multi:
            tile = max(multi)
    return tile, best_pad


def _decoder_kernel(p_ref, nz_ref,
                    wp_ref,                  # (point_dim, H)  f32 (VPU path)
                    w0_ref, b0_ref,          # (5, H, H) mm, (5, 1, H) f32
                    w1_ref, b1_ref,          # (5, H, H) mm, (5, 1, H) f32
                    wo_ref, bo_ref,          # (1, H)   mm, (1, 1)    f32
                    out_ref):                # (1, 1, TILE_T) f32
    mm = w0_ref.dtype

    p = p_ref[0]                                               # (TILE_T, point_dim) f32
    point_dim = p.shape[-1]

    # fc_p as point_dim broadcast FMAs on the VPU (K=3 on the MXU would be
    # almost pure pipeline-fill).  The fc_z branch and both biases were hoisted
    # to the wrapper and arrive as nz (1, H) f32.
    net = nz_ref[0] + p[:, 0:1] * wp_ref[0:1, :]               # (TILE_T, H) f32
    for d in range(1, point_dim):
        net = net + p[:, d:d + 1] * wp_ref[d:d + 1, :]

    # 5 x ResnetBlockFC(H): net += fc_1(relu(fc_0(relu(net)))); residual in f32.
    for i in range(N_BLOCKS):
        h = jnp.maximum(net, 0.0).astype(mm)
        h = jnp.dot(h, w0_ref[i], preferred_element_type=jnp.float32) + b0_ref[i]
        h = jnp.maximum(h, 0.0).astype(mm)
        net = net + (jnp.dot(h, w1_ref[i], preferred_element_type=jnp.float32)
                     + b1_ref[i])

    # LeakyReLU(0.2), then Linear(H, 1) as a dot_general contracting the H dims
    # of wo (1,H) and h (TILE_T,H): lane-dense (1, TILE_T) result, no
    # materialized (TILE_T, H) transpose.
    h = jnp.where(net > 0, net, LEAKY_SLOPE * net).astype(mm)
    logits = lax.dot_general(wo_ref[...], h, (((1,), (1,)), ((), ())),
                             preferred_element_type=jnp.float32) + bo_ref[...]

    out_ref[0] = jax.nn.sigmoid(logits)                        # last_sig == True


@functools.partial(jax.jit, static_argnames=("matmul_dtype",))
def occ_simple_decoder(p, z, params, *, matmul_dtype=jnp.bfloat16):
    """p: (B, T, point_dim) f32, z: (B, z_dim) f32 -> (B, T) f32 (post-sigmoid).

    matmul_dtype controls the MXU operand dtype only (bf16 is the recommended
    default on every TPU generation, v5e included); residuals, biases and all
    elementwise math stay f32.  Expect ~1e-2-level post-sigmoid deviation from
    an f32 reference with bf16 operands (rounding through 5 residual blocks).
    """
    B, T, point_dim = p.shape
    H = params["wp_t"].shape[-1]

    # Hoisted z branch: fc_z(z) + bz + bp, one (1, H) row per batch element.
    net_z = (jnp.dot(z, params["wz_t"], precision="highest")
             + params["bz"] + params["bp"]).reshape(B, 1, H).astype(jnp.float32)

    tile_t, t_pad = _choose_tile_t(T, B)
    if t_pad != T:
        p = jnp.pad(p, ((0, 0), (0, t_pad - T), (0, 0)))
    n_t = t_pad // tile_t

    mm = matmul_dtype
    wp = params["wp_t"].astype(jnp.float32)            # consumed on the VPU
    w0 = params["w0_t"].astype(mm)
    w1 = params["w1_t"].astype(mm)
    wo = params["wo_t"].reshape(1, H).astype(mm)       # (H,1) -> lane-dense row
    b0 = params["b0"].astype(jnp.float32)
    b1 = params["b1"].astype(jnp.float32)
    bo = params["bo"].astype(jnp.float32)

    itemsize = jnp.dtype(mm).itemsize
    cost = pl.CostEstimate(
        flops=2 * B * t_pad * H * (point_dim + 10 * H + 1),
        transcendentals=B * t_pad,
        bytes_accessed=int(p.size * 4 + net_z.size * 4 + B * t_pad * 4
                           + wp.size * 4
                           + (w0.size + w1.size + wo.size) * itemsize
                           + (b0.size + b1.size + bo.size) * 4),
    )

    # Constant-index weights never re-DMA, so single-buffer them once the
    # double-buffered footprint is big enough to matter (irrelevant at H=128).
    weight_mode = (pl.Buffered(1)
                   if 2 * (w0.size + w1.size) * itemsize > (8 << 20) else None)

    def const_spec(shape):
        ndim = len(shape)
        idx = lambda b, t: (0,) * ndim
        if weight_mode is None:
            return pl.BlockSpec(shape, idx)
        return pl.BlockSpec(shape, idx, pipeline_mode=weight_mode)

    out = pl.pallas_call(
        _decoder_kernel,
        out_shape=jax.ShapeDtypeStruct((B, 1, t_pad), jnp.float32),
        grid_spec=pltpu.PrefetchScalarGridSpec(
            num_scalar_prefetch=0,
            grid=(B, n_t),
            in_specs=[
                pl.BlockSpec((1, tile_t, point_dim), lambda b, t: (b, t, 0)),  # p
                pl.BlockSpec((1, 1, H), lambda b, t: (b, 0, 0)),               # net_z
                const_spec((point_dim, H)),                                     # wp
                const_spec((N_BLOCKS, H, H)), const_spec((N_BLOCKS, 1, H)),     # w0, b0
                const_spec((N_BLOCKS, H, H)), const_spec((N_BLOCKS, 1, H)),     # w1, b1
                const_spec((1, H)), const_spec((1, 1)),                         # wo, bo
            ],
            out_specs=pl.BlockSpec((1, 1, tile_t), lambda b, t: (b, 0, t)),
        ),
        compiler_params=pltpu.CompilerParams(
            dimension_semantics=("parallel", "parallel")),
        cost_estimate=cost,
    )(p, net_z, wp, w0, b0, w1, b1, wo, bo)

    return out[:, 0, :T]   # drop point-padding; equals PyTorch out.squeeze(-1)


def init_params(key, point_dim, z_dim, hidden):
    """Deterministic synthetic parameters, stored pre-transposed as (in, out)."""
    ks = jax.random.split(key, 10)
    s = 0.1
    return {
        "wp_t": s * jax.random.normal(ks[0], (point_dim, hidden), jnp.float32),
        "bp":   s * jax.random.normal(ks[1], (1, hidden), jnp.float32),
        "wz_t": s * jax.random.normal(ks[2], (z_dim, hidden), jnp.float32),
        "bz":   s * jax.random.normal(ks[3], (1, hidden), jnp.float32),
        "w0_t": s * jax.random.normal(ks[4], (N_BLOCKS, hidden, hidden), jnp.float32),
        "b0":   s * jax.random.normal(ks[5], (N_BLOCKS, 1, hidden), jnp.float32),
        "w1_t": s * jax.random.normal(ks[6], (N_BLOCKS, hidden, hidden), jnp.float32),
        "b1":   s * jax.random.normal(ks[7], (N_BLOCKS, 1, hidden), jnp.float32),
        "wo_t": s * jax.random.normal(ks[8], (hidden, 1), jnp.float32),
        "bo":   s * jax.random.normal(ks[9], (1, 1), jnp.float32),
    }


def reference_decoder(p, z, params):
    """Pure-JAX f32 reference mirroring the PyTorch forward."""
    hp = jnp.dot(p, params["wp_t"], precision="highest") + params["bp"]
    hz = jnp.dot(z, params["wz_t"], precision="highest") + params["bz"]
    net = hp + hz[:, None, :]
    for i in range(N_BLOCKS):
        h = jnp.dot(jnp.maximum(net, 0.0), params["w0_t"][i],
                    precision="highest") + params["b0"][i]
        dx = jnp.dot(jnp.maximum(h, 0.0), params["w1_t"][i],
                     precision="highest") + params["b1"][i]
        net = net + dx
    h = jnp.where(net > 0, net, LEAKY_SLOPE * net)
    out = (jnp.dot(h, params["wo_t"], precision="highest") + params["bo"])[..., 0]
    return jax.nn.sigmoid(out)


if __name__ == "__main__":
    # Small shapes consistent with the module defaults (point_dim=3, z_dim=128,
    # hidden_size=128); T=300 exercises the padding-minimizing tile (384) path.
    B, T, POINT_DIM, Z_DIM, HIDDEN = 2, 300, 3, 128, 128

    key = jax.random.PRNGKey(0)
    kp, kz, kw = jax.random.split(key, 3)
    p = jax.random.normal(kp, (B, T, POINT_DIM), jnp.float32)
    z = jax.random.normal(kz, (B, Z_DIM), jnp.float32)
    params = init_params(kw, POINT_DIM, Z_DIM, HIDDEN)

    ref = reference_decoder(p, z, params)

    # Full-precision matmul path: tight check of kernel structure / math.
    out_f32 = jax.block_until_ready(
        occ_simple_decoder(p, z, params, matmul_dtype=jnp.float32))
    assert out_f32.shape == (B, T), out_f32.shape
    assert jnp.allclose(out_f32, ref, atol=1e-4, rtol=1e-4), (
        "f32 max abs err", float(jnp.max(jnp.abs(out_f32 - ref))))

    # Default bf16 matmul-operand path (recommended on all generations).
    out_bf16 = jax.block_until_ready(occ_simple_decoder(p, z, params))
    assert out_bf16.shape == (B, T), out_bf16.shape
    assert jnp.allclose(out_bf16, ref, atol=5e-2), (
        "bf16 max abs err", float(jnp.max(jnp.abs(out_bf16 - ref))))

    print("KERNEL_OK")
</pallas_src>

<mosaic_0001>
module attributes {stable_mosaic.version = 11 : i64} {
  func.func @_decoder_kernel(%arg0: i32, %arg1: i32, %arg2: memref<1x384x3xf32, #tpu.memory_space<vmem>>, %arg3: memref<1x1x128xf32, #tpu.memory_space<vmem>>, %arg4: memref<3x128xf32, #tpu.memory_space<vmem>>, %arg5: memref<5x128x128xf32, #tpu.memory_space<vmem>>, %arg6: memref<5x1x128xf32, #tpu.memory_space<vmem>>, %arg7: memref<5x128x128xf32, #tpu.memory_space<vmem>>, %arg8: memref<5x1x128xf32, #tpu.memory_space<vmem>>, %arg9: memref<1x128xf32, #tpu.memory_space<vmem>>, %arg10: memref<1x1xf32, #tpu.memory_space<vmem>>, %arg11: memref<1x1x384xf32, #tpu.memory_space<vmem>>) attributes {dimension_semantics = [#tpu.dimension_semantics<parallel>, #tpu.dimension_semantics<parallel>], iteration_bounds = array<i64: 2, 1>, scalar_prefetch = 0 : i64, scratch_operands = 0 : i64, tpu.core_type = #tpu.core_type<tc>, window_params = [{transform_indices = @transform_0, window_bounds = array<i64: 1, 384, 3>}, {transform_indices = @transform_1, window_bounds = array<i64: 1, 1, 128>}, {pipeline_mode = #tpu.pipeline_mode<synchronous>, transform_indices = @transform_2, window_bounds = array<i64: 3, 128>}, {pipeline_mode = #tpu.pipeline_mode<synchronous>, transform_indices = @transform_3, window_bounds = array<i64: 5, 128, 128>}, {pipeline_mode = #tpu.pipeline_mode<synchronous>, transform_indices = @transform_4, window_bounds = array<i64: 5, 1, 128>}, {pipeline_mode = #tpu.pipeline_mode<synchronous>, transform_indices = @transform_5, window_bounds = array<i64: 5, 128, 128>}, {pipeline_mode = #tpu.pipeline_mode<synchronous>, transform_indices = @transform_6, window_bounds = array<i64: 5, 1, 128>}, {pipeline_mode = #tpu.pipeline_mode<synchronous>, transform_indices = @transform_7, window_bounds = array<i64: 1, 128>}, {pipeline_mode = #tpu.pipeline_mode<synchronous>, transform_indices = @transform_8, window_bounds = array<i64: 1, 1>}, {transform_indices = @transform_9, window_bounds = array<i64: 1, 1, 384>}]} {
    %c0 = arith.constant 0 : index
    %c0_0 = arith.constant 0 : index
    %c0_1 = arith.constant 0 : index
    %0 = vector.load %arg2[%c0, %c0_0, %c0_1] : memref<1x384x3xf32, #tpu.memory_space<vmem>>, vector<1x384x3xf32>
    %1 = vector.shape_cast %0 : vector<1x384x3xf32> to vector<384x3xf32>
    %c0_2 = arith.constant 0 : index
    %c0_3 = arith.constant 0 : index
    %c0_4 = arith.constant 0 : index
    %2 = vector.load %arg3[%c0_2, %c0_3, %c0_4] : memref<1x1x128xf32, #tpu.memory_space<vmem>>, vector<1x1x128xf32>
    %3 = vector.shape_cast %2 : vector<1x1x128xf32> to vector<1x128xf32>
    %4 = vector.extract_strided_slice %1 {offsets = [0, 0], sizes = [384, 1], strides = [1, 1]} : vector<384x3xf32> to vector<384x1xf32>
    %c0_5 = arith.constant 0 : index
    %c0_6 = arith.constant 0 : index
    %5 = vector.load %arg4[%c0_5, %c0_6] : memref<3x128xf32, #tpu.memory_space<vmem>>, vector<1x128xf32>
    %6 = vector.broadcast %4 : vector<384x1xf32> to vector<384x128xf32>
    %7 = vector.broadcast %5 : vector<1x128xf32> to vector<384x128xf32>
    %8 = arith.mulf %6, %7 : vector<384x128xf32>
    %9 = vector.broadcast %3 : vector<1x128xf32> to vector<384x128xf32>
    %10 = arith.addf %9, %8 : vector<384x128xf32>
    %11 = vector.extract_strided_slice %1 {offsets = [0, 1], sizes = [384, 1], strides = [1, 1]} : vector<384x3xf32> to vector<384x1xf32>
    %c1 = arith.constant 1 : index
    %c0_7 = arith.constant 0 : index
    %12 = vector.load %arg4[%c1, %c0_7] : memref<3x128xf32, #tpu.memory_space<vmem>>, vector<1x128xf32>
    %13 = vector.broadcast %11 : vector<384x1xf32> to vector<384x128xf32>
    %14 = vector.broadcast %12 : vector<1x128xf32> to vector<384x128xf32>
    %15 = arith.mulf %13, %14 : vector<384x128xf32>
    %16 = arith.addf %10, %15 : vector<384x128xf32>
    %17 = vector.extract_strided_slice %1 {offsets = [0, 2], sizes = [384, 1], strides = [1, 1]} : vector<384x3xf32> to vector<384x1xf32>
    %c2 = arith.constant 2 : index
    %c0_8 = arith.constant 0 : index
    %18 = vector.load %arg4[%c2, %c0_8] : memref<3x128xf32, #tpu.memory_space<vmem>>, vector<1x128xf32>
    %19 = vector.broadcast %17 : vector<384x1xf32> to vector<384x128xf32>
    %20 = vector.broadcast %18 : vector<1x128xf32> to vector<384x128xf32>
    %21 = arith.mulf %19, %20 : vector<384x128xf32>
    %22 = arith.addf %16, %21 : vector<384x128xf32>
    %cst = arith.constant 0.000000e+00 : f32
    %23 = vector.broadcast %cst : f32 to vector<384x128xf32>
    %24 = arith.maximumf %22, %23 : vector<384x128xf32>
    %c0_9 = arith.constant 0 : index
    %c0_10 = arith.constant 0 : index
    %c0_11 = arith.constant 0 : index
    %25 = vector.load %arg5[%c0_9, %c0_10, %c0_11] : memref<5x128x128xf32, #tpu.memory_space<vmem>>, vector<1x128x128xf32>
    %26 = vector.shape_cast %25 : vector<1x128x128xf32> to vector<128x128xf32>
    %cst_12 = arith.constant dense<0.000000e+00> : vector<384x128xf32>
    %27 = tpu.matmul %24, %26, %cst_12 {dimension_numbers = #tpu.dot_dimension_numbers<[1], [0], [0], [1], [0, 0, 1, 1], [], []>} : vector<384x128xf32>, vector<128x128xf32>, vector<384x128xf32> -> vector<384x128xf32>
    %c0_13 = arith.constant 0 : index
    %c0_14 = arith.constant 0 : index
    %c0_15 = arith.constant 0 : index
    %28 = vector.load %arg6[%c0_13, %c0_14, %c0_15] : memref<5x1x128xf32, #tpu.memory_space<vmem>>, vector<1x1x128xf32>
    %29 = vector.shape_cast %28 : vector<1x1x128xf32> to vector<1x128xf32>
    %30 = vector.broadcast %29 : vector<1x128xf32> to vector<384x128xf32>
    %31 = arith.addf %27, %30 : vector<384x128xf32>
    %cst_16 = arith.constant 0.000000e+00 : f32
    %32 = vector.broadcast %cst_16 : f32 to vector<384x128xf32>
    %33 = arith.maximumf %31, %32 : vector<384x128xf32>
    %c0_17 = arith.constant 0 : index
    %c0_18 = arith.constant 0 : index
    %c0_19 = arith.constant 0 : index
    %34 = vector.load %arg7[%c0_17, %c0_18, %c0_19] : memref<5x128x128xf32, #tpu.memory_space<vmem>>, vector<1x128x128xf32>
    %35 = vector.shape_cast %34 : vector<1x128x128xf32> to vector<128x128xf32>
    %cst_20 = arith.constant dense<0.000000e+00> : vector<384x128xf32>
    %36 = tpu.matmul %33, %35, %cst_20 {dimension_numbers = #tpu.dot_dimension_numbers<[1], [0], [0], [1], [0, 0, 1, 1], [], []>} : vector<384x128xf32>, vector<128x128xf32>, vector<384x128xf32> -> vector<384x128xf32>
    %c0_21 = arith.constant 0 : index
    %c0_22 = arith.constant 0 : index
    %c0_23 = arith.constant 0 : index
    %37 = vector.load %arg8[%c0_21, %c0_22, %c0_23] : memref<5x1x128xf32, #tpu.memory_space<vmem>>, vector<1x1x128xf32>
    %38 = vector.shape_cast %37 : vector<1x1x128xf32> to vector<1x128xf32>
    %39 = vector.broadcast %38 : vector<1x128xf32> to vector<384x128xf32>
    %40 = arith.addf %36, %39 : vector<384x128xf32>
    %41 = arith.addf %22, %40 : vector<384x128xf32>
    %cst_24 = arith.constant 0.000000e+00 : f32
    %42 = vector.broadcast %cst_24 : f32 to vector<384x128xf32>
    %43 = arith.maximumf %41, %42 : vector<384x128xf32>
    %c1_25 = arith.constant 1 : index
    %c0_26 = arith.constant 0 : index
    %c0_27 = arith.constant 0 : index
    %44 = vector.load %arg5[%c1_25, %c0_26, %c0_27] : memref<5x128x128xf32, #tpu.memory_space<vmem>>, vector<1x128x128xf32>
    %45 = vector.shape_cast %44 : vector<1x128x128xf32> to vector<128x128xf32>
    %cst_28 = arith.constant dense<0.000000e+00> : vector<384x128xf32>
    %46 = tpu.matmul %43, %45, %cst_28 {dimension_numbers = #tpu.dot_dimension_numbers<[1], [0], [0], [1], [0, 0, 1, 1], [], []>} : vector<384x128xf32>, vector<128x128xf32>, vector<384x128xf32> -> vector<384x128xf32>
    %c1_29 = arith.constant 1 : index
    %c0_30 = arith.constant 0 : index
    %c0_31 = arith.constant 0 : index
    %47 = vector.load %arg6[%c1_29, %c0_30, %c0_31] : memref<5x1x128xf32, #tpu.memory_space<vmem>>, vector<1x1x128xf32>
    %48 = vector.shape_cast %47 : vector<1x1x128xf32> to vector<1x128xf32>
    %49 = vector.broadcast %48 : vector<1x128xf32> to vector<384x128xf32>
    %50 = arith.addf %46, %49 : vector<384x128xf32>
    %cst_32 = arith.constant 0.000000e+00 : f32
    %51 = vector.broadcast %cst_32 : f32 to vector<384x128xf32>
    %52 = arith.maximumf %50, %51 : vector<384x128xf32>
    %c1_33 = arith.constant 1 : index
    %c0_34 = arith.constant 0 : index
    %c0_35 = arith.constant 0 : index
    %53 = vector.load %arg7[%c1_33, %c0_34, %c0_35] : memref<5x128x128xf32, #tpu.memory_space<vmem>>, vector<1x128x128xf32>
    %54 = vector.shape_cast %53 : vector<1x128x128xf32> to vector<128x128xf32>
    %cst_36 = arith.constant dense<0.000000e+00> : vector<384x128xf32>
    %55 = tpu.matmul %52, %54, %cst_36 {dimension_numbers = #tpu.dot_dimension_numbers<[1], [0], [0], [1], [0, 0, 1, 1], [], []>} : vector<384x128xf32>, vector<128x128xf32>, vector<384x128xf32> -> vector<384x128xf32>
    %c1_37 = arith.constant 1 : index
    %c0_38 = arith.constant 0 : index
    %c0_39 = arith.constant 0 : index
    %56 = vector.load %arg8[%c1_37, %c0_38, %c0_39] : memref<5x1x128xf32, #tpu.memory_space<vmem>>, vector<1x1x128xf32>
    %57 = vector.shape_cast %56 : vector<1x1x128xf32> to vector<1x128xf32>
    %58 = vector.broadcast %57 : vector<1x128xf32> to vector<384x128xf32>
    %59 = arith.addf %55, %58 : vector<384x128xf32>
    %60 = arith.addf %41, %59 : vector<384x128xf32>
    %cst_40 = arith.constant 0.000000e+00 : f32
    %61 = vector.broadcast %cst_40 : f32 to vector<384x128xf32>
    %62 = arith.maximumf %60, %61 : vector<384x128xf32>
    %c2_41 = arith.constant 2 : index
    %c0_42 = arith.constant 0 : index
    %c0_43 = arith.constant 0 : index
    %63 = vector.load %arg5[%c2_41, %c0_42, %c0_43] : memref<5x128x128xf32, #tpu.memory_space<vmem>>, vector<1x128x128xf32>
    %64 = vector.shape_cast %63 : vector<1x128x128xf32> to vector<128x128xf32>
    %cst_44 = arith.constant dense<0.000000e+00> : vector<384x128xf32>
    %65 = tpu.matmul %62, %64, %cst_44 {dimension_numbers = #tpu.dot_dimension_numbers<[1], [0], [0], [1], [0, 0, 1, 1], [], []>} : vector<384x128xf32>, vector<128x128xf32>, vector<384x128xf32> -> vector<384x128xf32>
    %c2_45 = arith.constant 2 : index
    %c0_46 = arith.constant 0 : index
    %c0_47 = arith.constant 0 : index
    %66 = vector.load %arg6[%c2_45, %c0_46, %c0_47] : memref<5x1x128xf32, #tpu.memory_space<vmem>>, vector<1x1x128xf32>
    %67 = vector.shape_cast %66 : vector<1x1x128xf32> to vector<1x128xf32>
    %68 = vector.broadcast %67 : vector<1x128xf32> to vector<384x128xf32>
    %69 = arith.addf %65, %68 : vector<384x128xf32>
    %cst_48 = arith.constant 0.000000e+00 : f32
    %70 = vector.broadcast %cst_48 : f32 to vector<384x128xf32>
    %71 = arith.maximumf %69, %70 : vector<384x128xf32>
    %c2_49 = arith.constant 2 : index
    %c0_50 = arith.constant 0 : index
    %c0_51 = arith.constant 0 : index
    %72 = vector.load %arg7[%c2_49, %c0_50, %c0_51] : memref<5x128x128xf32, #tpu.memory_space<vmem>>, vector<1x128x128xf32>
    %73 = vector.shape_cast %72 : vector<1x128x128xf32> to vector<128x128xf32>
    %cst_52 = arith.constant dense<0.000000e+00> : vector<384x128xf32>
    %74 = tpu.matmul %71, %73, %cst_52 {dimension_numbers = #tpu.dot_dimension_numbers<[1], [0], [0], [1], [0, 0, 1, 1], [], []>} : vector<384x128xf32>, vector<128x128xf32>, vector<384x128xf32> -> vector<384x128xf32>
    %c2_53 = arith.constant 2 : index
    %c0_54 = arith.constant 0 : index
    %c0_55 = arith.constant 0 : index
    %75 = vector.load %arg8[%c2_53, %c0_54, %c0_55] : memref<5x1x128xf32, #tpu.memory_space<vmem>>, vector<1x1x128xf32>
    %76 = vector.shape_cast %75 : vector<1x1x128xf32> to vector<1x128xf32>
    %77 = vector.broadcast %76 : vector<1x128xf32> to vector<384x128xf32>
    %78 = arith.addf %74, %77 : vector<384x128xf32>
    %79 = arith.addf %60, %78 : vector<384x128xf32>
    %cst_56 = arith.constant 0.000000e+00 : f32
    %80 = vector.broadcast %cst_56 : f32 to vector<384x128xf32>
    %81 = arith.maximumf %79, %80 : vector<384x128xf32>
    %c3 = arith.constant 3 : index
    %c0_57 = arith.constant 0 : index
    %c0_58 = arith.constant 0 : index
    %82 = vector.load %arg5[%c3, %c0_57, %c0_58] : memref<5x128x128xf32, #tpu.memory_space<vmem>>, vector<1x128x128xf32>
    %83 = vector.shape_cast %82 : vector<1x128x128xf32> to vector<128x128xf32>
    %cst_59 = arith.constant dense<0.000000e+00> : vector<384x128xf32>
    %84 = tpu.matmul %81, %83, %cst_59 {dimension_numbers = #tpu.dot_dimension_numbers<[1], [0], [0], [1], [0, 0, 1, 1], [], []>} : vector<384x128xf32>, vector<128x128xf32>, vector<384x128xf32> -> vector<384x128xf32>
    %c3_60 = arith.constant 3 : index
    %c0_61 = arith.constant 0 : index
    %c0_62 = arith.constant 0 : index
    %85 = vector.load %arg6[%c3_60, %c0_61, %c0_62] : memref<5x1x128xf32, #tpu.memory_space<vmem>>, vector<1x1x128xf32>
    %86 = vector.shape_cast %85 : vector<1x1x128xf32> to vector<1x128xf32>
    %87 = vector.broadcast %86 : vector<1x128xf32> to vector<384x128xf32>
    %88 = arith.addf %84, %87 : vector<384x128xf32>
    %cst_63 = arith.constant 0.000000e+00 : f32
    %89 = vector.broadcast %cst_63 : f32 to vector<384x128xf32>
    %90 = arith.maximumf %88, %89 : vector<384x128xf32>
    %c3_64 = arith.constant 3 : index
    %c0_65 = arith.constant 0 : index
    %c0_66 = arith.constant 0 : index
    %91 = vector.load %arg7[%c3_64, %c0_65, %c0_66] : memref<5x128x128xf32, #tpu.memory_space<vmem>>, vector<1x128x128xf32>
    %92 = vector.shape_cast %91 : vector<1x128x128xf32> to vector<128x128xf32>
    %cst_67 = arith.constant dense<0.000000e+00> : vector<384x128xf32>
    %93 = tpu.matmul %90, %92, %cst_67 {dimension_numbers = #tpu.dot_dimension_numbers<[1], [0], [0], [1], [0, 0, 1, 1], [], []>} : vector<384x128xf32>, vector<128x128xf32>, vector<384x128xf32> -> vector<384x128xf32>
    %c3_68 = arith.constant 3 : index
    %c0_69 = arith.constant 0 : index
    %c0_70 = arith.constant 0 : index
    %94 = vector.load %arg8[%c3_68, %c0_69, %c0_70] : memref<5x1x128xf32, #tpu.memory_space<vmem>>, vector<1x1x128xf32>
    %95 = vector.shape_cast %94 : vector<1x1x128xf32> to vector<1x128xf32>
    %96 = vector.broadcast %95 : vector<1x128xf32> to vector<384x128xf32>
    %97 = arith.addf %93, %96 : vector<384x128xf32>
    %98 = arith.addf %79, %97 : vector<384x128xf32>
    %cst_71 = arith.constant 0.000000e+00 : f32
    %99 = vector.broadcast %cst_71 : f32 to vector<384x128xf32>
    %100 = arith.maximumf %98, %99 : vector<384x128xf32>
    %c4 = arith.constant 4 : index
    %c0_72 = arith.constant 0 : index
    %c0_73 = arith.constant 0 : index
    %101 = vector.load %arg5[%c4, %c0_72, %c0_73] : memref<5x128x128xf32, #tpu.memory_space<vmem>>, vector<1x128x128xf32>
    %102 = vector.shape_cast %101 : vector<1x128x128xf32> to vector<128x128xf32>
    %cst_74 = arith.constant dense<0.000000e+00> : vector<384x128xf32>
    %103 = tpu.matmul %100, %102, %cst_74 {dimension_numbers = #tpu.dot_dimension_numbers<[1], [0], [0], [1], [0, 0, 1, 1], [], []>} : vector<384x128xf32>, vector<128x128xf32>, vector<384x128xf32> -> vector<384x128xf32>
    %c4_75 = arith.constant 4 : index
    %c0_76 = arith.constant 0 : index
    %c0_77 = arith.constant 0 : index
    %104 = vector.load %arg6[%c4_75, %c0_76, %c0_77] : memref<5x1x128xf32, #tpu.memory_space<vmem>>, vector<1x1x128xf32>
    %105 = vector.shape_cast %104 : vector<1x1x128xf32> to vector<1x128xf32>
    %106 = vector.broadcast %105 : vector<1x128xf32> to vector<384x128xf32>
    %107 = arith.addf %103, %106 : vector<384x128xf32>
    %cst_78 = arith.constant 0.000000e+00 : f32
    %108 = vector.broadcast %cst_78 : f32 to vector<384x128xf32>
    %109 = arith.maximumf %107, %108 : vector<384x128xf32>
    %c4_79 = arith.constant 4 : index
    %c0_80 = arith.constant 0 : index
    %c0_81 = arith.constant 0 : index
    %110 = vector.load %arg7[%c4_79, %c0_80, %c0_81] : memref<5x128x128xf32, #tpu.memory_space<vmem>>, vector<1x128x128xf32>
    %111 = vector.shape_cast %110 : vector<1x128x128xf32> to vector<128x128xf32>
    %cst_82 = arith.constant dense<0.000000e+00> : vector<384x128xf32>
    %112 = tpu.matmul %109, %111, %cst_82 {dimension_numbers = #tpu.dot_dimension_numbers<[1], [0], [0], [1], [0, 0, 1, 1], [], []>} : vector<384x128xf32>, vector<128x128xf32>, vector<384x128xf32> -> vector<384x128xf32>
    %c4_83 = arith.constant 4 : index
    %c0_84 = arith.constant 0 : index
    %c0_85 = arith.constant 0 : index
    %113 = vector.load %arg8[%c4_83, %c0_84, %c0_85] : memref<5x1x128xf32, #tpu.memory_space<vmem>>, vector<1x1x128xf32>
    %114 = vector.shape_cast %113 : vector<1x1x128xf32> to vector<1x128xf32>
    %115 = vector.broadcast %114 : vector<1x128xf32> to vector<384x128xf32>
    %116 = arith.addf %112, %115 : vector<384x128xf32>
    %117 = arith.addf %98, %116 : vector<384x128xf32>
    %cst_86 = arith.constant 0.000000e+00 : f32
    %118 = vector.broadcast %cst_86 : f32 to vector<384x128xf32>
    %119 = arith.cmpf ogt, %117, %118 : vector<384x128xf32>
    %cst_87 = arith.constant 2.000000e-01 : f32
    %120 = vector.broadcast %cst_87 : f32 to vector<384x128xf32>
    %121 = arith.mulf %120, %117 : vector<384x128xf32>
    %122 = arith.select %119, %117, %121 : vector<384x128xi1>, vector<384x128xf32>
    %c0_88 = arith.constant 0 : index
    %c0_89 = arith.constant 0 : index
    %123 = vector.load %arg9[%c0_88, %c0_89] : memref<1x128xf32, #tpu.memory_space<vmem>>, vector<1x128xf32>
    %cst_90 = arith.constant dense<0.000000e+00> : vector<1x384xf32>
    %124 = tpu.matmul %123, %122, %cst_90 {dimension_numbers = #tpu.dot_dimension_numbers<[1], [1], [0], [0], [0, 0, 1, 0], [], []>} : vector<1x128xf32>, vector<384x128xf32>, vector<1x384xf32> -> vector<1x384xf32>
    %c0_91 = arith.constant 0 : index
    %c0_92 = arith.constant 0 : index
    %125 = vector.load %arg10[%c0_91, %c0_92] : memref<1x1xf32, #tpu.memory_space<vmem>>, vector<1x1xf32>
    %126 = vector.broadcast %125 : vector<1x1xf32> to vector<1x384xf32>
    %127 = arith.addf %124, %126 : vector<1x384xf32>
    %128 = arith.negf %127 : vector<1x384xf32>
    %129 = math.exp %128 : vector<1x384xf32>
    %cst_93 = arith.constant 1.000000e+00 : f32
    %130 = vector.broadcast %cst_93 : f32 to vector<1x384xf32>
    %131 = arith.addf %130, %129 : vector<1x384xf32>
    %132 = arith.divf %130, %131 : vector<1x384xf32>
    %c0_94 = arith.constant 0 : index
    %c0_95 = arith.constant 0 : index
    %c0_96 = arith.constant 0 : index
    %133 = vector.load %arg11[%c0_94, %c0_95, %c0_96] : memref<1x1x384xf32, #tpu.memory_space<vmem>>, vector<1x1x384xf32>
    %134 = vector.shape_cast %133 : vector<1x1x384xf32> to vector<1x384xf32>
    %135 = vector.shape_cast %132 : vector<1x384xf32> to vector<1x1x384xf32>
    tpu.vector_store %arg11[%c0_94, %c0_95, %c0_96], %135 {strides = array<i32>} : memref<1x1x384xf32, #tpu.memory_space<vmem>>, vector<1x1x384xf32>,
    return
  }
  func.func @transform_0(%arg0: i32, %arg1: i32) -> (i32, i32, i32) {
    %c0_i32 = arith.constant 0 : i32
    %c0_i32_0 = arith.constant 0 : i32
    return %arg0, %arg1, %c0_i32 : i32, i32, i32
  }
  func.func @transform_1(%arg0: i32, %arg1: i32) -> (i32, i32, i32) {
    %c0_i32 = arith.constant 0 : i32
    %c0_i32_0 = arith.constant 0 : i32
    %c0_i32_1 = arith.constant 0 : i32
    return %arg0, %c0_i32, %c0_i32_0 : i32, i32, i32
  }
  func.func @transform_2(%arg0: i32, %arg1: i32) -> (i32, i32) {
    %c0_i32 = arith.constant 0 : i32
    %c0_i32_0 = arith.constant 0 : i32
    %c0_i32_1 = arith.constant 0 : i32
    return %c0_i32, %c0_i32_0 : i32, i32
  }
  func.func @transform_3(%arg0: i32, %arg1: i32) -> (i32, i32, i32) {
    %c0_i32 = arith.constant 0 : i32
    %c0_i32_0 = arith.constant 0 : i32
    %c0_i32_1 = arith.constant 0 : i32
    %c0_i32_2 = arith.constant 0 : i32
    return %c0_i32, %c0_i32_0, %c0_i32_1 : i32, i32, i32
  }
  func.func @transform_4(%arg0: i32, %arg1: i32) -> (i32, i32, i32) {
    %c0_i32 = arith.constant 0 : i32
    %c0_i32_0 = arith.constant 0 : i32
    %c0_i32_1 = arith.constant 0 : i32
    %c0_i32_2 = arith.constant 0 : i32
    return %c0_i32, %c0_i32_0, %c0_i32_1 : i32, i32, i32
  }
  func.func @transform_5(%arg0: i32, %arg1: i32) -> (i32, i32, i32) {
    %c0_i32 = arith.constant 0 : i32
    %c0_i32_0 = arith.constant 0 : i32
    %c0_i32_1 = arith.constant 0 : i32
    %c0_i32_2 = arith.constant 0 : i32
    return %c0_i32, %c0_i32_0, %c0_i32_1 : i32, i32, i32
  }
  func.func @transform_6(%arg0: i32, %arg1: i32) -> (i32, i32, i32) {
    %c0_i32 = arith.constant 0 : i32
    %c0_i32_0 = arith.constant 0 : i32
    %c0_i32_1 = arith.constant 0 : i32
    %c0_i32_2 = arith.constant 0 : i32
    return %c0_i32, %c0_i32_0, %c0_i32_1 : i32, i32, i32
  }
  func.func @transform_7(%arg0: i32, %arg1: i32) -> (i32, i32) {
    %c0_i32 = arith.constant 0 : i32
    %c0_i32_0 = arith.constant 0 : i32
    %c0_i32_1 = arith.constant 0 : i32
    return %c0_i32, %c0_i32_0 : i32, i32
  }
  func.func @transform_8(%arg0: i32, %arg1: i32) -> (i32, i32) {
    %c0_i32 = arith.constant 0 : i32
    %c0_i32_0 = arith.constant 0 : i32
    %c0_i32_1 = arith.constant 0 : i32
    return %c0_i32, %c0_i32_0 : i32, i32
  }
  func.func @transform_9(%arg0: i32, %arg1: i32) -> (i32, i32, i32) {
    %c0_i32 = arith.constant 0 : i32
    %c0_i32_0 = arith.constant 0 : i32
    return %arg0, %c0_i32, %arg1 : i32, i32, i32
  }
}

</mosaic_0001>

<llo_original>
// kernel: occ_simple_decoder.1
$region0: #{occ_simple_decoder.1}
  #allocation0 [shape = 'u32[]', space=smem, size = 0x4, offset = 0x4, fixed_abs, tag = 'smem constant byte address 0x4 - core index']
  #allocation1 [shape = 'u32[72,128]{1,0:T(1,128)}', space=vmem, size = 0x9000, scoped, tag = 'internal scratch']
  #allocation2 [shape = 'f32[1,1]{1,0:T(1,128)S(1)}', space=vmem, size = 0x200, scoped, tag = 'scoped memory for occ_simple_decoder.1']
  %s0 = inlined_call_operand.vmem [shape: f32[2,384,3], index: 0, kind: input, shape index: {}]
  %s1 = inlined_call_operand.vmem [shape: f32[2,1,128], index: 1, kind: input, shape index: {}]
  %s2 = inlined_call_operand.vmem [shape: f32[3,128], index: 2, kind: input, shape index: {}]
  %s3 = inlined_call_operand.vmem [shape: f32[5,128,128], index: 3, kind: input, shape index: {}]
  %s4 = inlined_call_operand.vmem [shape: f32[5,1,128], index: 4, kind: input, shape index: {}]
  %s5 = inlined_call_operand.vmem [shape: f32[5,128,128], index: 5, kind: input, shape index: {}]
  %s6 = inlined_call_operand.vmem [shape: f32[5,1,128], index: 6, kind: input, shape index: {}]
  %s7 = inlined_call_operand.vmem [shape: f32[1,128], index: 7, kind: input, shape index: {}]
  %s8 = inlined_call_operand.<no memory space> [shape: f32[1,1], index: 8, kind: input, shape index: {}]
  %s9 = inlined_call_operand.vmem [shape: f32[2,1,384], index: 9, kind: output, shape index: {}]
  %s10 = sld [smem:[#allocation0]]
  $region69: #{occ_simple_decoder.1} parent=0
    _
  %s12 = ssub.s32 1, %s10
  %s13 = scalar_select 0, %s12, %s10
  %v14 = vstv %s8
  %15 = vst [vmem:[#allocation2] sm:$0x1] %v14
  loop: start=0, step=1, limit=4
  $region2: #{occ_simple_decoder.1} parent=0 // loop_pre_header
    _
  $region3: #{occ_simple_decoder.1} parent=0 // loop_header
    %s17 = sphi 0, %s21
    %p18 = scmp.ge.s32.totalorder %s17, 4
    %s24 = sphi 0, %s36
    %s25 = sphi 0, %s32
    %s26 = sphi 0, %s24
    %s27 = sphi 0, %s25
    %s28 = sphi 0, %s26
    %s29 = sphi 0, %s27
    %s41 = sphi 0, %s43
    %s44 = sphi 0, %s41
    %s45 = sphi 0, %s44
    %s61 = sphi 0, %s45
    %s67 = sphi 0, %s69
    %s70 = sphi 0, %s67
    %s71 = sphi 0, %s70
    %s87 = sphi 0, %s71
    %s91 = sphi 0, %s91
    %s93 = sphi 0, %s91
    %s94 = sphi 0, %s93
    %s108 = sphi 0, %s94
    %s112 = sphi 0, %s112
    %s114 = sphi 0, %s112
    %s115 = sphi 0, %s114
    %s129 = sphi 0, %s115
    %s133 = sphi 0, %s133
    %s135 = sphi 0, %s133
    %s136 = sphi 0, %s135
    %s150 = sphi 0, %s136
    %s154 = sphi 0, %s154
    %s156 = sphi 0, %s154
    %s157 = sphi 0, %s156
    %s171 = sphi 0, %s157
    %s175 = sphi 0, %s175
    %s177 = sphi 0, %s175
    %s178 = sphi 0, %s177
    %s192 = sphi 0, %s178
    %s196 = sphi 0, %s196
    %s198 = sphi 0, %s196
    %s199 = sphi 0, %s198
    %s213 = sphi 0, %s199
    %s217 = sphi 0, %s217
    %s219 = sphi 0, %s217
    %s220 = sphi 0, %s219
    %s234 = sphi 0, %s220
    %s242 = sphi 0, %s244
    %s245 = sphi 0, %s242
    %s246 = sphi 0, %s245
    %s262 = sphi 0, %s246
  $region4: #{occ_simple_decoder.1} parent=0 // loop_header_branch
    %20 = sbr.rel (%p18) target = $region8
  $region5: #{occ_simple_decoder.1} parent=0 // loop_body
    %s22 = ssub.s32 %s17, 1
    %s23 = ssub.s32 %s17, 2
    %s30 = sadd.s32 1, %s25
    %p31 = scmp.ge.s32.totalorder %s30, 1
    %s32 = scalar_select %p31, 0, %s30
    %s33 = sadd.s32 1, %s24
    %s34 = scalar_select %p31, %s33, %s24
    %p35 = scmp.ge.s32.totalorder %s34, 2
    %s36 = scalar_select %p35, 0, %s34
    %s37 = ssub.s32 %s24, %s36
    %s38 = ssub.s32 %s25, %s32
    %s39 = sor.u32 %s37, %s38
    %p40 = scmp.eq.s32.totalorder %s39, 0
    %s42 = sadd.s32 %s41, 1
    %s43 = scalar_select %p40, %s41, %s42
    %p46 = pneg %p40
    %p47 = scmp.eq.s32.totalorder %s17, 1
    %p48 = por %p46, %p47
    %p49 = scmp.ne.s32.totalorder %s41, %s44
    %p50 = scmp.eq.s32.totalorder %s17, 0
    %p51 = por %p49, %p50
    %p52 = scmp.ne.s32.totalorder %s41, %s44
    %p53 = scmp.eq.s32.totalorder %s22, 1
    %p54 = por %p52, %p53
    %p55 = scmp.ne.s32.totalorder %s44, %s45
    %p56 = scmp.eq.s32.totalorder %s22, 0
    %p57 = por %p55, %p56
    %p58 = scmp.ne.s32.totalorder %s44, %s45
    %p59 = scmp.eq.s32.totalorder %s23, 1
    %p60 = por %p58, %p59
    %p62 = scmp.ne.s32.totalorder %s45, %s61
    %p63 = scmp.eq.s32.totalorder %s23, 0
    %p64 = por %p62, %p63
    %s65 = ssub.s32 %s24, %s36
    %p66 = scmp.eq.s32.totalorder %s65, 0
    %s68 = sadd.s32 %s67, 1
    %s69 = scalar_select %p66, %s67, %s68
    %p72 = pneg %p66
    %p73 = scmp.eq.s32.totalorder %s17, 1
    %p74 = por %p72, %p73
    %p75 = scmp.ne.s32.totalorder %s67, %s70
    %p76 = scmp.eq.s32.totalorder %s17, 0
    %p77 = por %p75, %p76
    %p78 = scmp.ne.s32.totalorder %s67, %s70
    %p79 = scmp.eq.s32.totalorder %s22, 1
    %p80 = por %p78, %p79
    %p81 = scmp.ne.s32.totalorder %s70, %s71
    %p82 = scmp.eq.s32.totalorder %s22, 0
    %p83 = por %p81, %p82
    %p84 = scmp.ne.s32.totalorder %s70, %s71
    %p85 = scmp.eq.s32.totalorder %s23, 1
    %p86 = por %p84, %p85
    %p88 = scmp.ne.s32.totalorder %s71, %s87
    %p89 = scmp.eq.s32.totalorder %s23, 0
    %p90 = por %p88, %p89
    %s92 = sadd.s32 %s91, 1
    %p95 = scmp.eq.s32.totalorder %s17, 1
    %p96 = scmp.ne.s32.totalorder %s91, %s93
    %p97 = scmp.eq.s32.totalorder %s17, 0
    %p98 = por %p96, %p97
    %p99 = scmp.ne.s32.totalorder %s91, %s93
    %p100 = scmp.eq.s32.totalorder %s22, 1
    %p101 = por %p99, %p100
    %p102 = scmp.ne.s32.totalorder %s93, %s94
    %p103 = scmp.eq.s32.totalorder %s22, 0
    %p104 = por %p102, %p103
    %p105 = scmp.ne.s32.totalorder %s93, %s94
    %p106 = scmp.eq.s32.totalorder %s23, 1
    %p107 = por %p105, %p106
    %p109 = scmp.ne.s32.totalorder %s94, %s108
    %p110 = scmp.eq.s32.totalorder %s23, 0
    %p111 = por %p109, %p110
    %s113 = sadd.s32 %s112, 1
    %p116 = scmp.eq.s32.totalorder %s17, 1
    %p117 = scmp.ne.s32.totalorder %s112, %s114
    %p118 = scmp.eq.s32.totalorder %s17, 0
    %p119 = por %p117, %p118
    %p120 = scmp.ne.s32.totalorder %s112, %s114
    %p121 = scmp.eq.s32.totalorder %s22, 1
    %p122 = por %p120, %p121
    %p123 = scmp.ne.s32.totalorder %s114, %s115
    %p124 = scmp.eq.s32.totalorder %s22, 0
    %p125 = por %p123, %p124
    %p126 = scmp.ne.s32.totalorder %s114, %s115
    %p127 = scmp.eq.s32.totalorder %s23, 1
    %p128 = por %p126, %p127
    %p130 = scmp.ne.s32.totalorder %s115, %s129
    %p131 = scmp.eq.s32.totalorder %s23, 0
    %p132 = por %p130, %p131
    %s134 = sadd.s32 %s133, 1
    %p137 = scmp.eq.s32.totalorder %s17, 1
    %p138 = scmp.ne.s32.totalorder %s133, %s135
    %p139 = scmp.eq.s32.totalorder %s17, 0
    %p140 = por %p138, %p139
    %p141 = scmp.ne.s32.totalorder %s133, %s135
    %p142 = scmp.eq.s32.totalorder %s22, 1
    %p143 = por %p141, %p142
    %p144 = scmp.ne.s32.totalorder %s135, %s136
    %p145 = scmp.eq.s32.totalorder %s22, 0
    %p146 = por %p144, %p145
    %p147 = scmp.ne.s32.totalorder %s135, %s136
    %p148 = scmp.eq.s32.totalorder %s23, 1
    %p149 = por %p147, %p148
    %p151 = scmp.ne.s32.totalorder %s136, %s150
    %p152 = scmp.eq.s32.totalorder %s23, 0
    %p153 = por %p151, %p152
    %s155 = sadd.s32 %s154, 1
    %p158 = scmp.eq.s32.totalorder %s17, 1
    %p159 = scmp.ne.s32.totalorder %s154, %s156
    %p160 = scmp.eq.s32.totalorder %s17, 0
    %p161 = por %p159, %p160
    %p162 = scmp.ne.s32.totalorder %s154, %s156
    %p163 = scmp.eq.s32.totalorder %s22, 1
    %p164 = por %p162, %p163
    %p165 = scmp.ne.s32.totalorder %s156, %s157
    %p166 = scmp.eq.s32.totalorder %s22, 0
    %p167 = por %p165, %p166
    %p168 = scmp.ne.s32.totalorder %s156, %s157
    %p169 = scmp.eq.s32.totalorder %s23, 1
    %p170 = por %p168, %p169
    %p172 = scmp.ne.s32.totalorder %s157, %s171
    %p173 = scmp.eq.s32.totalorder %s23, 0
    %p174 = por %p172, %p173
    %s176 = sadd.s32 %s175, 1
    %p179 = scmp.eq.s32.totalorder %s17, 1
    %p180 = scmp.ne.s32.totalorder %s175, %s177
    %p181 = scmp.eq.s32.totalorder %s17, 0
    %p182 = por %p180, %p181
    %p183 = scmp.ne.s32.totalorder %s175, %s177
    %p184 = scmp.eq.s32.totalorder %s22, 1
    %p185 = por %p183, %p184
    %p186 = scmp.ne.s32.totalorder %s177, %s178
    %p187 = scmp.eq.s32.totalorder %s22, 0
    %p188 = por %p186, %p187
    %p189 = scmp.ne.s32.totalorder %s177, %s178
    %p190 = scmp.eq.s32.totalorder %s23, 1
    %p191 = por %p189, %p190
    %p193 = scmp.ne.s32.totalorder %s178, %s192
    %p194 = scmp.eq.s32.totalorder %s23, 0
    %p195 = por %p193, %p194
    %s197 = sadd.s32 %s196, 1
    %p200 = scmp.eq.s32.totalorder %s17, 1
    %p201 = scmp.ne.s32.totalorder %s196, %s198
    %p202 = scmp.eq.s32.totalorder %s17, 0
    %p203 = por %p201, %p202
    %p204 = scmp.ne.s32.totalorder %s196, %s198
    %p205 = scmp.eq.s32.totalorder %s22, 1
    %p206 = por %p204, %p205
    %p207 = scmp.ne.s32.totalorder %s198, %s199
    %p208 = scmp.eq.s32.totalorder %s22, 0
    %p209 = por %p207, %p208
    %p210 = scmp.ne.s32.totalorder %s198, %s199
    %p211 = scmp.eq.s32.totalorder %s23, 1
    %p212 = por %p210, %p211
    %p214 = scmp.ne.s32.totalorder %s199, %s213
    %p215 = scmp.eq.s32.totalorder %s23, 0
    %p216 = por %p214, %p215
    %s218 = sadd.s32 %s217, 1
    %p221 = scmp.eq.s32.totalorder %s17, 1
    %p222 = scmp.ne.s32.totalorder %s217, %s219
    %p223 = scmp.eq.s32.totalorder %s17, 0
    %p224 = por %p222, %p223
    %p225 = scmp.ne.s32.totalorder %s217, %s219
    %p226 = scmp.eq.s32.totalorder %s22, 1
    %p227 = por %p225, %p226
    %p228 = scmp.ne.s32.totalorder %s219, %s220
    %p229 = scmp.eq.s32.totalorder %s22, 0
    %p230 = por %p228, %p229
    %p231 = scmp.ne.s32.totalorder %s219, %s220
    %p232 = scmp.eq.s32.totalorder %s23, 1
    %p233 = por %p231, %p232
    %p235 = scmp.ne.s32.totalorder %s220, %s234
    %p236 = scmp.eq.s32.totalorder %s23, 0
    %p237 = por %p235, %p236
    %s238 = ssub.s32 %s24, %s36
    %s239 = ssub.s32 %s25, %s32
    %s240 = sor.u32 %s238, %s239
    %p241 = scmp.eq.s32.totalorder %s240, 0
    %s243 = sadd.s32 %s242, 1
    %s244 = scalar_select %p241, %s242, %s243
    %p247 = pneg %p241
    %p248 = scmp.eq.s32.totalorder %s17, 1
    %p249 = por %p247, %p248
    %p250 = scmp.ne.s32.totalorder %s242, %s245
    %p251 = scmp.eq.s32.totalorder %s17, 0
    %p252 = por %p250, %p251
    %p253 = scmp.ne.s32.totalorder %s242, %s245
    %p254 = scmp.eq.s32.totalorder %s22, 1
    %p255 = por %p253, %p254
    %p256 = scmp.ne.s32.totalorder %s245, %s246
    %p257 = scmp.eq.s32.totalorder %s22, 0
    %p258 = por %p256, %p257
    %p259 = scmp.ne.s32.totalorder %s245, %s246
    %p260 = scmp.eq.s32.totalorder %s23, 1
    %p261 = por %p259, %p260
    %p263 = scmp.ne.s32.totalorder %s246, %s262
    %p264 = scmp.eq.s32.totalorder %s23, 0
    %p265 = por %p263, %p264
    %p266 = scmp.le.s32.totalorder 1, %s17
    %p267 = scmp.lt.s32.totalorder %s17, 3
    %p268 = pnand %p266, %p267
    %p269 = pneg %p268
    // Predicated region
    $region9: #{occ_simple_decoder.1} parent=5 // pred_check
      _
    $region10: #{occ_simple_decoder.1} parent=5 // pred_check_branch
      %271 = sbr.rel (%p268) target = $region12
    $region11: #{occ_simple_decoder.1} parent=5 // pred_region
      %s272 = ssub.s32 %s17, 1
      // Predicated region
      $region13: #{occ_simple_decoder.1} parent=11 // pred_check
        %p273 = pneg %p104
      $region14: #{occ_simple_decoder.1} parent=11 // pred_check_branch
        %275 = sbr.rel (%p273) target = $region16
      $region15: #{occ_simple_decoder.1} parent=11 // pred_region
        _
      $region16: #{occ_simple_decoder.1} parent=11 // pred_fallthru
        _
      // Predicated region
      $region17: #{occ_simple_decoder.1} parent=11 // pred_check
        %p276 = pneg %p125
      $region18: #{occ_simple_decoder.1} parent=11 // pred_check_branch
        %278 = sbr.rel (%p276) target = $region20
      $region19: #{occ_simple_decoder.1} parent=11 // pred_region
        _
      $region20: #{occ_simple_decoder.1} parent=11 // pred_fallthru
        _
      // Predicated region
      $region21: #{occ_simple_decoder.1} parent=11 // pred_check
        %p279 = pneg %p146
      $region22: #{occ_simple_decoder.1} parent=11 // pred_check_branch
        %281 = sbr.rel (%p279) target = $region24
      $region23: #{occ_simple_decoder.1} parent=11 // pred_region
        _
      $region24: #{occ_simple_decoder.1} parent=11 // pred_fallthru
        _
      // Predicated region
      $region25: #{occ_simple_decoder.1} parent=11 // pred_check
        %p282 = pneg %p167
      $region26: #{occ_simple_decoder.1} parent=11 // pred_check_branch
        %284 = sbr.rel (%p282) target = $region28
      $region27: #{occ_simple_decoder.1} parent=11 // pred_region
        _
      $region28: #{occ_simple_decoder.1} parent=11 // pred_fallthru
        _
      // Predicated region
      $region29: #{occ_simple_decoder.1} parent=11 // pred_check
        %p285 = pneg %p188
      $region30: #{occ_simple_decoder.1} parent=11 // pred_check_branch
        %287 = sbr.rel (%p285) target = $region32
      $region31: #{occ_simple_decoder.1} parent=11 // pred_region
        _
      $region32: #{occ_simple_decoder.1} parent=11 // pred_fallthru
        _
      // Predicated region
      $region33: #{occ_simple_decoder.1} parent=11 // pred_check
        %p288 = pneg %p209
      $region34: #{occ_simple_decoder.1} parent=11 // pred_check_branch
        %290 = sbr.rel (%p288) target = $region36
      $region35: #{occ_simple_decoder.1} parent=11 // pred_region
        _
      $region36: #{occ_simple_decoder.1} parent=11 // pred_fallthru
        _
      // Predicated region
      $region37: #{occ_simple_decoder.1} parent=11 // pred_check
        %p291 = pneg %p230
      $region38: #{occ_simple_decoder.1} parent=11 // pred_check_branch
        %293 = sbr.rel (%p291) target = $region40
      $region39: #{occ_simple_decoder.1} parent=11 // pred_region
        _
      $region40: #{occ_simple_decoder.1} parent=11 // pred_fallthru
        _
    $region12: #{occ_simple_decoder.1} parent=5 // pred_fallthru
      _
    %p294 = scmp.lt.s32.totalorder %s17, 2
    // Predicated region
    $region41: #{occ_simple_decoder.1} parent=5 // pred_check
      %p295 = pneg %p294
    $region42: #{occ_simple_decoder.1} parent=5 // pred_check_branch
      %297 = sbr.rel (%p295) target = $region44
    $region43: #{occ_simple_decoder.1} parent=5 // pred_region
      // Predicated region
      $region45: #{occ_simple_decoder.1} parent=43 // pred_check
        %p298 = pneg %p51
      $region46: #{occ_simple_decoder.1} parent=43 // pred_check_branch
        %300 = sbr.rel (%p298) target = $region48
      $region47: #{occ_simple_decoder.1} parent=43 // pred_region
        %s301 = smul.u32 48, %s25
        %p302 = scmp.lt.s32.totalorder %s24, 1
        %s303 = scalar_select %p302, %s24, 1
        %p304 = scmp.lt.s32.totalorder %s301, 47
        %s305 = scalar_select %p304, %s301, 47
        %s306 = smul.addr %s303, 48
        %s307 = sadd.s32 %s305, %s306
        %s308 = smul.addr %s307, 8
        %s309 = scalar_lea.vmem %s0, %s308
        %s310 = smul.u32 48, %s25
      $region48: #{occ_simple_decoder.1} parent=43 // pred_fallthru
        _
      // Predicated region
      $region49: #{occ_simple_decoder.1} parent=43 // pred_check
        %p311 = pneg %p77
      $region50: #{occ_simple_decoder.1} parent=43 // pred_check_branch
        %313 = sbr.rel (%p311) target = $region52
      $region51: #{occ_simple_decoder.1} parent=43 // pred_region
        %p314 = scmp.lt.s32.totalorder %s24, 1
        %s315 = scalar_select %p314, %s24, 1
        %s316 = scalar_lea.vmem %s1, %s315
      $region52: #{occ_simple_decoder.1} parent=43 // pred_fallthru
        _
    $region44: #{occ_simple_decoder.1} parent=5 // pred_fallthru
      _
    %p317 = scmp.le.s32.totalorder 1, %s17
    %p318 = scmp.lt.s32.totalorder %s17, 3
    %p319 = pnand %p317, %p318
    %p320 = pneg %p319
    // Predicated region
    $region53: #{occ_simple_decoder.1} parent=5 // pred_check
      _
    $region54: #{occ_simple_decoder.1} parent=5 // pred_check_branch
      %322 = sbr.rel (%p319) target = $region56
    $region55: #{occ_simple_decoder.1} parent=5 // pred_region
      %s323 = ssub.s32 %s17, 1
      %s324 = smul.u32 48, %s27
      %p325 = scmp.lt.s32.totalorder %s26, 1
      %s326 = scalar_select %p325, %s26, 1
      %p327 = scmp.lt.s32.totalorder %s324, 47
      %s328 = scalar_select %p327, %s324, 47
      %s329 = smul.addr %s326, 48
      %s330 = sadd.s32 %s328, %s329
      %s331 = smul.addr %s330, 8
      %s332 = scalar_lea.vmem %s0, %s331
      %p333 = pneg %p57
      %p334 = pneg %p54
      %p335 = scmp.lt.s32.totalorder %s26, 1
      %s336 = scalar_select %p335, %s26, 1
      %s337 = scalar_lea.vmem %s1, %s336
      %p338 = pneg %p83
      %p339 = pneg %p80
      %p340 = pneg %p104
      %p341 = pneg %p101
      %p342 = pneg %p125
      %p343 = pneg %p122
      %p344 = pneg %p146
      %p345 = pneg %p143
      %p346 = pneg %p167
      %p347 = pneg %p164
      %p348 = pneg %p188
      %p349 = pneg %p185
      %p350 = pneg %p209
      %p351 = pneg %p206
      %p352 = pneg %p230
      %p353 = pneg %p227
      %p354 = pneg %p258
      %p355 = pneg %p255
      %s356 = smul.u32 3, %s27
      %p357 = scmp.lt.s32.totalorder %s26, 1
      %s358 = scalar_select %p357, %s26, 1
      %p359 = scmp.lt.s32.totalorder %s356, 2
      %s360 = scalar_select %p359, %s356, 2
      %s361 = smul.addr %s358, 3
      %s362 = sadd.s32 %s360, %s361
      %s363 = scalar_lea.vmem %s9, %s362
      %s364 = smul.u32 48, %s27
      %p365 = scmp.lt.s32.totalorder %s26, 1
      %s366 = scalar_select %p365, %s26, 1
      %p367 = scmp.lt.s32.totalorder %s364, 47
      %s368 = scalar_select %p367, %s364, 47
      %s369 = smul.addr %s366, 48
      %s370 = sadd.s32 %s368, %s369
      %s371 = smul.addr %s370, 8
      %s372 = scalar_lea.vmem %s0, %s371
      %s373 = smul.u32 48, %s27
      %p374 = scmp.lt.s32.totalorder %s26, 1
      %s375 = scalar_select %p374, %s26, 1
      %s376 = scalar_lea.vmem %s1, %s375
      %s377 = smul.u32 3, %s27
      %p378 = scmp.lt.s32.totalorder %s26, 1
      %s379 = scalar_select %p378, %s26, 1
      %p380 = scmp.lt.s32.totalorder %s377, 2
      %s381 = scalar_select %p380, %s377, 2
      %s382 = smul.addr %s379, 3
      %s383 = sadd.s32 %s381, %s382
      %s384 = scalar_lea.vmem %s9, %s383
      %s385 = smul.u32 3, %s27
      %v386 = vld [vmem:[%s372] sm:$0xff]
      %v387 = vld [vmem:[%s372 + $0x8] sm:$0xff]
      %v388 = vld [vmem:[%s372 + $0x10] sm:$0xff]
      %v389 = vld [vmem:[%s372 + $0x18] sm:$0xff]
      %v390 = vld [vmem:[%s372 + $0x20] sm:$0xff]
      %v391 = vld [vmem:[%s372 + $0x28] sm:$0xff]
      %v392 = vld [vmem:[%s372 + $0x30] sm:$0xff]
      %v393 = vld [vmem:[%s372 + $0x38] sm:$0xff]
      %v394 = vld [vmem:[%s372 + $0x40] sm:$0xff]
      %v395 = vld [vmem:[%s372 + $0x48] sm:$0xff]
      %v396 = vld [vmem:[%s372 + $0x50] sm:$0xff]
      %v397 = vld [vmem:[%s372 + $0x58] sm:$0xff]
      %v398 = vld [vmem:[%s372 + $0x60] sm:$0xff]
      %v399 = vld [vmem:[%s372 + $0x68] sm:$0xff]
      %v400 = vld [vmem:[%s372 + $0x70] sm:$0xff]
      %v401 = vld [vmem:[%s372 + $0x78] sm:$0xff]
      %v402 = vld [vmem:[%s372 + $0x80] sm:$0xff]
      %v403 = vld [vmem:[%s372 + $0x88] sm:$0xff]
      %v404 = vld [vmem:[%s372 + $0x90] sm:$0xff]
      %v405 = vld [vmem:[%s372 + $0x98] sm:$0xff]
      %v406 = vld [vmem:[%s372 + $0xa0] sm:$0xff]
      %v407 = vld [vmem:[%s372 + $0xa8] sm:$0xff]
      %v408 = vld [vmem:[%s372 + $0xb0] sm:$0xff]
      %v409 = vld [vmem:[%s372 + $0xb8] sm:$0xff]
      %v410 = vld [vmem:[%s372 + $0xc0] sm:$0xff]
      %v411 = vld [vmem:[%s372 + $0xc8] sm:$0xff]
      %v412 = vld [vmem:[%s372 + $0xd0] sm:$0xff]
      %v413 = vld [vmem:[%s372 + $0xd8] sm:$0xff]
      %v414 = vld [vmem:[%s372 + $0xe0] sm:$0xff]
      %v415 = vld [vmem:[%s372 + $0xe8] sm:$0xff]
      %v416 = vld [vmem:[%s372 + $0xf0] sm:$0xff]
      %v417 = vld [vmem:[%s372 + $0xf8] sm:$0xff]
      %v418 = vld [vmem:[%s372 + $0x100] sm:$0xff]
      %v419 = vld [vmem:[%s372 + $0x108] sm:$0xff]
      %v420 = vld [vmem:[%s372 + $0x110] sm:$0xff]
      %v421 = vld [vmem:[%s372 + $0x118] sm:$0xff]
      %v422 = vld [vmem:[%s372 + $0x120] sm:$0xff]
      %v423 = vld [vmem:[%s372 + $0x128] sm:$0xff]
      %v424 = vld [vmem:[%s372 + $0x130] sm:$0xff]
      %v425 = vld [vmem:[%s372 + $0x138] sm:$0xff]
      %v426 = vld [vmem:[%s372 + $0x140] sm:$0xff]
      %v427 = vld [vmem:[%s372 + $0x148] sm:$0xff]
      %v428 = vld [vmem:[%s372 + $0x150] sm:$0xff]
      %v429 = vld [vmem:[%s372 + $0x158] sm:$0xff]
      %v430 = vld [vmem:[%s372 + $0x160] sm:$0xff]
      %v431 = vld [vmem:[%s372 + $0x168] sm:$0xff]
      %v432 = vld [vmem:[%s372 + $0x170] sm:$0xff]
      %v433 = vld [vmem:[%s372 + $0x178] sm:$0xff]
      %v434 = vld [vmem:[%s376] sm:$0x1]
      %v435 = vld [vmem:[%s2] sm:$0x1]
      %437 = vset.pattern.permute.xlu0 0
      %438 = vperm.xlu0 %437, %v386
      %v439 = vpop.permute.xlu0 %438
      %442 = vset.pattern.permute.xlu0 0
      %443 = vperm.xlu0 %442, %v387
      %v444 = vpop.permute.xlu0 %443
      %447 = vset.pattern.permute.xlu0 0
      %448 = vperm.xlu0 %447, %v388
      %v449 = vpop.permute.xlu0 %448
      %452 = vset.pattern.permute.xlu0 0
      %453 = vperm.xlu0 %452, %v389
      %v454 = vpop.permute.xlu0 %453
      %457 = vset.pattern.permute.xlu0 0
      %458 = vperm.xlu0 %457, %v390
      %v459 = vpop.permute.xlu0 %458
      %462 = vset.pattern.permute.xlu0 0
      %463 = vperm.xlu0 %462, %v391
      %v464 = vpop.permute.xlu0 %463
      %467 = vset.pattern.permute.xlu0 0
      %468 = vperm.xlu0 %467, %v392
      %v469 = vpop.permute.xlu0 %468
      %472 = vset.pattern.permute.xlu0 0
      %473 = vperm.xlu0 %472, %v393
      %v474 = vpop.permute.xlu0 %473
      %477 = vset.pattern.permute.xlu0 0
      %478 = vperm.xlu0 %477, %v394
      %v479 = vpop.permute.xlu0 %478
      %482 = vset.pattern.permute.xlu0 0
      %483 = vperm.xlu0 %482, %v395
      %v484 = vpop.permute.xlu0 %483
      %487 = vset.pattern.permute.xlu0 0
      %488 = vperm.xlu0 %487, %v396
      %v489 = vpop.permute.xlu0 %488
      %492 = vset.pattern.permute.xlu0 0
      %493 = vperm.xlu0 %492, %v397
      %v494 = vpop.permute.xlu0 %493
      %497 = vset.pattern.permute.xlu0 0
      %498 = vperm.xlu0 %497, %v398
      %v499 = vpop.permute.xlu0 %498
      %502 = vset.pattern.permute.xlu0 0
      %503 = vperm.xlu0 %502, %v399
      %v504 = vpop.permute.xlu0 %503
      %507 = vset.pattern.permute.xlu0 0
      %508 = vperm.xlu0 %507, %v400
      %v509 = vpop.permute.xlu0 %508
      %512 = vset.pattern.permute.xlu0 0
      %513 = vperm.xlu0 %512, %v401
      %v514 = vpop.permute.xlu0 %513
      %517 = vset.pattern.permute.xlu0 0
      %518 = vperm.xlu0 %517, %v402
      %v519 = vpop.permute.xlu0 %518
      %522 = vset.pattern.permute.xlu0 0
      %523 = vperm.xlu0 %522, %v403
      %v524 = vpop.permute.xlu0 %523
      %527 = vset.pattern.permute.xlu0 0
      %528 = vperm.xlu0 %527, %v404
      %v529 = vpop.permute.xlu0 %528
      %532 = vset.pattern.permute.xlu0 0
      %533 = vperm.xlu0 %532, %v405
      %v534 = vpop.permute.xlu0 %533
      %537 = vset.pattern.permute.xlu0 0
      %538 = vperm.xlu0 %537, %v406
      %v539 = vpop.permute.xlu0 %538
      %542 = vset.pattern.permute.xlu0 0
      %543 = vperm.xlu0 %542, %v407
      %v544 = vpop.permute.xlu0 %543
      %547 = vset.pattern.permute.xlu0 0
      %548 = vperm.xlu0 %547, %v408
      %v549 = vpop.permute.xlu0 %548
      %552 = vset.pattern.permute.xlu0 0
      %553 = vperm.xlu0 %552, %v409
      %v554 = vpop.permute.xlu0 %553
      %557 = vset.pattern.permute.xlu0 0
      %558 = vperm.xlu0 %557, %v410
      %v559 = vpop.permute.xlu0 %558
      %562 = vset.pattern.permute.xlu0 0
      %563 = vperm.xlu0 %562, %v411
      %v564 = vpop.permute.xlu0 %563
      %567 = vset.pattern.permute.xlu0 0
      %568 = vperm.xlu0 %567, %v412
      %v569 = vpop.permute.xlu0 %568
      %572 = vset.pattern.permute.xlu0 0
      %573 = vperm.xlu0 %572, %v413
      %v574 = vpop.permute.xlu0 %573
      %577 = vset.pattern.permute.xlu0 0
      %578 = vperm.xlu0 %577, %v414
      %v579 = vpop.permute.xlu0 %578
      %582 = vset.pattern.permute.xlu0 0
      %583 = vperm.xlu0 %582, %v415
      %v584 = vpop.permute.xlu0 %583
      %587 = vset.pattern.permute.xlu0 0
      %588 = vperm.xlu0 %587, %v416
      %v589 = vpop.permute.xlu0 %588
      %592 = vset.pattern.permute.xlu0 0
      %593 = vperm.xlu0 %592, %v417
      %v594 = vpop.permute.xlu0 %593
      %597 = vset.pattern.permute.xlu0 0
      %598 = vperm.xlu0 %597, %v418
      %v599 = vpop.permute.xlu0 %598
      %602 = vset.pattern.permute.xlu0 0
      %603 = vperm.xlu0 %602, %v419
      %v604 = vpop.permute.xlu0 %603
      %607 = vset.pattern.permute.xlu0 0
      %608 = vperm.xlu0 %607, %v420
      %v609 = vpop.permute.xlu0 %608
      %612 = vset.pattern.permute.xlu0 0
      %613 = vperm.xlu0 %612, %v421
      %v614 = vpop.permute.xlu0 %613
      %617 = vset.pattern.permute.xlu0 0
      %618 = vperm.xlu0 %617, %v422
      %v619 = vpop.permute.xlu0 %618
      %622 = vset.pattern.permute.xlu0 0
      %623 = vperm.xlu0 %622, %v423
      %v624 = vpop.permute.xlu0 %623
      %627 = vset.pattern.permute.xlu0 0
      %628 = vperm.xlu0 %627, %v424
      %v629 = vpop.permute.xlu0 %628
      %632 = vset.pattern.permute.xlu0 0
      %633 = vperm.xlu0 %632, %v425
      %v634 = vpop.permute.xlu0 %633
      %637 = vset.pattern.permute.xlu0 0
      %638 = vperm.xlu0 %637, %v426
      %v639 = vpop.permute.xlu0 %638
      %642 = vset.pattern.permute.xlu0 0
      %643 = vperm.xlu0 %642, %v427
      %v644 = vpop.permute.xlu0 %643
      %647 = vset.pattern.permute.xlu0 0
      %648 = vperm.xlu0 %647, %v428
      %v649 = vpop.permute.xlu0 %648
      %652 = vset.pattern.permute.xlu0 0
      %653 = vperm.xlu0 %652, %v429
      %v654 = vpop.permute.xlu0 %653
      %657 = vset.pattern.permute.xlu0 0
      %658 = vperm.xlu0 %657, %v430
      %v659 = vpop.permute.xlu0 %658
      %662 = vset.pattern.permute.xlu0 0
      %663 = vperm.xlu0 %662, %v431
      %v664 = vpop.permute.xlu0 %663
      %667 = vset.pattern.permute.xlu0 0
      %668 = vperm.xlu0 %667, %v432
      %v669 = vpop.permute.xlu0 %668
      %672 = vset.pattern.permute.xlu0 0
      %673 = vperm.xlu0 %672, %v433
      %v674 = vpop.permute.xlu0 %673
      %v676 = vperm.slane %v435, 0
      %v677 = vmul.f32 %v439, %v676
      %v678 = vmul.f32 %v444, %v676
      %v679 = vmul.f32 %v449, %v676
      %v680 = vmul.f32 %v454, %v676
      %v681 = vmul.f32 %v459, %v676
      %v682 = vmul.f32 %v464, %v676
      %v683 = vmul.f32 %v469, %v676
      %v684 = vmul.f32 %v474, %v676
      %v685 = vmul.f32 %v479, %v676
      %v686 = vmul.f32 %v484, %v676
      %v687 = vmul.f32 %v489, %v676
      %v688 = vmul.f32 %v494, %v676
      %v689 = vmul.f32 %v499, %v676
      %v690 = vmul.f32 %v504, %v676
      %v691 = vmul.f32 %v509, %v676
      %v692 = vmul.f32 %v514, %v676
      %v693 = vmul.f32 %v519, %v676
      %v694 = vmul.f32 %v524, %v676
      %v695 = vmul.f32 %v529, %v676
      %v696 = vmul.f32 %v534, %v676
      %v697 = vmul.f32 %v539, %v676
      %v698 = vmul.f32 %v544, %v676
      %v699 = vmul.f32 %v549, %v676
      %v700 = vmul.f32 %v554, %v676
      %v701 = vmul.f32 %v559, %v676
      %v702 = vmul.f32 %v564, %v676
      %v703 = vmul.f32 %v569, %v676
      %v704 = vmul.f32 %v574, %v676
      %v705 = vmul.f32 %v579, %v676
      %v706 = vmul.f32 %v584, %v676
      %v707 = vmul.f32 %v589, %v676
      %v708 = vmul.f32 %v594, %v676
      %v709 = vmul.f32 %v599, %v676
      %v710 = vmul.f32 %v604, %v676
      %v711 = vmul.f32 %v609, %v676
      %v712 = vmul.f32 %v614, %v676
      %v713 = vmul.f32 %v619, %v676
      %v714 = vmul.f32 %v624, %v676
      %v715 = vmul.f32 %v629, %v676
      %v716 = vmul.f32 %v634, %v676
      %v717 = vmul.f32 %v639, %v676
      %v718 = vmul.f32 %v644, %v676
      %v719 = vmul.f32 %v649, %v676
      %v720 = vmul.f32 %v654, %v676
      %v721 = vmul.f32 %v659, %v676
      %v722 = vmul.f32 %v664, %v676
      %v723 = vmul.f32 %v669, %v676
      %v724 = vmul.f32 %v674, %v676
      %v726 = vperm.slane %v434, 0
      %v728 = vadd.f32 %v726, %v677
      %v729 = vadd.f32 %v726, %v678
      %v730 = vadd.f32 %v726, %v679
      %v731 = vadd.f32 %v726, %v680
      %v732 = vadd.f32 %v726, %v681
      %v733 = vadd.f32 %v726, %v682
      %v734 = vadd.f32 %v726, %v683
      %v735 = vadd.f32 %v726, %v684
      %v736 = vadd.f32 %v726, %v685
      %v737 = vadd.f32 %v726, %v686
      %v738 = vadd.f32 %v726, %v687
      %v739 = vadd.f32 %v726, %v688
      %v740 = vadd.f32 %v726, %v689
      %v741 = vadd.f32 %v726, %v690
      %v742 = vadd.f32 %v726, %v691
      %v743 = vadd.f32 %v726, %v692
      %v744 = vadd.f32 %v726, %v693
      %v745 = vadd.f32 %v726, %v694
      %v746 = vadd.f32 %v726, %v695
      %v747 = vadd.f32 %v726, %v696
      %v748 = vadd.f32 %v726, %v697
      %v749 = vadd.f32 %v726, %v698
      %v750 = vadd.f32 %v726, %v699
      %v751 = vadd.f32 %v726, %v700
      %v752 = vadd.f32 %v726, %v701
      %v753 = vadd.f32 %v726, %v702
      %v754 = vadd.f32 %v726, %v703
      %v755 = vadd.f32 %v726, %v704
      %v756 = vadd.f32 %v726, %v705
      %v757 = vadd.f32 %v726, %v706
      %v758 = vadd.f32 %v726, %v707
      %v759 = vadd.f32 %v726, %v708
      %v760 = vadd.f32 %v726, %v709
      %v761 = vadd.f32 %v726, %v710
      %v762 = vadd.f32 %v726, %v711
      %v763 = vadd.f32 %v726, %v712
      %v764 = vadd.f32 %v726, %v713
      %v765 = vadd.f32 %v726, %v714
      %v766 = vadd.f32 %v726, %v715
      %v767 = vadd.f32 %v726, %v716
      %v768 = vadd.f32 %v726, %v717
      %v769 = vadd.f32 %v726, %v718
      %v770 = vadd.f32 %v726, %v719
      %v771 = vadd.f32 %v726, %v720
      %v772 = vadd.f32 %v726, %v721
      %v773 = vadd.f32 %v726, %v722
      %v774 = vadd.f32 %v726, %v723
      %v775 = vadd.f32 %v726, %v724
      %v776 = vld [vmem:[%s2 + $0x1] sm:$0x1]
      %777 = vset.pattern.permute.xlu0 1
      %778 = vperm.xlu0 %777, %v386
      %v779 = vpop.permute.xlu0 %778
      %781 = vset.pattern.permute.xlu0 1
      %782 = vperm.xlu0 %781, %v387
      %v783 = vpop.permute.xlu0 %782
      %785 = vset.pattern.permute.xlu0 1
      %786 = vperm.xlu0 %785, %v388
      %v787 = vpop.permute.xlu0 %786
      %789 = vset.pattern.permute.xlu0 1
      %790 = vperm.xlu0 %789, %v389
      %v791 = vpop.permute.xlu0 %790
      %793 = vset.pattern.permute.xlu0 1
      %794 = vperm.xlu0 %793, %v390
      %v795 = vpop.permute.xlu0 %794
      %797 = vset.pattern.permute.xlu0 1
      %798 = vperm.xlu0 %797, %v391
      %v799 = vpop.permute.xlu0 %798
      %801 = vset.pattern.permute.xlu0 1
      %802 = vperm.xlu0 %801, %v392
      %v803 = vpop.permute.xlu0 %802
      %805 = vset.pattern.permute.xlu0 1
      %806 = vperm.xlu0 %805, %v393
      %v807 = vpop.permute.xlu0 %806
      %809 = vset.pattern.permute.xlu0 1
      %810 = vperm.xlu0 %809, %v394
      %v811 = vpop.permute.xlu0 %810
      %813 = vset.pattern.permute.xlu0 1
      %814 = vperm.xlu0 %813, %v395
      %v815 = vpop.permute.xlu0 %814
      %817 = vset.pattern.permute.xlu0 1
      %818 = vperm.xlu0 %817, %v396
      %v819 = vpop.permute.xlu0 %818
      %821 = vset.pattern.permute.xlu0 1
      %822 = vperm.xlu0 %821, %v397
      %v823 = vpop.permute.xlu0 %822
      %825 = vset.pattern.permute.xlu0 1
      %826 = vperm.xlu0 %825, %v398
      %v827 = vpop.permute.xlu0 %826
      %829 = vset.pattern.permute.xlu0 1
      %830 = vperm.xlu0 %829, %v399
      %v831 = vpop.permute.xlu0 %830
      %833 = vset.pattern.permute.xlu0 1
      %834 = vperm.xlu0 %833, %v400
      %v835 = vpop.permute.xlu0 %834
      %837 = vset.pattern.permute.xlu0 1
      %838 = vperm.xlu0 %837, %v401
      %v839 = vpop.permute.xlu0 %838
      %841 = vset.pattern.permute.xlu0 1
      %842 = vperm.xlu0 %841, %v402
      %v843 = vpop.permute.xlu0 %842
      %845 = vset.pattern.permute.xlu0 1
      %846 = vperm.xlu0 %845, %v403
      %v847 = vpop.permute.xlu0 %846
      %849 = vset.pattern.permute.xlu0 1
      %850 = vperm.xlu0 %849, %v404
      %v851 = vpop.permute.xlu0 %850
      %853 = vset.pattern.permute.xlu0 1
      %854 = vperm.xlu0 %853, %v405
      %v855 = vpop.permute.xlu0 %854
      %857 = vset.pattern.permute.xlu0 1
      %858 = vperm.xlu0 %857, %v406
      %v859 = vpop.permute.xlu0 %858
      %861 = vset.pattern.permute.xlu0 1
      %862 = vperm.xlu0 %861, %v407
      %v863 = vpop.permute.xlu0 %862
      %865 = vset.pattern.permute.xlu0 1
      %866 = vperm.xlu0 %865, %v408
      %v867 = vpop.permute.xlu0 %866
      %869 = vset.pattern.permute.xlu0 1
      %870 = vperm.xlu0 %869, %v409
      %v871 = vpop.permute.xlu0 %870
      %873 = vset.pattern.permute.xlu0 1
      %874 = vperm.xlu0 %873, %v410
      %v875 = vpop.permute.xlu0 %874
      %877 = vset.pattern.permute.xlu0 1
      %878 = vperm.xlu0 %877, %v411
      %v879 = vpop.permute.xlu0 %878
      %881 = vset.pattern.permute.xlu0 1
      %882 = vperm.xlu0 %881, %v412
      %v883 = vpop.permute.xlu0 %882
      %885 = vset.pattern.permute.xlu0 1
      %886 = vperm.xlu0 %885, %v413
      %v887 = vpop.permute.xlu0 %886
      %889 = vset.pattern.permute.xlu0 1
      %890 = vperm.xlu0 %889, %v414
      %v891 = vpop.permute.xlu0 %890
      %893 = vset.pattern.permute.xlu0 1
      %894 = vperm.xlu0 %893, %v415
      %v895 = vpop.permute.xlu0 %894
      %897 = vset.pattern.permute.xlu0 1
      %898 = vperm.xlu0 %897, %v416
      %v899 = vpop.permute.xlu0 %898
      %901 = vset.pattern.permute.xlu0 1
      %902 = vperm.xlu0 %901, %v417
      %v903 = vpop.permute.xlu0 %902
      %905 = vset.pattern.permute.xlu0 1
      %906 = vperm.xlu0 %905, %v418
      %v907 = vpop.permute.xlu0 %906
      %909 = vset.pattern.permute.xlu0 1
      %910 = vperm.xlu0 %909, %v419
      %v911 = vpop.permute.xlu0 %910
      %913 = vset.pattern.permute.xlu0 1
      %914 = vperm.xlu0 %913, %v420
      %v915 = vpop.permute.xlu0 %914
      %917 = vset.pattern.permute.xlu0 1
      %918 = vperm.xlu0 %917, %v421
      %v919 = vpop.permute.xlu0 %918
      %921 = vset.pattern.permute.xlu0 1
      %922 = vperm.xlu0 %921, %v422
      %v923 = vpop.permute.xlu0 %922
      %925 = vset.pattern.permute.xlu0 1
      %926 = vperm.xlu0 %925, %v423
      %v927 = vpop.permute.xlu0 %926
      %929 = vset.pattern.permute.xlu0 1
      %930 = vperm.xlu0 %929, %v424
      %v931 = vpop.permute.xlu0 %930
      %933 = vset.pattern.permute.xlu0 1
      %934 = vperm.xlu0 %933, %v425
      %v935 = vpop.permute.xlu0 %934
      %937 = vset.pattern.permute.xlu0 1
      %938 = vperm.xlu0 %937, %v426
      %v939 = vpop.permute.xlu0 %938
      %941 = vset.pattern.permute.xlu0 1
      %942 = vperm.xlu0 %941, %v427
      %v943 = vpop.permute.xlu0 %942
      %945 = vset.pattern.permute.xlu0 1
      %946 = vperm.xlu0 %945, %v428
      %v947 = vpop.permute.xlu0 %946
      %949 = vset.pattern.permute.xlu0 1
      %950 = vperm.xlu0 %949, %v429
      %v951 = vpop.permute.xlu0 %950
      %953 = vset.pattern.permute.xlu0 1
      %954 = vperm.xlu0 %953, %v430
      %v955 = vpop.permute.xlu0 %954
      %957 = vset.pattern.permute.xlu0 1
      %958 = vperm.xlu0 %957, %v431
      %v959 = vpop.permute.xlu0 %958
      %961 = vset.pattern.permute.xlu0 1
      %962 = vperm.xlu0 %961, %v432
      %v963 = vpop.permute.xlu0 %962
      %965 = vset.pattern.permute.xlu0 1
      %966 = vperm.xlu0 %965, %v433
      %v967 = vpop.permute.xlu0 %966
      %v969 = vperm.slane %v776, 0
      %v970 = vmul.f32 %v779, %v969
      %v971 = vmul.f32 %v783, %v969
      %v972 = vmul.f32 %v787, %v969
      %v973 = vmul.f32 %v791, %v969
      %v974 = vmul.f32 %v795, %v969
      %v975 = vmul.f32 %v799, %v969
      %v976 = vmul.f32 %v803, %v969
      %v977 = vmul.f32 %v807, %v969
      %v978 = vmul.f32 %v811, %v969
      %v979 = vmul.f32 %v815, %v969
      %v980 = vmul.f32 %v819, %v969
      %v981 = vmul.f32 %v823, %v969
      %v982 = vmul.f32 %v827, %v969
      %v983 = vmul.f32 %v831, %v969
      %v984 = vmul.f32 %v835, %v969
      %v985 = vmul.f32 %v839, %v969
      %v986 = vmul.f32 %v843, %v969
      %v987 = vmul.f32 %v847, %v969
      %v988 = vmul.f32 %v851, %v969
      %v989 = vmul.f32 %v855, %v969
      %v990 = vmul.f32 %v859, %v969
      %v991 = vmul.f32 %v863, %v969
      %v992 = vmul.f32 %v867, %v969
      %v993 = vmul.f32 %v871, %v969
      %v994 = vmul.f32 %v875, %v969
      %v995 = vmul.f32 %v879, %v969
      %v996 = vmul.f32 %v883, %v969
      %v997 = vmul.f32 %v887, %v969
      %v998 = vmul.f32 %v891, %v969
      %v999 = vmul.f32 %v895, %v969
      %v1000 = vmul.f32 %v899, %v969
      %v1001 = vmul.f32 %v903, %v969
      %v1002 = vmul.f32 %v907, %v969
      %v1003 = vmul.f32 %v911, %v969
      %v1004 = vmul.f32 %v915, %v969
      %v1005 = vmul.f32 %v919, %v969
      %v1006 = vmul.f32 %v923, %v969
      %v1007 = vmul.f32 %v927, %v969
      %v1008 = vmul.f32 %v931, %v969
      %v1009 = vmul.f32 %v935, %v969
      %v1010 = vmul.f32 %v939, %v969
      %v1011 = vmul.f32 %v943, %v969
      %v1012 = vmul.f32 %v947, %v969
      %v1013 = vmul.f32 %v951, %v969
      %v1014 = vmul.f32 %v955, %v969
      %v1015 = vmul.f32 %v959, %v969
      %v1016 = vmul.f32 %v963, %v969
      %v1017 = vmul.f32 %v967, %v969
      %v1018 = vadd.f32 %v728, %v970
      %v1019 = vadd.f32 %v729, %v971
      %v1020 = vadd.f32 %v730, %v972
      %v1021 = vadd.f32 %v731, %v973
      %v1022 = vadd.f32 %v732, %v974
      %v1023 = vadd.f32 %v733, %v975
      %v1024 = vadd.f32 %v734, %v976
      %v1025 = vadd.f32 %v735, %v977
      %v1026 = vadd.f32 %v736, %v978
      %v1027 = vadd.f32 %v737, %v979
      %v1028 = vadd.f32 %v738, %v980
      %v1029 = vadd.f32 %v739, %v981
      %v1030 = vadd.f32 %v740, %v982
      %v1031 = vadd.f32 %v741, %v983
      %v1032 = vadd.f32 %v742, %v984
      %v1033 = vadd.f32 %v743, %v985
      %v1034 = vadd.f32 %v744, %v986
      %v1035 = vadd.f32 %v745, %v987
      %v1036 = vadd.f32 %v746, %v988
      %v1037 = vadd.f32 %v747, %v989
      %v1038 = vadd.f32 %v748, %v990
      %v1039 = vadd.f32 %v749, %v991
      %v1040 = vadd.f32 %v750, %v992
      %v1041 = vadd.f32 %v751, %v993
      %v1042 = vadd.f32 %v752, %v994
      %v1043 = vadd.f32 %v753, %v995
      %v1044 = vadd.f32 %v754, %v996
      %v1045 = vadd.f32 %v755, %v997
      %v1046 = vadd.f32 %v756, %v998
      %v1047 = vadd.f32 %v757, %v999
      %v1048 = vadd.f32 %v758, %v1000
      %v1049 = vadd.f32 %v759, %v1001
      %v1050 = vadd.f32 %v760, %v1002
      %v1051 = vadd.f32 %v761, %v1003
      %v1052 = vadd.f32 %v762, %v1004
      %v1053 = vadd.f32 %v763, %v1005
      %v1054 = vadd.f32 %v764, %v1006
      %v1055 = vadd.f32 %v765, %v1007
      %v1056 = vadd.f32 %v766, %v1008
      %v1057 = vadd.f32 %v767, %v1009
      %v1058 = vadd.f32 %v768, %v1010
      %v1059 = vadd.f32 %v769, %v1011
      %v1060 = vadd.f32 %v770, %v1012
      %v1061 = vadd.f32 %v771, %v1013
      %v1062 = vadd.f32 %v772, %v1014
      %v1063 = vadd.f32 %v773, %v1015
      %v1064 = vadd.f32 %v774, %v1016
      %v1065 = vadd.f32 %v775, %v1017
      %v1066 = vld [vmem:[%s2 + $0x2] sm:$0x1]
      %1067 = vset.pattern.permute.xlu0 2
      %1068 = vperm.xlu0 %1067, %v386
      %v1069 = vpop.permute.xlu0 %1068
      %1071 = vset.pattern.permute.xlu0 2
      %1072 = vperm.xlu0 %1071, %v387
      %v1073 = vpop.permute.xlu0 %1072
      %1075 = vset.pattern.permute.xlu0 2
      %1076 = vperm.xlu0 %1075, %v388
      %v1077 = vpop.permute.xlu0 %1076
      %1079 = vset.pattern.permute.xlu0 2
      %1080 = vperm.xlu0 %1079, %v389
      %v1081 = vpop.permute.xlu0 %1080
      %1083 = vset.pattern.permute.xlu0 2
      %1084 = vperm.xlu0 %1083, %v390
      %v1085 = vpop.permute.xlu0 %1084
      %1087 = vset.pattern.permute.xlu0 2
      %1088 = vperm.xlu0 %1087, %v391
      %v1089 = vpop.permute.xlu0 %1088
      %1091 = vset.pattern.permute.xlu0 2
      %1092 = vperm.xlu0 %1091, %v392
      %v1093 = vpop.permute.xlu0 %1092
      %1095 = vset.pattern.permute.xlu0 2
      %1096 = vperm.xlu0 %1095, %v393
      %v1097 = vpop.permute.xlu0 %1096
      %1099 = vset.pattern.permute.xlu0 2
      %1100 = vperm.xlu0 %1099, %v394
      %v1101 = vpop.permute.xlu0 %1100
      %1103 = vset.pattern.permute.xlu0 2
      %1104 = vperm.xlu0 %1103, %v395
      %v1105 = vpop.permute.xlu0 %1104
      %1107 = vset.pattern.permute.xlu0 2
      %1108 = vperm.xlu0 %1107, %v396
      %v1109 = vpop.permute.xlu0 %1108
      %1111 = vset.pattern.permute.xlu0 2
      %1112 = vperm.xlu0 %1111, %v397
      %v1113 = vpop.permute.xlu0 %1112
      %1115 = vset.pattern.permute.xlu0 2
      %1116 = vperm.xlu0 %1115, %v398
      %v1117 = vpop.permute.xlu0 %1116
      %1119 = vset.pattern.permute.xlu0 2
      %1120 = vperm.xlu0 %1119, %v399
      %v1121 = vpop.permute.xlu0 %1120
      %1123 = vset.pattern.permute.xlu0 2
      %1124 = vperm.xlu0 %1123, %v400
      %v1125 = vpop.permute.xlu0 %1124
      %1127 = vset.pattern.permute.xlu0 2
      %1128 = vperm.xlu0 %1127, %v401
      %v1129 = vpop.permute.xlu0 %1128
      %1131 = vset.pattern.permute.xlu0 2
      %1132 = vperm.xlu0 %1131, %v402
      %v1133 = vpop.permute.xlu0 %1132
      %1135 = vset.pattern.permute.xlu0 2
      %1136 = vperm.xlu0 %1135, %v403
      %v1137 = vpop.permute.xlu0 %1136
      %1139 = vset.pattern.permute.xlu0 2
      %1140 = vperm.xlu0 %1139, %v404
      %v1141 = vpop.permute.xlu0 %1140
      %1143 = vset.pattern.permute.xlu0 2
      %1144 = vperm.xlu0 %1143, %v405
      %v1145 = vpop.permute.xlu0 %1144
      %1147 = vset.pattern.permute.xlu0 2
      %1148 = vperm.xlu0 %1147, %v406
      %v1149 = vpop.permute.xlu0 %1148
      %1151 = vset.pattern.permute.xlu0 2
      %1152 = vperm.xlu0 %1151, %v407
      %v1153 = vpop.permute.xlu0 %1152
      %1155 = vset.pattern.permute.xlu0 2
      %1156 = vperm.xlu0 %1155, %v408
      %v1157 = vpop.permute.xlu0 %1156
      %1159 = vset.pattern.permute.xlu0 2
      %1160 = vperm.xlu0 %1159, %v409
      %v1161 = vpop.permute.xlu0 %1160
      %1163 = vset.pattern.permute.xlu0 2
      %1164 = vperm.xlu0 %1163, %v410
      %v1165 = vpop.permute.xlu0 %1164
      %1167 = vset.pattern.permute.xlu0 2
      %1168 = vperm.xlu0 %1167, %v411
      %v1169 = vpop.permute.xlu0 %1168
      %1171 = vset.pattern.permute.xlu0 2
      %1172 = vperm.xlu0 %1171, %v412
      %v1173 = vpop.permute.xlu0 %1172
      %1175 = vset.pattern.permute.xlu0 2
      %1176 = vperm.xlu0 %1175, %v413
      %v1177 = vpop.permute.xlu0 %1176
      %1179 = vset.pattern.permute.xlu0 2
      %1180 = vperm.xlu0 %1179, %v414
      %v1181 = vpop.permute.xlu0 %1180
      %1183 = vset.pattern.permute.xlu0 2
      %1184 = vperm.xlu0 %1183, %v415
      %v1185 = vpop.permute.xlu0 %1184
      %1187 = vset.pattern.permute.xlu0 2
      %1188 = vperm.xlu0 %1187, %v416
      %v1189 = vpop.permute.xlu0 %1188
      %1191 = vset.pattern.permute.xlu0 2
      %1192 = vperm.xlu0 %1191, %v417
      %v1193 = vpop.permute.xlu0 %1192
      %1195 = vset.pattern.permute.xlu0 2
      %1196 = vperm.xlu0 %1195, %v418
      %v1197 = vpop.permute.xlu0 %1196
      %1199 = vset.pattern.permute.xlu0 2
      %1200 = vperm.xlu0 %1199, %v419
      %v1201 = vpop.permute.xlu0 %1200
      %1203 = vset.pattern.permute.xlu0 2
      %1204 = vperm.xlu0 %1203, %v420
      %v1205 = vpop.permute.xlu0 %1204
      %1207 = vset.pattern.permute.xlu0 2
      %1208 = vperm.xlu0 %1207, %v421
      %v1209 = vpop.permute.xlu0 %1208
      %1211 = vset.pattern.permute.xlu0 2
      %1212 = vperm.xlu0 %1211, %v422
      %v1213 = vpop.permute.xlu0 %1212
      %1215 = vset.pattern.permute.xlu0 2
      %1216 = vperm.xlu0 %1215, %v423
      %v1217 = vpop.permute.xlu0 %1216
      %1219 = vset.pattern.permute.xlu0 2
      %1220 = vperm.xlu0 %1219, %v424
      %v1221 = vpop.permute.xlu0 %1220
      %1223 = vset.pattern.permute.xlu0 2
      %1224 = vperm.xlu0 %1223, %v425
      %v1225 = vpop.permute.xlu0 %1224
      %1227 = vset.pattern.permute.xlu0 2
      %1228 = vperm.xlu0 %1227, %v426
      %v1229 = vpop.permute.xlu0 %1228
      %1231 = vset.pattern.permute.xlu0 2
      %1232 = vperm.xlu0 %1231, %v427
      %v1233 = vpop.permute.xlu0 %1232
      %1235 = vset.pattern.permute.xlu0 2
      %1236 = vperm.xlu0 %1235, %v428
      %v1237 = vpop.permute.xlu0 %1236
      %1239 = vset.pattern.permute.xlu0 2
      %1240 = vperm.xlu0 %1239, %v429
      %v1241 = vpop.permute.xlu0 %1240
      %1243 = vset.pattern.permute.xlu0 2
      %1244 = vperm.xlu0 %1243, %v430
      %v1245 = vpop.permute.xlu0 %1244
      %1247 = vset.pattern.permute.xlu0 2
      %1248 = vperm.xlu0 %1247, %v431
      %v1249 = vpop.permute.xlu0 %1248
      %1251 = vset.pattern.permute.xlu0 2
      %1252 = vperm.xlu0 %1251, %v432
      %v1253 = vpop.permute.xlu0 %1252
      %1255 = vset.pattern.permute.xlu0 2
      %1256 = vperm.xlu0 %1255, %v433
      %v1257 = vpop.permute.xlu0 %1256
      %v1259 = vperm.slane %v1066, 0
      %v1260 = vmul.f32 %v1069, %v1259
      %v1261 = vmul.f32 %v1073, %v1259
      %v1262 = vmul.f32 %v1077, %v1259
      %v1263 = vmul.f32 %v1081, %v1259
      %v1264 = vmul.f32 %v1085, %v1259
      %v1265 = vmul.f32 %v1089, %v1259
      %v1266 = vmul.f32 %v1093, %v1259
      %v1267 = vmul.f32 %v1097, %v1259
      %v1268 = vmul.f32 %v1101, %v1259
      %v1269 = vmul.f32 %v1105, %v1259
      %v1270 = vmul.f32 %v1109, %v1259
      %v1271 = vmul.f32 %v1113, %v1259
      %v1272 = vmul.f32 %v1117, %v1259
      %v1273 = vmul.f32 %v1121, %v1259
      %v1274 = vmul.f32 %v1125, %v1259
      %v1275 = vmul.f32 %v1129, %v1259
      %v1276 = vmul.f32 %v1133, %v1259
      %v1277 = vmul.f32 %v1137, %v1259
      %v1278 = vmul.f32 %v1141, %v1259
      %v1279 = vmul.f32 %v1145, %v1259
      %v1280 = vmul.f32 %v1149, %v1259
      %v1281 = vmul.f32 %v1153, %v1259
      %v1282 = vmul.f32 %v1157, %v1259
      %v1283 = vmul.f32 %v1161, %v1259
      %v1284 = vmul.f32 %v1165, %v1259
      %v1285 = vmul.f32 %v1169, %v1259
      %v1286 = vmul.f32 %v1173, %v1259
      %v1287 = vmul.f32 %v1177, %v1259
      %v1288 = vmul.f32 %v1181, %v1259
      %v1289 = vmul.f32 %v1185, %v1259
      %v1290 = vmul.f32 %v1189, %v1259
      %v1291 = vmul.f32 %v1193, %v1259
      %v1292 = vmul.f32 %v1197, %v1259
      %v1293 = vmul.f32 %v1201, %v1259
      %v1294 = vmul.f32 %v1205, %v1259
      %v1295 = vmul.f32 %v1209, %v1259
      %v1296 = vmul.f32 %v1213, %v1259
      %v1297 = vmul.f32 %v1217, %v1259
      %v1298 = vmul.f32 %v1221, %v1259
      %v1299 = vmul.f32 %v1225, %v1259
      %v1300 = vmul.f32 %v1229, %v1259
      %v1301 = vmul.f32 %v1233, %v1259
      %v1302 = vmul.f32 %v1237, %v1259
      %v1303 = vmul.f32 %v1241, %v1259
      %v1304 = vmul.f32 %v1245, %v1259
      %v1305 = vmul.f32 %v1249, %v1259
      %v1306 = vmul.f32 %v1253, %v1259
      %v1307 = vmul.f32 %v1257, %v1259
      %v1308 = vadd.f32 %v1018, %v1260
      %v1309 = vadd.f32 %v1019, %v1261
      %v1310 = vadd.f32 %v1020, %v1262
      %v1311 = vadd.f32 %v1021, %v1263
      %v1312 = vadd.f32 %v1022, %v1264
      %v1313 = vadd.f32 %v1023, %v1265
      %v1314 = vadd.f32 %v1024, %v1266
      %v1315 = vadd.f32 %v1025, %v1267
      %v1316 = vadd.f32 %v1026, %v1268
      %v1317 = vadd.f32 %v1027, %v1269
      %v1318 = vadd.f32 %v1028, %v1270
      %v1319 = vadd.f32 %v1029, %v1271
      %v1320 = vadd.f32 %v1030, %v1272
      %v1321 = vadd.f32 %v1031, %v1273
      %v1322 = vadd.f32 %v1032, %v1274
      %v1323 = vadd.f32 %v1033, %v1275
      %v1324 = vadd.f32 %v1034, %v1276
      %v1325 = vadd.f32 %v1035, %v1277
      %v1326 = vadd.f32 %v1036, %v1278
      %v1327 = vadd.f32 %v1037, %v1279
      %v1328 = vadd.f32 %v1038, %v1280
      %v1329 = vadd.f32 %v1039, %v1281
      %v1330 = vadd.f32 %v1040, %v1282
      %v1331 = vadd.f32 %v1041, %v1283
      %v1332 = vadd.f32 %v1042, %v1284
      %v1333 = vadd.f32 %v1043, %v1285
      %v1334 = vadd.f32 %v1044, %v1286
      %v1335 = vadd.f32 %v1045, %v1287
      %v1336 = vadd.f32 %v1046, %v1288
      %v1337 = vadd.f32 %v1047, %v1289
      %v1338 = vadd.f32 %v1048, %v1290
      %v1339 = vadd.f32 %v1049, %v1291
      %v1340 = vadd.f32 %v1050, %v1292
      %v1341 = vadd.f32 %v1051, %v1293
      %v1342 = vadd.f32 %v1052, %v1294
      %v1343 = vadd.f32 %v1053, %v1295
      %v1344 = vadd.f32 %v1054, %v1296
      %v1345 = vadd.f32 %v1055, %v1297
      %v1346 = vadd.f32 %v1056, %v1298
      %v1347 = vadd.f32 %v1057, %v1299
      %v1348 = vadd.f32 %v1058, %v1300
      %v1349 = vadd.f32 %v1059, %v1301
      %v1350 = vadd.f32 %v1060, %v1302
      %v1351 = vadd.f32 %v1061, %v1303
      %v1352 = vadd.f32 %v1062, %v1304
      %v1353 = vadd.f32 %v1063, %v1305
      %v1354 = vadd.f32 %v1064, %v1306
      %v1355 = vadd.f32 %v1065, %v1307
      %v1356 = vmax.f32 %v1308, 0.0
      %v1357 = vmax.f32 %v1309, 0.0
      %v1358 = vmax.f32 %v1310, 0.0
      %v1359 = vmax.f32 %v1311, 0.0
      %v1360 = vmax.f32 %v1312, 0.0
      %v1361 = vmax.f32 %v1313, 0.0
      %v1362 = vmax.f32 %v1314, 0.0
      %v1363 = vmax.f32 %v1315, 0.0
      %v1364 = vmax.f32 %v1316, 0.0
      %v1365 = vmax.f32 %v1317, 0.0
      %v1366 = vmax.f32 %v1318, 0.0
      %v1367 = vmax.f32 %v1319, 0.0
      %v1368 = vmax.f32 %v1320, 0.0
      %v1369 = vmax.f32 %v1321, 0.0
      %v1370 = vmax.f32 %v1322, 0.0
      %v1371 = vmax.f32 %v1323, 0.0
      %v1372 = vmax.f32 %v1324, 0.0
      %v1373 = vmax.f32 %v1325, 0.0
      %v1374 = vmax.f32 %v1326, 0.0
      %v1375 = vmax.f32 %v1327, 0.0
      %v1376 = vmax.f32 %v1328, 0.0
      %v1377 = vmax.f32 %v1329, 0.0
      %v1378 = vmax.f32 %v1330, 0.0
      %v1379 = vmax.f32 %v1331, 0.0
      %v1380 = vmax.f32 %v1332, 0.0
      %v1381 = vmax.f32 %v1333, 0.0
      %v1382 = vmax.f32 %v1334, 0.0
      %v1383 = vmax.f32 %v1335, 0.0
      %v1384 = vmax.f32 %v1336, 0.0
      %v1385 = vmax.f32 %v1337, 0.0
      %v1386 = vmax.f32 %v1338, 0.0
      %v1387 = vmax.f32 %v1339, 0.0
      %v1388 = vmax.f32 %v1340, 0.0
      %v1389 = vmax.f32 %v1341, 0.0
      %v1390 = vmax.f32 %v1342, 0.0
      %v1391 = vmax.f32 %v1343, 0.0
      %v1392 = vmax.f32 %v1344, 0.0
      %v1393 = vmax.f32 %v1345, 0.0
      %v1394 = vmax.f32 %v1346, 0.0
      %v1395 = vmax.f32 %v1347, 0.0
      %v1396 = vmax.f32 %v1348, 0.0
      %v1397 = vmax.f32 %v1349, 0.0
      %v1398 = vmax.f32 %v1350, 0.0
      %v1399 = vmax.f32 %v1351, 0.0
      %v1400 = vmax.f32 %v1352, 0.0
      %v1401 = vmax.f32 %v1353, 0.0
      %v1402 = vmax.f32 %v1354, 0.0
      %v1403 = vmax.f32 %v1355, 0.0
      %v1404 = vld [vmem:[%s3] sm:$0xff]
      %v1405 = vld [vmem:[%s3 + $0x8] sm:$0xff]
      %v1406 = vld [vmem:[%s3 + $0x10] sm:$0xff]
      %v1407 = vld [vmem:[%s3 + $0x18] sm:$0xff]
      %v1408 = vld [vmem:[%s3 + $0x20] sm:$0xff]
      %v1409 = vld [vmem:[%s3 + $0x28] sm:$0xff]
      %v1410 = vld [vmem:[%s3 + $0x30] sm:$0xff]
      %v1411 = vld [vmem:[%s3 + $0x38] sm:$0xff]
      %v1412 = vld [vmem:[%s3 + $0x40] sm:$0xff]
      %v1413 = vld [vmem:[%s3 + $0x48] sm:$0xff]
      %v1414 = vld [vmem:[%s3 + $0x50] sm:$0xff]
      %v1415 = vld [vmem:[%s3 + $0x58] sm:$0xff]
      %v1416 = vld [vmem:[%s3 + $0x60] sm:$0xff]
      %v1417 = vld [vmem:[%s3 + $0x68] sm:$0xff]
      %v1418 = vld [vmem:[%s3 + $0x70] sm:$0xff]
      %v1419 = vld [vmem:[%s3 + $0x78] sm:$0xff]
      %v1420 = vld [vmem:[%s4] sm:$0x1]
      %v1422 = vperm.slane %v1420, 0
      %1424 = vmatpush.msra.mxu0 %v1419
      %1425 = vmatpush.msra.mxu0 %v1418
      %1426 = vmatpush.msra.mxu0 %v1417
      %1427 = vmatpush.msra.mxu0 %v1416
      %1428 = vmatpush.msra.mxu0 %v1415
      %1429 = vmatpush.msra.mxu0 %v1414
      %1430 = vmatpush.msra.mxu0 %v1413
      %1431 = vmatpush.msra.mxu0 %v1412
      %1432 = vmatpush.msra.mxu0 %v1411
      %1433 = vmatpush.msra.mxu0 %v1410
      %1434 = vmatpush.msra.mxu0 %v1409
      %1435 = vmatpush.msra.mxu0 %v1408
      %1436 = vmatpush.msra.mxu0 %v1407
      %1437 = vmatpush.msra.mxu0 %v1406
      %1438 = vmatpush.msra.mxu0 %v1405
      %1439 = vmatpush.msra.mxu0 %v1404
      %1440 = vmatmul.f32.gmra.mxu0 %v1356
      %v1441 = vpop.f32.mrf.mxu0
      %v1442 = vadd.f32 %v1422, %v1441
      %1443 = vmatmul.f32.gmra.mxu0 %v1357
      %v1444 = vpop.f32.mrf.mxu0
      %v1445 = vadd.f32 %v1422, %v1444
      %1446 = vmatmul.f32.gmra.mxu0 %v1358
      %v1447 = vpop.f32.mrf.mxu0
      %v1448 = vadd.f32 %v1422, %v1447
      %1449 = vmatmul.f32.gmra.mxu0 %v1359
      %v1450 = vpop.f32.mrf.mxu0
      %v1451 = vadd.f32 %v1422, %v1450
      %1452 = vmatmul.f32.gmra.mxu0 %v1360
      %v1453 = vpop.f32.mrf.mxu0
      %v1454 = vadd.f32 %v1422, %v1453
      %1455 = vmatmul.f32.gmra.mxu0 %v1361
      %v1456 = vpop.f32.mrf.mxu0
      %v1457 = vadd.f32 %v1422, %v1456
      %1458 = vmatmul.f32.gmra.mxu0 %v1362
      %v1459 = vpop.f32.mrf.mxu0
      %v1460 = vadd.f32 %v1422, %v1459
      %1461 = vmatmul.f32.gmra.mxu0 %v1363
      %v1462 = vpop.f32.mrf.mxu0
      %v1463 = vadd.f32 %v1422, %v1462
      %1464 = vmatmul.f32.gmra.mxu0 %v1364
      %v1465 = vpop.f32.mrf.mxu0
      %v1466 = vadd.f32 %v1422, %v1465
      %1467 = vmatmul.f32.gmra.mxu0 %v1365
      %v1468 = vpop.f32.mrf.mxu0
      %v1469 = vadd.f32 %v1422, %v1468
      %1470 = vmatmul.f32.gmra.mxu0 %v1366
      %v1471 = vpop.f32.mrf.mxu0
      %v1472 = vadd.f32 %v1422, %v1471
      %1473 = vmatmul.f32.gmra.mxu0 %v1367
      %v1474 = vpop.f32.mrf.mxu0
      %v1475 = vadd.f32 %v1422, %v1474
      %1476 = vmatmul.f32.gmra.mxu0 %v1368
      %v1477 = vpop.f32.mrf.mxu0
      %v1478 = vadd.f32 %v1422, %v1477
      %1479 = vmatmul.f32.gmra.mxu0 %v1369
      %v1480 = vpop.f32.mrf.mxu0
      %v1481 = vadd.f32 %v1422, %v1480
      %1482 = vmatmul.f32.gmra.mxu0 %v1370
      %v1483 = vpop.f32.mrf.mxu0
      %v1484 = vadd.f32 %v1422, %v1483
      %1485 = vmatmul.f32.gmra.mxu0 %v1371
      %v1486 = vpop.f32.mrf.mxu0
      %v1487 = vadd.f32 %v1422, %v1486
      %1488 = vmatmul.f32.gmra.mxu0 %v1372
      %v1489 = vpop.f32.mrf.mxu0
      %v1490 = vadd.f32 %v1422, %v1489
      %1491 = vmatmul.f32.gmra.mxu0 %v1373
      %v1492 = vpop.f32.mrf.mxu0
      %v1493 = vadd.f32 %v1422, %v1492
      %1494 = vmatmul.f32.gmra.mxu0 %v1374
      %v1495 = vpop.f32.mrf.mxu0
      %v1496 = vadd.f32 %v1422, %v1495
      %1497 = vmatmul.f32.gmra.mxu0 %v1375
      %v1498 = vpop.f32.mrf.mxu0
      %v1499 = vadd.f32 %v1422, %v1498
      %1500 = vmatmul.f32.gmra.mxu0 %v1376
      %v1501 = vpop.f32.mrf.mxu0
      %v1502 = vadd.f32 %v1422, %v1501
      %1503 = vmatmul.f32.gmra.mxu0 %v1377
      %v1504 = vpop.f32.mrf.mxu0
      %v1505 = vadd.f32 %v1422, %v1504
      %1506 = vmatmul.f32.gmra.mxu0 %v1378
      %v1507 = vpop.f32.mrf.mxu0
      %v1508 = vadd.f32 %v1422, %v1507
      %1509 = vmatmul.f32.gmra.mxu0 %v1379
      %v1510 = vpop.f32.mrf.mxu0
      %v1511 = vadd.f32 %v1422, %v1510
      %1512 = vmatmul.f32.gmra.mxu0 %v1380
      %v1513 = vpop.f32.mrf.mxu0
      %v1514 = vadd.f32 %v1422, %v1513
      %1515 = vmatmul.f32.gmra.mxu0 %v1381
      %v1516 = vpop.f32.mrf.mxu0
      %v1517 = vadd.f32 %v1422, %v1516
      %1518 = vmatmul.f32.gmra.mxu0 %v1382
      %v1519 = vpop.f32.mrf.mxu0
      %v1520 = vadd.f32 %v1422, %v1519
      %1521 = vmatmul.f32.gmra.mxu0 %v1383
      %v1522 = vpop.f32.mrf.mxu0
      %v1523 = vadd.f32 %v1422, %v1522
      %1524 = vmatmul.f32.gmra.mxu0 %v1384
      %v1525 = vpop.f32.mrf.mxu0
      %v1526 = vadd.f32 %v1422, %v1525
      %1527 = vmatmul.f32.gmra.mxu0 %v1385
      %v1528 = vpop.f32.mrf.mxu0
      %v1529 = vadd.f32 %v1422, %v1528
      %1530 = vmatmul.f32.gmra.mxu0 %v1386
      %v1531 = vpop.f32.mrf.mxu0
      %v1532 = vadd.f32 %v1422, %v1531
      %1533 = vmatmul.f32.gmra.mxu0 %v1387
      %v1534 = vpop.f32.mrf.mxu0
      %v1535 = vadd.f32 %v1422, %v1534
      %1536 = vmatmul.f32.gmra.mxu0 %v1388
      %v1537 = vpop.f32.mrf.mxu0
      %v1538 = vadd.f32 %v1422, %v1537
      %1539 = vmatmul.f32.gmra.mxu0 %v1389
      %v1540 = vpop.f32.mrf.mxu0
      %v1541 = vadd.f32 %v1422, %v1540
      %1542 = vmatmul.f32.gmra.mxu0 %v1390
      %v1543 = vpop.f32.mrf.mxu0
      %v1544 = vadd.f32 %v1422, %v1543
      %1545 = vmatmul.f32.gmra.mxu0 %v1391
      %v1546 = vpop.f32.mrf.mxu0
      %v1547 = vadd.f32 %v1422, %v1546
      %1548 = vmatmul.f32.gmra.mxu0 %v1392
      %v1549 = vpop.f32.mrf.mxu0
      %v1550 = vadd.f32 %v1422, %v1549
      %1551 = vmatmul.f32.gmra.mxu0 %v1393
      %v1552 = vpop.f32.mrf.mxu0
      %v1553 = vadd.f32 %v1422, %v1552
      %1554 = vmatmul.f32.gmra.mxu0 %v1394
      %v1555 = vpop.f32.mrf.mxu0
      %v1556 = vadd.f32 %v1422, %v1555
      %1557 = vmatmul.f32.gmra.mxu0 %v1395
      %v1558 = vpop.f32.mrf.mxu0
      %v1559 = vadd.f32 %v1422, %v1558
      %1560 = vmatmul.f32.gmra.mxu0 %v1396
      %v1561 = vpop.f32.mrf.mxu0
      %v1562 = vadd.f32 %v1422, %v1561
      %1563 = vmatmul.f32.gmra.mxu0 %v1397
      %v1564 = vpop.f32.mrf.mxu0
      %v1565 = vadd.f32 %v1422, %v1564
      %1566 = vmatmul.f32.gmra.mxu0 %v1398
      %v1567 = vpop.f32.mrf.mxu0
      %v1568 = vadd.f32 %v1422, %v1567
      %1569 = vmatmul.f32.gmra.mxu0 %v1399
      %v1570 = vpop.f32.mrf.mxu0
      %v1571 = vadd.f32 %v1422, %v1570
      %1572 = vmatmul.f32.gmra.mxu0 %v1400
      %v1573 = vpop.f32.mrf.mxu0
      %v1574 = vadd.f32 %v1422, %v1573
      %1575 = vmatmul.f32.gmra.mxu0 %v1401
      %v1576 = vpop.f32.mrf.mxu0
      %v1577 = vadd.f32 %v1422, %v1576
      %1578 = vmatmul.f32.gmra.mxu0 %v1402
      %v1579 = vpop.f32.mrf.mxu0
      %v1580 = vadd.f32 %v1422, %v1579
      %1581 = vmatmul.f32.gmra.mxu0 %v1403
      %v1582 = vpop.f32.mrf.mxu0
      %v1583 = vadd.f32 %v1422, %v1582
      %1584 = vdwg.mxu0
      %v1585 = vmax.f32 %v1442, 0.0
      %v1586 = vmax.f32 %v1445, 0.0
      %v1587 = vmax.f32 %v1448, 0.0
      %v1588 = vmax.f32 %v1451, 0.0
      %v1589 = vmax.f32 %v1454, 0.0
      %v1590 = vmax.f32 %v1457, 0.0
      %v1591 = vmax.f32 %v1460, 0.0
      %v1592 = vmax.f32 %v1463, 0.0
      %v1593 = vmax.f32 %v1466, 0.0
      %v1594 = vmax.f32 %v1469, 0.0
      %v1595 = vmax.f32 %v1472, 0.0
      %v1596 = vmax.f32 %v1475, 0.0
      %v1597 = vmax.f32 %v1478, 0.0
      %v1598 = vmax.f32 %v1481, 0.0
      %v1599 = vmax.f32 %v1484, 0.0
      %v1600 = vmax.f32 %v1487, 0.0
      %v1601 = vmax.f32 %v1490, 0.0
      %v1602 = vmax.f32 %v1493, 0.0
      %v1603 = vmax.f32 %v1496, 0.0
      %v1604 = vmax.f32 %v1499, 0.0
      %v1605 = vmax.f32 %v1502, 0.0
      %v1606 = vmax.f32 %v1505, 0.0
      %v1607 = vmax.f32 %v1508, 0.0
      %v1608 = vmax.f32 %v1511, 0.0
      %v1609 = vmax.f32 %v1514, 0.0
      %v1610 = vmax.f32 %v1517, 0.0
      %v1611 = vmax.f32 %v1520, 0.0
      %v1612 = vmax.f32 %v1523, 0.0
      %v1613 = vmax.f32 %v1526, 0.0
      %v1614 = vmax.f32 %v1529, 0.0
      %v1615 = vmax.f32 %v1532, 0.0
      %v1616 = vmax.f32 %v1535, 0.0
      %v1617 = vmax.f32 %v1538, 0.0
      %v1618 = vmax.f32 %v1541, 0.0
      %v1619 = vmax.f32 %v1544, 0.0
      %v1620 = vmax.f32 %v1547, 0.0
      %v1621 = vmax.f32 %v1550, 0.0
      %v1622 = vmax.f32 %v1553, 0.0
      %v1623 = vmax.f32 %v1556, 0.0
      %v1624 = vmax.f32 %v1559, 0.0
      %v1625 = vmax.f32 %v1562, 0.0
      %v1626 = vmax.f32 %v1565, 0.0
      %v1627 = vmax.f32 %v1568, 0.0
      %v1628 = vmax.f32 %v1571, 0.0
      %v1629 = vmax.f32 %v1574, 0.0
      %v1630 = vmax.f32 %v1577, 0.0
      %v1631 = vmax.f32 %v1580, 0.0
      %v1632 = vmax.f32 %v1583, 0.0
      %v1633 = vld [vmem:[%s5] sm:$0xff]
      %v1634 = vld [vmem:[%s5 + $0x8] sm:$0xff]
      %v1635 = vld [vmem:[%s5 + $0x10] sm:$0xff]
      %v1636 = vld [vmem:[%s5 + $0x18] sm:$0xff]
      %v1637 = vld [vmem:[%s5 + $0x20] sm:$0xff]
      %v1638 = vld [vmem:[%s5 + $0x28] sm:$0xff]
      %v1639 = vld [vmem:[%s5 + $0x30] sm:$0xff]
      %v1640 = vld [vmem:[%s5 + $0x38] sm:$0xff]
      %v1641 = vld [vmem:[%s5 + $0x40] sm:$0xff]
      %v1642 = vld [vmem:[%s5 + $0x48] sm:$0xff]
      %v1643 = vld [vmem:[%s5 + $0x50] sm:$0xff]
      %v1644 = vld [vmem:[%s5 + $0x58] sm:$0xff]
      %v1645 = vld [vmem:[%s5 + $0x60] sm:$0xff]
      %v1646 = vld [vmem:[%s5 + $0x68] sm:$0xff]
      %v1647 = vld [vmem:[%s5 + $0x70] sm:$0xff]
      %v1648 = vld [vmem:[%s5 + $0x78] sm:$0xff]
      %v1649 = vld [vmem:[%s6] sm:$0x1]
      %v1651 = vperm.slane %v1649, 0
      %1653 = vmatpush.msra.mxu0 %v1648
      %1654 = vmatpush.msra.mxu0 %v1647
      %1655 = vmatpush.msra.mxu0 %v1646
      %1656 = vmatpush.msra.mxu0 %v1645
      %1657 = vmatpush.msra.mxu0 %v1644
      %1658 = vmatpush.msra.mxu0 %v1643
      %1659 = vmatpush.msra.mxu0 %v1642
      %1660 = vmatpush.msra.mxu0 %v1641
      %1661 = vmatpush.msra.mxu0 %v1640
      %1662 = vmatpush.msra.mxu0 %v1639
      %1663 = vmatpush.msra.mxu0 %v1638
      %1664 = vmatpush.msra.mxu0 %v1637
      %1665 = vmatpush.msra.mxu0 %v1636
      %1666 = vmatpush.msra.mxu0 %v1635
      %1667 = vmatpush.msra.mxu0 %v1634
      %1668 = vmatpush.msra.mxu0 %v1633
      %1669 = vmatmul.f32.gmra.mxu0 %v1585
      %v1670 = vpop.f32.mrf.mxu0
      %v1671 = vadd.f32 %v1651, %v1670
      %1672 = vmatmul.f32.gmra.mxu0 %v1586
      %v1673 = vpop.f32.mrf.mxu0
      %v1674 = vadd.f32 %v1651, %v1673
      %1675 = vmatmul.f32.gmra.mxu0 %v1587
      %v1676 = vpop.f32.mrf.mxu0
      %v1677 = vadd.f32 %v1651, %v1676
      %1678 = vmatmul.f32.gmra.mxu0 %v1588
      %v1679 = vpop.f32.mrf.mxu0
      %v1680 = vadd.f32 %v1651, %v1679
      %1681 = vmatmul.f32.gmra.mxu0 %v1589
      %v1682 = vpop.f32.mrf.mxu0
      %v1683 = vadd.f32 %v1651, %v1682
      %1684 = vmatmul.f32.gmra.mxu0 %v1590
      %v1685 = vpop.f32.mrf.mxu0
      %v1686 = vadd.f32 %v1651, %v1685
      %1687 = vmatmul.f32.gmra.mxu0 %v1591
      %v1688 = vpop.f32.mrf.mxu0
      %v1689 = vadd.f32 %v1651, %v1688
      %1690 = vmatmul.f32.gmra.mxu0 %v1592
      %v1691 = vpop.f32.mrf.mxu0
      %v1692 = vadd.f32 %v1651, %v1691
      %1693 = vmatmul.f32.gmra.mxu0 %v1593
      %v1694 = vpop.f32.mrf.mxu0
      %v1695 = vadd.f32 %v1651, %v1694
      %1696 = vmatmul.f32.gmra.mxu0 %v1594
      %v1697 = vpop.f32.mrf.mxu0
      %v1698 = vadd.f32 %v1651, %v1697
      %1699 = vmatmul.f32.gmra.mxu0 %v1595
      %v1700 = vpop.f32.mrf.mxu0
      %v1701 = vadd.f32 %v1651, %v1700
      %1702 = vmatmul.f32.gmra.mxu0 %v1596
      %v1703 = vpop.f32.mrf.mxu0
      %v1704 = vadd.f32 %v1651, %v1703
      %1705 = vmatmul.f32.gmra.mxu0 %v1597
      %v1706 = vpop.f32.mrf.mxu0
      %v1707 = vadd.f32 %v1651, %v1706
      %1708 = vmatmul.f32.gmra.mxu0 %v1598
      %v1709 = vpop.f32.mrf.mxu0
      %v1710 = vadd.f32 %v1651, %v1709
      %1711 = vmatmul.f32.gmra.mxu0 %v1599
      %v1712 = vpop.f32.mrf.mxu0
      %v1713 = vadd.f32 %v1651, %v1712
      %1714 = vmatmul.f32.gmra.mxu0 %v1600
      %v1715 = vpop.f32.mrf.mxu0
      %v1716 = vadd.f32 %v1651, %v1715
      %1717 = vmatmul.f32.gmra.mxu0 %v1601
      %v1718 = vpop.f32.mrf.mxu0
      %v1719 = vadd.f32 %v1651, %v1718
      %1720 = vmatmul.f32.gmra.mxu0 %v1602
      %v1721 = vpop.f32.mrf.mxu0
      %v1722 = vadd.f32 %v1651, %v1721
      %1723 = vmatmul.f32.gmra.mxu0 %v1603
      %v1724 = vpop.f32.mrf.mxu0
      %v1725 = vadd.f32 %v1651, %v1724
      %1726 = vmatmul.f32.gmra.mxu0 %v1604
      %v1727 = vpop.f32.mrf.mxu0
      %v1728 = vadd.f32 %v1651, %v1727
      %1729 = vmatmul.f32.gmra.mxu0 %v1605
      %v1730 = vpop.f32.mrf.mxu0
      %v1731 = vadd.f32 %v1651, %v1730
      %1732 = vmatmul.f32.gmra.mxu0 %v1606
      %v1733 = vpop.f32.mrf.mxu0
      %v1734 = vadd.f32 %v1651, %v1733
      %1735 = vmatmul.f32.gmra.mxu0 %v1607
      %v1736 = vpop.f32.mrf.mxu0
      %v1737 = vadd.f32 %v1651, %v1736
      %1738 = vmatmul.f32.gmra.mxu0 %v1608
      %v1739 = vpop.f32.mrf.mxu0
      %v1740 = vadd.f32 %v1651, %v1739
      %1741 = vmatmul.f32.gmra.mxu0 %v1609
      %v1742 = vpop.f32.mrf.mxu0
      %v1743 = vadd.f32 %v1651, %v1742
      %1744 = vmatmul.f32.gmra.mxu0 %v1610
      %v1745 = vpop.f32.mrf.mxu0
      %v1746 = vadd.f32 %v1651, %v1745
      %1747 = vmatmul.f32.gmra.mxu0 %v1611
      %v1748 = vpop.f32.mrf.mxu0
      %v1749 = vadd.f32 %v1651, %v1748
      %1750 = vmatmul.f32.gmra.mxu0 %v1612
      %v1751 = vpop.f32.mrf.mxu0
      %v1752 = vadd.f32 %v1651, %v1751
      %1753 = vmatmul.f32.gmra.mxu0 %v1613
      %v1754 = vpop.f32.mrf.mxu0
      %v1755 = vadd.f32 %v1651, %v1754
      %1756 = vmatmul.f32.gmra.mxu0 %v1614
      %v1757 = vpop.f32.mrf.mxu0
      %v1758 = vadd.f32 %v1651, %v1757
      %1759 = vmatmul.f32.gmra.mxu0 %v1615
      %v1760 = vpop.f32.mrf.mxu0
      %v1761 = vadd.f32 %v1651, %v1760
      %1762 = vmatmul.f32.gmra.mxu0 %v1616
      %v1763 = vpop.f32.mrf.mxu0
      %v1764 = vadd.f32 %v1651, %v1763
      %1765 = vmatmul.f32.gmra.mxu0 %v1617
      %v1766 = vpop.f32.mrf.mxu0
      %v1767 = vadd.f32 %v1651, %v1766
      %1768 = vmatmul.f32.gmra.mxu0 %v1618
      %v1769 = vpop.f32.mrf.mxu0
      %v1770 = vadd.f32 %v1651, %v1769
      %1771 = vmatmul.f32.gmra.mxu0 %v1619
      %v1772 = vpop.f32.mrf.mxu0
      %v1773 = vadd.f32 %v1651, %v1772
      %1774 = vmatmul.f32.gmra.mxu0 %v1620
      %v1775 = vpop.f32.mrf.mxu0
      %v1776 = vadd.f32 %v1651, %v1775
      %1777 = vmatmul.f32.gmra.mxu0 %v1621
      %v1778 = vpop.f32.mrf.mxu0
      %v1779 = vadd.f32 %v1651, %v1778
      %1780 = vmatmul.f32.gmra.mxu0 %v1622
      %v1781 = vpop.f32.mrf.mxu0
      %v1782 = vadd.f32 %v1651, %v1781
      %1783 = vmatmul.f32.gmra.mxu0 %v1623
      %v1784 = vpop.f32.mrf.mxu0
      %v1785 = vadd.f32 %v1651, %v1784
      %1786 = vmatmul.f32.gmra.mxu0 %v1624
      %v1787 = vpop.f32.mrf.mxu0
      %v1788 = vadd.f32 %v1651, %v1787
      %1789 = vmatmul.f32.gmra.mxu0 %v1625
      %v1790 = vpop.f32.mrf.mxu0
      %v1791 = vadd.f32 %v1651, %v1790
      %1792 = vmatmul.f32.gmra.mxu0 %v1626
      %v1793 = vpop.f32.mrf.mxu0
      %v1794 = vadd.f32 %v1651, %v1793
      %1795 = vmatmul.f32.gmra.mxu0 %v1627
      %v1796 = vpop.f32.mrf.mxu0
      %v1797 = vadd.f32 %v1651, %v1796
      %1798 = vmatmul.f32.gmra.mxu0 %v1628
      %v1799 = vpop.f32.mrf.mxu0
      %v1800 = vadd.f32 %v1651, %v1799
      %1801 = vmatmul.f32.gmra.mxu0 %v1629
      %v1802 = vpop.f32.mrf.mxu0
      %v1803 = vadd.f32 %v1651, %v1802
      %1804 = vmatmul.f32.gmra.mxu0 %v1630
      %v1805 = vpop.f32.mrf.mxu0
      %v1806 = vadd.f32 %v1651, %v1805
      %1807 = vmatmul.f32.gmra.mxu0 %v1631
      %v1808 = vpop.f32.mrf.mxu0
      %v1809 = vadd.f32 %v1651, %v1808
      %1810 = vmatmul.f32.gmra.mxu0 %v1632
      %v1811 = vpop.f32.mrf.mxu0
      %v1812 = vadd.f32 %v1651, %v1811
      %1813 = vdwg.mxu0
      %v1814 = vadd.f32 %v1308, %v1671
      %v1815 = vadd.f32 %v1309, %v1674
      %v1816 = vadd.f32 %v1310, %v1677
      %v1817 = vadd.f32 %v1311, %v1680
      %v1818 = vadd.f32 %v1312, %v1683
      %v1819 = vadd.f32 %v1313, %v1686
      %v1820 = vadd.f32 %v1314, %v1689
      %v1821 = vadd.f32 %v1315, %v1692
      %v1822 = vadd.f32 %v1316, %v1695
      %v1823 = vadd.f32 %v1317, %v1698
      %v1824 = vadd.f32 %v1318, %v1701
      %v1825 = vadd.f32 %v1319, %v1704
      %v1826 = vadd.f32 %v1320, %v1707
      %v1827 = vadd.f32 %v1321, %v1710
      %v1828 = vadd.f32 %v1322, %v1713
      %v1829 = vadd.f32 %v1323, %v1716
      %v1830 = vadd.f32 %v1324, %v1719
      %v1831 = vadd.f32 %v1325, %v1722
      %v1832 = vadd.f32 %v1326, %v1725
      %v1833 = vadd.f32 %v1327, %v1728
      %v1834 = vadd.f32 %v1328, %v1731
      %v1835 = vadd.f32 %v1329, %v1734
      %v1836 = vadd.f32 %v1330, %v1737
      %v1837 = vadd.f32 %v1331, %v1740
      %v1838 = vadd.f32 %v1332, %v1743
      %v1839 = vadd.f32 %v1333, %v1746
      %v1840 = vadd.f32 %v1334, %v1749
      %v1841 = vadd.f32 %v1335, %v1752
      %v1842 = vadd.f32 %v1336, %v1755
      %v1843 = vadd.f32 %v1337, %v1758
      %v1844 = vadd.f32 %v1338, %v1761
      %v1845 = vadd.f32 %v1339, %v1764
      %v1846 = vadd.f32 %v1340, %v1767
      %v1847 = vadd.f32 %v1341, %v1770
      %v1848 = vadd.f32 %v1342, %v1773
      %v1849 = vadd.f32 %v1343, %v1776
      %v1850 = vadd.f32 %v1344, %v1779
      %v1851 = vadd.f32 %v1345, %v1782
      %v1852 = vadd.f32 %v1346, %v1785
      %v1853 = vadd.f32 %v1347, %v1788
      %v1854 = vadd.f32 %v1348, %v1791
      %v1855 = vadd.f32 %v1349, %v1794
      %v1856 = vadd.f32 %v1350, %v1797
      %v1857 = vadd.f32 %v1351, %v1800
      %v1858 = vadd.f32 %v1352, %v1803
      %v1859 = vadd.f32 %v1353, %v1806
      %v1860 = vadd.f32 %v1354, %v1809
      %v1861 = vadd.f32 %v1355, %v1812
      %v1862 = vmax.f32 %v1814, 0.0
      %v1863 = vmax.f32 %v1815, 0.0
      %v1864 = vmax.f32 %v1816, 0.0
      %v1865 = vmax.f32 %v1817, 0.0
      %v1866 = vmax.f32 %v1818, 0.0
      %v1867 = vmax.f32 %v1819, 0.0
      %v1868 = vmax.f32 %v1820, 0.0
      %v1869 = vmax.f32 %v1821, 0.0
      %v1870 = vmax.f32 %v1822, 0.0
      %v1871 = vmax.f32 %v1823, 0.0
      %v1872 = vmax.f32 %v1824, 0.0
      %v1873 = vmax.f32 %v1825, 0.0
      %v1874 = vmax.f32 %v1826, 0.0
      %v1875 = vmax.f32 %v1827, 0.0
      %v1876 = vmax.f32 %v1828, 0.0
      %v1877 = vmax.f32 %v1829, 0.0
      %v1878 = vmax.f32 %v1830, 0.0
      %v1879 = vmax.f32 %v1831, 0.0
      %v1880 = vmax.f32 %v1832, 0.0
      %v1881 = vmax.f32 %v1833, 0.0
      %v1882 = vmax.f32 %v1834, 0.0
      %v1883 = vmax.f32 %v1835, 0.0
      %v1884 = vmax.f32 %v1836, 0.0
      %v1885 = vmax.f32 %v1837, 0.0
      %v1886 = vmax.f32 %v1838, 0.0
      %v1887 = vmax.f32 %v1839, 0.0
      %v1888 = vmax.f32 %v1840, 0.0
      %v1889 = vmax.f32 %v1841, 0.0
      %v1890 = vmax.f32 %v1842, 0.0
      %v1891 = vmax.f32 %v1843, 0.0
      %v1892 = vmax.f32 %v1844, 0.0
      %v1893 = vmax.f32 %v1845, 0.0
      %v1894 = vmax.f32 %v1846, 0.0
      %v1895 = vmax.f32 %v1847, 0.0
      %v1896 = vmax.f32 %v1848, 0.0
      %v1897 = vmax.f32 %v1849, 0.0
      %v1898 = vmax.f32 %v1850, 0.0
      %v1899 = vmax.f32 %v1851, 0.0
      %v1900 = vmax.f32 %v1852, 0.0
      %v1901 = vmax.f32 %v1853, 0.0
      %v1902 = vmax.f32 %v1854, 0.0
      %v1903 = vmax.f32 %v1855, 0.0
      %v1904 = vmax.f32 %v1856, 0.0
      %v1905 = vmax.f32 %v1857, 0.0
      %v1906 = vmax.f32 %v1858, 0.0
      %v1907 = vmax.f32 %v1859, 0.0
      %v1908 = vmax.f32 %v1860, 0.0
      %v1909 = vmax.f32 %v1861, 0.0
      %s1910 = scalar_lea.vmem %s3, 128
      %v1911 = vld [vmem:[%s1910] sm:$0xff]
      %v1912 = vld [vmem:[%s1910 + $0x8] sm:$0xff]
      %v1913 = vld [vmem:[%s1910 + $0x10] sm:$0xff]
      %v1914 = vld [vmem:[%s1910 + $0x18] sm:$0xff]
      %v1915 = vld [vmem:[%s1910 + $0x20] sm:$0xff]
      %v1916 = vld [vmem:[%s1910 + $0x28] sm:$0xff]
      %v1917 = vld [vmem:[%s1910 + $0x30] sm:$0xff]
      %v1918 = vld [vmem:[%s1910 + $0x38] sm:$0xff]
      %v1919 = vld [vmem:[%s1910 + $0x40] sm:$0xff]
      %v1920 = vld [vmem:[%s1910 + $0x48] sm:$0xff]
      %v1921 = vld [vmem:[%s1910 + $0x50] sm:$0xff]
      %v1922 = vld [vmem:[%s1910 + $0x58] sm:$0xff]
      %v1923 = vld [vmem:[%s1910 + $0x60] sm:$0xff]
      %v1924 = vld [vmem:[%s1910 + $0x68] sm:$0xff]
      %v1925 = vld [vmem:[%s1910 + $0x70] sm:$0xff]
      %v1926 = vld [vmem:[%s1910 + $0x78] sm:$0xff]
      %s1927 = scalar_lea.vmem %s4, 1
      %v1928 = vld [vmem:[%s1927] sm:$0x1]
      %v1930 = vperm.slane %v1928, 0
      %1932 = vmatpush.msra.mxu0 %v1926
      %1933 = vmatpush.msra.mxu0 %v1925
      %1934 = vmatpush.msra.mxu0 %v1924
      %1935 = vmatpush.msra.mxu0 %v1923
      %1936 = vmatpush.msra.mxu0 %v1922
      %1937 = vmatpush.msra.mxu0 %v1921
      %1938 = vmatpush.msra.mxu0 %v1920
      %1939 = vmatpush.msra.mxu0 %v1919
      %1940 = vmatpush.msra.mxu0 %v1918
      %1941 = vmatpush.msra.mxu0 %v1917
      %1942 = vmatpush.msra.mxu0 %v1916
      %1943 = vmatpush.msra.mxu0 %v1915
      %1944 = vmatpush.msra.mxu0 %v1914
      %1945 = vmatpush.msra.mxu0 %v1913
      %1946 = vmatpush.msra.mxu0 %v1912
      %1947 = vmatpush.msra.mxu0 %v1911
      %1948 = vmatmul.f32.gmra.mxu0 %v1862
      %v1949 = vpop.f32.mrf.mxu0
      %v1950 = vadd.f32 %v1930, %v1949
      %1951 = vmatmul.f32.gmra.mxu0 %v1863
      %v1952 = vpop.f32.mrf.mxu0
      %v1953 = vadd.f32 %v1930, %v1952
      %1954 = vmatmul.f32.gmra.mxu0 %v1864
      %v1955 = vpop.f32.mrf.mxu0
      %v1956 = vadd.f32 %v1930, %v1955
      %1957 = vmatmul.f32.gmra.mxu0 %v1865
      %v1958 = vpop.f32.mrf.mxu0
      %v1959 = vadd.f32 %v1930, %v1958
      %1960 = vmatmul.f32.gmra.mxu0 %v1866
      %v1961 = vpop.f32.mrf.mxu0
      %v1962 = vadd.f32 %v1930, %v1961
      %1963 = vmatmul.f32.gmra.mxu0 %v1867
      %v1964 = vpop.f32.mrf.mxu0
      %v1965 = vadd.f32 %v1930, %v1964
      %1966 = vmatmul.f32.gmra.mxu0 %v1868
      %v1967 = vpop.f32.mrf.mxu0
      %v1968 = vadd.f32 %v1930, %v1967
      %1969 = vmatmul.f32.gmra.mxu0 %v1869
      %v1970 = vpop.f32.mrf.mxu0
      %v1971 = vadd.f32 %v1930, %v1970
      %1972 = vmatmul.f32.gmra.mxu0 %v1870
      %v1973 = vpop.f32.mrf.mxu0
      %v1974 = vadd.f32 %v1930, %v1973
      %1975 = vmatmul.f32.gmra.mxu0 %v1871
      %v1976 = vpop.f32.mrf.mxu0
      %v1977 = vadd.f32 %v1930, %v1976
      %1978 = vmatmul.f32.gmra.mxu0 %v1872
      %v1979 = vpop.f32.mrf.mxu0
      %v1980 = vadd.f32 %v1930, %v1979
      %1981 = vmatmul.f32.gmra.mxu0 %v1873
      %v1982 = vpop.f32.mrf.mxu0
      %v1983 = vadd.f32 %v1930, %v1982
      %1984 = vmatmul.f32.gmra.mxu0 %v1874
      %v1985 = vpop.f32.mrf.mxu0
      %v1986 = vadd.f32 %v1930, %v1985
      %1987 = vmatmul.f32.gmra.mxu0 %v1875
      %v1988 = vpop.f32.mrf.mxu0
      %v1989 = vadd.f32 %v1930, %v1988
      %1990 = vmatmul.f32.gmra.mxu0 %v1876
      %v1991 = vpop.f32.mrf.mxu0
      %v1992 = vadd.f32 %v1930, %v1991
      %1993 = vmatmul.f32.gmra.mxu0 %v1877
      %v1994 = vpop.f32.mrf.mxu0
      %v1995 = vadd.f32 %v1930, %v1994
      %1996 = vmatmul.f32.gmra.mxu0 %v1878
      %v1997 = vpop.f32.mrf.mxu0
      %v1998 = vadd.f32 %v1930, %v1997
      %1999 = vmatmul.f32.gmra.mxu0 %v1879
      %v2000 = vpop.f32.mrf.mxu0
      %v2001 = vadd.f32 %v1930, %v2000
      %2002 = vmatmul.f32.gmra.mxu0 %v1880
      %v2003 = vpop.f32.mrf.mxu0
      %v2004 = vadd.f32 %v1930, %v2003
      %2005 = vmatmul.f32.gmra.mxu0 %v1881
      %v2006 = vpop.f32.mrf.mxu0
      %v2007 = vadd.f32 %v1930, %v2006
      %2008 = vmatmul.f32.gmra.mxu0 %v1882
      %v2009 = vpop.f32.mrf.mxu0
      %v2010 = vadd.f32 %v1930, %v2009
      %2011 = vmatmul.f32.gmra.mxu0 %v1883
      %v2012 = vpop.f32.mrf.mxu0
      %v2013 = vadd.f32 %v1930, %v2012
      %2014 = vmatmul.f32.gmra.mxu0 %v1884
      %v2015 = vpop.f32.mrf.mxu0
      %v2016 = vadd.f32 %v1930, %v2015
      %2017 = vmatmul.f32.gmra.mxu0 %v1885
      %v2018 = vpop.f32.mrf.mxu0
      %v2019 = vadd.f32 %v1930, %v2018
      %2020 = vmatmul.f32.gmra.mxu0 %v1886
      %v2021 = vpop.f32.mrf.mxu0
      %v2022 = vadd.f32 %v1930, %v2021
      %2023 = vmatmul.f32.gmra.mxu0 %v1887
      %v2024 = vpop.f32.mrf.mxu0
      %v2025 = vadd.f32 %v1930, %v2024
      %2026 = vmatmul.f32.gmra.mxu0 %v1888
      %v2027 = vpop.f32.mrf.mxu0
      %v2028 = vadd.f32 %v1930, %v2027
      %2029 = vmatmul.f32.gmra.mxu0 %v1889
      %v2030 = vpop.f32.mrf.mxu0
      %v2031 = vadd.f32 %v1930, %v2030
      %2032 = vmatmul.f32.gmra.mxu0 %v1890
      %v2033 = vpop.f32.mrf.mxu0
      %v2034 = vadd.f32 %v1930, %v2033
      %2035 = vmatmul.f32.gmra.mxu0 %v1891
      %v2036 = vpop.f32.mrf.mxu0
      %v2037 = vadd.f32 %v1930, %v2036
      %2038 = vmatmul.f32.gmra.mxu0 %v1892
      %v2039 = vpop.f32.mrf.mxu0
      %v2040 = vadd.f32 %v1930, %v2039
      %2041 = vmatmul.f32.gmra.mxu0 %v1893
      %v2042 = vpop.f32.mrf.mxu0
      %v2043 = vadd.f32 %v1930, %v2042
      %2044 = vmatmul.f32.gmra.mxu0 %v1894
      %v2045 = vpop.f32.mrf.mxu0
      %v2046 = vadd.f32 %v1930, %v2045
      %2047 = vmatmul.f32.gmra.mxu0 %v1895
      %v2048 = vpop.f32.mrf.mxu0
      %v2049 = vadd.f32 %v1930, %v2048
      %2050 = vmatmul.f32.gmra.mxu0 %v1896
      %v2051 = vpop.f32.mrf.mxu0
      %v2052 = vadd.f32 %v1930, %v2051
      %2053 = vmatmul.f32.gmra.mxu0 %v1897
      %v2054 = vpop.f32.mrf.mxu0
      %v2055 = vadd.f32 %v1930, %v2054
      %2056 = vmatmul.f32.gmra.mxu0 %v1898
      %v2057 = vpop.f32.mrf.mxu0
      %v2058 = vadd.f32 %v1930, %v2057
      %2059 = vmatmul.f32.gmra.mxu0 %v1899
      %v2060 = vpop.f32.mrf.mxu0
      %v2061 = vadd.f32 %v1930, %v2060
      %2062 = vmatmul.f32.gmra.mxu0 %v1900
      %v2063 = vpop.f32.mrf.mxu0
      %v2064 = vadd.f32 %v1930, %v2063
      %2065 = vmatmul.f32.gmra.mxu0 %v1901
      %v2066 = vpop.f32.mrf.mxu0
      %v2067 = vadd.f32 %v1930, %v2066
      %2068 = vmatmul.f32.gmra.mxu0 %v1902
      %v2069 = vpop.f32.mrf.mxu0
      %v2070 = vadd.f32 %v1930, %v2069
      %2071 = vmatmul.f32.gmra.mxu0 %v1903
      %v2072 = vpop.f32.mrf.mxu0
      %v2073 = vadd.f32 %v1930, %v2072
      %2074 = vmatmul.f32.gmra.mxu0 %v1904
      %v2075 = vpop.f32.mrf.mxu0
      %v2076 = vadd.f32 %v1930, %v2075
      %2077 = vmatmul.f32.gmra.mxu0 %v1905
      %v2078 = vpop.f32.mrf.mxu0
      %v2079 = vadd.f32 %v1930, %v2078
      %2080 = vmatmul.f32.gmra.mxu0 %v1906
      %v2081 = vpop.f32.mrf.mxu0
      %v2082 = vadd.f32 %v1930, %v2081
      %2083 = vmatmul.f32.gmra.mxu0 %v1907
      %v2084 = vpop.f32.mrf.mxu0
      %v2085 = vadd.f32 %v1930, %v2084
      %2086 = vmatmul.f32.gmra.mxu0 %v1908
      %v2087 = vpop.f32.mrf.mxu0
      %v2088 = vadd.f32 %v1930, %v2087
      %2089 = vmatmul.f32.gmra.mxu0 %v1909
      %v2090 = vpop.f32.mrf.mxu0
      %v2091 = vadd.f32 %v1930, %v2090
      %2092 = vdwg.mxu0
      %v2093 = vmax.f32 %v1950, 0.0
      %v2094 = vmax.f32 %v1953, 0.0
      %v2095 = vmax.f32 %v1956, 0.0
      %v2096 = vmax.f32 %v1959, 0.0
      %v2097 = vmax.f32 %v1962, 0.0
      %v2098 = vmax.f32 %v1965, 0.0
      %v2099 = vmax.f32 %v1968, 0.0
      %v2100 = vmax.f32 %v1971, 0.0
      %v2101 = vmax.f32 %v1974, 0.0
      %v2102 = vmax.f32 %v1977, 0.0
      %v2103 = vmax.f32 %v1980, 0.0
      %v2104 = vmax.f32 %v1983, 0.0
      %v2105 = vmax.f32 %v1986, 0.0
      %v2106 = vmax.f32 %v1989, 0.0
      %v2107 = vmax.f32 %v1992, 0.0
      %v2108 = vmax.f32 %v1995, 0.0
      %v2109 = vmax.f32 %v1998, 0.0
      %v2110 = vmax.f32 %v2001, 0.0
      %v2111 = vmax.f32 %v2004, 0.0
      %v2112 = vmax.f32 %v2007, 0.0
      %v2113 = vmax.f32 %v2010, 0.0
      %v2114 = vmax.f32 %v2013, 0.0
      %v2115 = vmax.f32 %v2016, 0.0
      %v2116 = vmax.f32 %v2019, 0.0
      %v2117 = vmax.f32 %v2022, 0.0
      %v2118 = vmax.f32 %v2025, 0.0
      %v2119 = vmax.f32 %v2028, 0.0
      %v2120 = vmax.f32 %v2031, 0.0
      %v2121 = vmax.f32 %v2034, 0.0
      %v2122 = vmax.f32 %v2037, 0.0
      %v2123 = vmax.f32 %v2040, 0.0
      %v2124 = vmax.f32 %v2043, 0.0
      %v2125 = vmax.f32 %v2046, 0.0
      %v2126 = vmax.f32 %v2049, 0.0
      %v2127 = vmax.f32 %v2052, 0.0
      %v2128 = vmax.f32 %v2055, 0.0
      %v2129 = vmax.f32 %v2058, 0.0
      %v2130 = vmax.f32 %v2061, 0.0
      %v2131 = vmax.f32 %v2064, 0.0
      %v2132 = vmax.f32 %v2067, 0.0
      %v2133 = vmax.f32 %v2070, 0.0
      %v2134 = vmax.f32 %v2073, 0.0
      %v2135 = vmax.f32 %v2076, 0.0
      %v2136 = vmax.f32 %v2079, 0.0
      %v2137 = vmax.f32 %v2082, 0.0
      %v2138 = vmax.f32 %v2085, 0.0
      %v2139 = vmax.f32 %v2088, 0.0
      %v2140 = vmax.f32 %v2091, 0.0
      %s2141 = scalar_lea.vmem %s5, 128
      %v2142 = vld [vmem:[%s2141] sm:$0xff]
      %v2143 = vld [vmem:[%s2141 + $0x8] sm:$0xff]
      %v2144 = vld [vmem:[%s2141 + $0x10] sm:$0xff]
      %v2145 = vld [vmem:[%s2141 + $0x18] sm:$0xff]
      %v2146 = vld [vmem:[%s2141 + $0x20] sm:$0xff]
      %v2147 = vld [vmem:[%s2141 + $0x28] sm:$0xff]
      %v2148 = vld [vmem:[%s2141 + $0x30] sm:$0xff]
      %v2149 = vld [vmem:[%s2141 + $0x38] sm:$0xff]
      %v2150 = vld [vmem:[%s2141 + $0x40] sm:$0xff]
      %v2151 = vld [vmem:[%s2141 + $0x48] sm:$0xff]
      %v2152 = vld [vmem:[%s2141 + $0x50] sm:$0xff]
      %v2153 = vld [vmem:[%s2141 + $0x58] sm:$0xff]
      %v2154 = vld [vmem:[%s2141 + $0x60] sm:$0xff]
      %v2155 = vld [vmem:[%s2141 + $0x68] sm:$0xff]
      %v2156 = vld [vmem:[%s2141 + $0x70] sm:$0xff]
      %v2157 = vld [vmem:[%s2141 + $0x78] sm:$0xff]
      %s2158 = scalar_lea.vmem %s6, 1
      %v2159 = vld [vmem:[%s2158] sm:$0x1]
      %v2161 = vperm.slane %v2159, 0
      %2163 = vmatpush.msra.mxu0 %v2157
      %2164 = vmatpush.msra.mxu0 %v2156
      %2165 = vmatpush.msra.mxu0 %v2155
      %2166 = vmatpush.msra.mxu0 %v2154
      %2167 = vmatpush.msra.mxu0 %v2153
      %2168 = vmatpush.msra.mxu0 %v2152
      %2169 = vmatpush.msra.mxu0 %v2151
      %2170 = vmatpush.msra.mxu0 %v2150
      %2171 = vmatpush.msra.mxu0 %v2149
      %2172 = vmatpush.msra.mxu0 %v2148
      %2173 = vmatpush.msra.mxu0 %v2147
      %2174 = vmatpush.msra.mxu0 %v2146
      %2175 = vmatpush.msra.mxu0 %v2145
      %2176 = vmatpush.msra.mxu0 %v2144
      %2177 = vmatpush.msra.mxu0 %v2143
      %2178 = vmatpush.msra.mxu0 %v2142
      %2179 = vmatmul.f32.gmra.mxu0 %v2093
      %v2180 = vpop.f32.mrf.mxu0
      %v2181 = vadd.f32 %v2161, %v2180
      %2182 = vmatmul.f32.gmra.mxu0 %v2094
      %v2183 = vpop.f32.mrf.mxu0
      %v2184 = vadd.f32 %v2161, %v2183
      %2185 = vmatmul.f32.gmra.mxu0 %v2095
      %v2186 = vpop.f32.mrf.mxu0
      %v2187 = vadd.f32 %v2161, %v2186
      %2188 = vmatmul.f32.gmra.mxu0 %v2096
      %v2189 = vpop.f32.mrf.mxu0
      %v2190 = vadd.f32 %v2161, %v2189
      %2191 = vmatmul.f32.gmra.mxu0 %v2097
      %v2192 = vpop.f32.mrf.mxu0
      %v2193 = vadd.f32 %v2161, %v2192
      %2194 = vmatmul.f32.gmra.mxu0 %v2098
      %v2195 = vpop.f32.mrf.mxu0
      %v2196 = vadd.f32 %v2161, %v2195
      %2197 = vmatmul.f32.gmra.mxu0 %v2099
      %v2198 = vpop.f32.mrf.mxu0
      %v2199 = vadd.f32 %v2161, %v2198
      %2200 = vmatmul.f32.gmra.mxu0 %v2100
      %v2201 = vpop.f32.mrf.mxu0
      %v2202 = vadd.f32 %v2161, %v2201
      %2203 = vmatmul.f32.gmra.mxu0 %v2101
      %v2204 = vpop.f32.mrf.mxu0
      %v2205 = vadd.f32 %v2161, %v2204
      %2206 = vmatmul.f32.gmra.mxu0 %v2102
      %v2207 = vpop.f32.mrf.mxu0
      %v2208 = vadd.f32 %v2161, %v2207
      %2209 = vmatmul.f32.gmra.mxu0 %v2103
      %v2210 = vpop.f32.mrf.mxu0
      %v2211 = vadd.f32 %v2161, %v2210
      %2212 = vmatmul.f32.gmra.mxu0 %v2104
      %v2213 = vpop.f32.mrf.mxu0
      %v2214 = vadd.f32 %v2161, %v2213
      %2215 = vmatmul.f32.gmra.mxu0 %v2105
      %v2216 = vpop.f32.mrf.mxu0
      %v2217 = vadd.f32 %v2161, %v2216
      %2218 = vmatmul.f32.gmra.mxu0 %v2106
      %v2219 = vpop.f32.mrf.mxu0
      %v2220 = vadd.f32 %v2161, %v2219
      %2221 = vmatmul.f32.gmra.mxu0 %v2107
      %v2222 = vpop.f32.mrf.mxu0
      %v2223 = vadd.f32 %v2161, %v2222
      %2224 = vmatmul.f32.gmra.mxu0 %v2108
      %v2225 = vpop.f32.mrf.mxu0
      %v2226 = vadd.f32 %v2161, %v2225
      %2227 = vmatmul.f32.gmra.mxu0 %v2109
      %v2228 = vpop.f32.mrf.mxu0
      %v2229 = vadd.f32 %v2161, %v2228
      %2230 = vmatmul.f32.gmra.mxu0 %v2110
      %v2231 = vpop.f32.mrf.mxu0
      %v2232 = vadd.f32 %v2161, %v2231
      %2233 = vmatmul.f32.gmra.mxu0 %v2111
      %v2234 = vpop.f32.mrf.mxu0
      %v2235 = vadd.f32 %v2161, %v2234
      %2236 = vmatmul.f32.gmra.mxu0 %v2112
      %v2237 = vpop.f32.mrf.mxu0
      %v2238 = vadd.f32 %v2161, %v2237
      %2239 = vmatmul.f32.gmra.mxu0 %v2113
      %v2240 = vpop.f32.mrf.mxu0
      %v2241 = vadd.f32 %v2161, %v2240
      %2242 = vmatmul.f32.gmra.mxu0 %v2114
      %v2243 = vpop.f32.mrf.mxu0
      %v2244 = vadd.f32 %v2161, %v2243
      %2245 = vmatmul.f32.gmra.mxu0 %v2115
      %v2246 = vpop.f32.mrf.mxu0
      %v2247 = vadd.f32 %v2161, %v2246
      %2248 = vmatmul.f32.gmra.mxu0 %v2116
      %v2249 = vpop.f32.mrf.mxu0
      %v2250 = vadd.f32 %v2161, %v2249
      %2251 = vmatmul.f32.gmra.mxu0 %v2117
      %v2252 = vpop.f32.mrf.mxu0
      %v2253 = vadd.f32 %v2161, %v2252
      %2254 = vmatmul.f32.gmra.mxu0 %v2118
      %v2255 = vpop.f32.mrf.mxu0
      %v2256 = vadd.f32 %v2161, %v2255
      %2257 = vmatmul.f32.gmra.mxu0 %v2119
      %v2258 = vpop.f32.mrf.mxu0
      %v2259 = vadd.f32 %v2161, %v2258
      %2260 = vmatmul.f32.gmra.mxu0 %v2120
      %v2261 = vpop.f32.mrf.mxu0
      %v2262 = vadd.f32 %v2161, %v2261
      %2263 = vmatmul.f32.gmra.mxu0 %v2121
      %v2264 = vpop.f32.mrf.mxu0
      %v2265 = vadd.f32 %v2161, %v2264
      %2266 = vmatmul.f32.gmra.mxu0 %v2122
      %v2267 = vpop.f32.mrf.mxu0
      %v2268 = vadd.f32 %v2161, %v2267
      %2269 = vmatmul.f32.gmra.mxu0 %v2123
      %v2270 = vpop.f32.mrf.mxu0
      %v2271 = vadd.f32 %v2161, %v2270
      %2272 = vmatmul.f32.gmra.mxu0 %v2124
      %v2273 = vpop.f32.mrf.mxu0
      %v2274 = vadd.f32 %v2161, %v2273
      %2275 = vmatmul.f32.gmra.mxu0 %v2125
      %v2276 = vpop.f32.mrf.mxu0
      %v2277 = vadd.f32 %v2161, %v2276
      %2278 = vmatmul.f32.gmra.mxu0 %v2126
      %v2279 = vpop.f32.mrf.mxu0
      %v2280 = vadd.f32 %v2161, %v2279
      %2281 = vmatmul.f32.gmra.mxu0 %v2127
      %v2282 = vpop.f32.mrf.mxu0
      %v2283 = vadd.f32 %v2161, %v2282
      %2284 = vmatmul.f32.gmra.mxu0 %v2128
      %v2285 = vpop.f32.mrf.mxu0
      %v2286 = vadd.f32 %v2161, %v2285
      %2287 = vmatmul.f32.gmra.mxu0 %v2129
      %v2288 = vpop.f32.mrf.mxu0
      %v2289 = vadd.f32 %v2161, %v2288
      %2290 = vmatmul.f32.gmra.mxu0 %v2130
      %v2291 = vpop.f32.mrf.mxu0
      %v2292 = vadd.f32 %v2161, %v2291
      %2293 = vmatmul.f32.gmra.mxu0 %v2131
      %v2294 = vpop.f32.mrf.mxu0
      %v2295 = vadd.f32 %v2161, %v2294
      %2296 = vmatmul.f32.gmra.mxu0 %v2132
      %v2297 = vpop.f32.mrf.mxu0
      %v2298 = vadd.f32 %v2161, %v2297
      %2299 = vmatmul.f32.gmra.mxu0 %v2133
      %v2300 = vpop.f32.mrf.mxu0
      %v2301 = vadd.f32 %v2161, %v2300
      %2302 = vmatmul.f32.gmra.mxu0 %v2134
      %v2303 = vpop.f32.mrf.mxu0
      %v2304 = vadd.f32 %v2161, %v2303
      %2305 = vmatmul.f32.gmra.mxu0 %v2135
      %v2306 = vpop.f32.mrf.mxu0
      %v2307 = vadd.f32 %v2161, %v2306
      %2308 = vmatmul.f32.gmra.mxu0 %v2136
      %v2309 = vpop.f32.mrf.mxu0
      %v2310 = vadd.f32 %v2161, %v2309
      %2311 = vmatmul.f32.gmra.mxu0 %v2137
      %v2312 = vpop.f32.mrf.mxu0
      %v2313 = vadd.f32 %v2161, %v2312
      %2314 = vmatmul.f32.gmra.mxu0 %v2138
      %v2315 = vpop.f32.mrf.mxu0
      %v2316 = vadd.f32 %v2161, %v2315
      %2317 = vmatmul.f32.gmra.mxu0 %v2139
      %v2318 = vpop.f32.mrf.mxu0
      %v2319 = vadd.f32 %v2161, %v2318
      %2320 = vmatmul.f32.gmra.mxu0 %v2140
      %v2321 = vpop.f32.mrf.mxu0
      %v2322 = vadd.f32 %v2161, %v2321
      %2323 = vdwg.mxu0
      %v2324 = vadd.f32 %v1814, %v2181
      %v2325 = vadd.f32 %v1815, %v2184
      %v2326 = vadd.f32 %v1816, %v2187
      %v2327 = vadd.f32 %v1817, %v2190
      %v2328 = vadd.f32 %v1818, %v2193
      %v2329 = vadd.f32 %v1819, %v2196
      %v2330 = vadd.f32 %v1820, %v2199
      %v2331 = vadd.f32 %v1821, %v2202
      %v2332 = vadd.f32 %v1822, %v2205
      %v2333 = vadd.f32 %v1823, %v2208
      %v2334 = vadd.f32 %v1824, %v2211
      %v2335 = vadd.f32 %v1825, %v2214
      %v2336 = vadd.f32 %v1826, %v2217
      %v2337 = vadd.f32 %v1827, %v2220
      %v2338 = vadd.f32 %v1828, %v2223
      %v2339 = vadd.f32 %v1829, %v2226
      %v2340 = vadd.f32 %v1830, %v2229
      %v2341 = vadd.f32 %v1831, %v2232
      %v2342 = vadd.f32 %v1832, %v2235
      %v2343 = vadd.f32 %v1833, %v2238
      %v2344 = vadd.f32 %v1834, %v2241
      %v2345 = vadd.f32 %v1835, %v2244
      %v2346 = vadd.f32 %v1836, %v2247
      %v2347 = vadd.f32 %v1837, %v2250
      %v2348 = vadd.f32 %v1838, %v2253
      %v2349 = vadd.f32 %v1839, %v2256
      %v2350 = vadd.f32 %v1840, %v2259
      %v2351 = vadd.f32 %v1841, %v2262
      %v2352 = vadd.f32 %v1842, %v2265
      %v2353 = vadd.f32 %v1843, %v2268
      %v2354 = vadd.f32 %v1844, %v2271
      %v2355 = vadd.f32 %v1845, %v2274
      %v2356 = vadd.f32 %v1846, %v2277
      %v2357 = vadd.f32 %v1847, %v2280
      %v2358 = vadd.f32 %v1848, %v2283
      %v2359 = vadd.f32 %v1849, %v2286
      %v2360 = vadd.f32 %v1850, %v2289
      %v2361 = vadd.f32 %v1851, %v2292
      %v2362 = vadd.f32 %v1852, %v2295
      %v2363 = vadd.f32 %v1853, %v2298
      %v2364 = vadd.f32 %v1854, %v2301
      %v2365 = vadd.f32 %v1855, %v2304
      %v2366 = vadd.f32 %v1856, %v2307
      %v2367 = vadd.f32 %v1857, %v2310
      %v2368 = vadd.f32 %v1858, %v2313
      %v2369 = vadd.f32 %v1859, %v2316
      %v2370 = vadd.f32 %v1860, %v2319
      %v2371 = vadd.f32 %v1861, %v2322
      %v2372 = vmax.f32 %v2324, 0.0
      %v2373 = vmax.f32 %v2325, 0.0
      %v2374 = vmax.f32 %v2326, 0.0
      %v2375 = vmax.f32 %v2327, 0.0
      %v2376 = vmax.f32 %v2328, 0.0
      %v2377 = vmax.f32 %v2329, 0.0
      %v2378 = vmax.f32 %v2330, 0.0
      %v2379 = vmax.f32 %v2331, 0.0
      %v2380 = vmax.f32 %v2332, 0.0
      %v2381 = vmax.f32 %v2333, 0.0
      %v2382 = vmax.f32 %v2334, 0.0
      %v2383 = vmax.f32 %v2335, 0.0
      %v2384 = vmax.f32 %v2336, 0.0
      %v2385 = vmax.f32 %v2337, 0.0
      %v2386 = vmax.f32 %v2338, 0.0
      %v2387 = vmax.f32 %v2339, 0.0
      %v2388 = vmax.f32 %v2340, 0.0
      %v2389 = vmax.f32 %v2341, 0.0
      %v2390 = vmax.f32 %v2342, 0.0
      %v2391 = vmax.f32 %v2343, 0.0
      %v2392 = vmax.f32 %v2344, 0.0
      %v2393 = vmax.f32 %v2345, 0.0
      %v2394 = vmax.f32 %v2346, 0.0
      %v2395 = vmax.f32 %v2347, 0.0
      %v2396 = vmax.f32 %v2348, 0.0
      %v2397 = vmax.f32 %v2349, 0.0
      %v2398 = vmax.f32 %v2350, 0.0
      %v2399 = vmax.f32 %v2351, 0.0
      %v2400 = vmax.f32 %v2352, 0.0
      %v2401 = vmax.f32 %v2353, 0.0
      %v2402 = vmax.f32 %v2354, 0.0
      %v2403 = vmax.f32 %v2355, 0.0
      %v2404 = vmax.f32 %v2356, 0.0
      %v2405 = vmax.f32 %v2357, 0.0
      %v2406 = vmax.f32 %v2358, 0.0
      %v2407 = vmax.f32 %v2359, 0.0
      %v2408 = vmax.f32 %v2360, 0.0
      %v2409 = vmax.f32 %v2361, 0.0
      %v2410 = vmax.f32 %v2362, 0.0
      %v2411 = vmax.f32 %v2363, 0.0
      %v2412 = vmax.f32 %v2364, 0.0
      %v2413 = vmax.f32 %v2365, 0.0
      %v2414 = vmax.f32 %v2366, 0.0
      %v2415 = vmax.f32 %v2367, 0.0
      %v2416 = vmax.f32 %v2368, 0.0
      %v2417 = vmax.f32 %v2369, 0.0
      %v2418 = vmax.f32 %v2370, 0.0
      %v2419 = vmax.f32 %v2371, 0.0
      %s2420 = scalar_lea.vmem %s3, 256
      %v2421 = vld [vmem:[%s2420] sm:$0xff]
      %v2422 = vld [vmem:[%s2420 + $0x8] sm:$0xff]
      %v2423 = vld [vmem:[%s2420 + $0x10] sm:$0xff]
      %v2424 = vld [vmem:[%s2420 + $0x18] sm:$0xff]
      %v2425 = vld [vmem:[%s2420 + $0x20] sm:$0xff]
      %v2426 = vld [vmem:[%s2420 + $0x28] sm:$0xff]
      %v2427 = vld [vmem:[%s2420 + $0x30] sm:$0xff]
      %v2428 = vld [vmem:[%s2420 + $0x38] sm:$0xff]
      %v2429 = vld [vmem:[%s2420 + $0x40] sm:$0xff]
      %v2430 = vld [vmem:[%s2420 + $0x48] sm:$0xff]
      %v2431 = vld [vmem:[%s2420 + $0x50] sm:$0xff]
      %v2432 = vld [vmem:[%s2420 + $0x58] sm:$0xff]
      %v2433 = vld [vmem:[%s2420 + $0x60] sm:$0xff]
      %v2434 = vld [vmem:[%s2420 + $0x68] sm:$0xff]
      %v2435 = vld [vmem:[%s2420 + $0x70] sm:$0xff]
      %v2436 = vld [vmem:[%s2420 + $0x78] sm:$0xff]
      %s2437 = scalar_lea.vmem %s4, 2
      %v2438 = vld [vmem:[%s2437] sm:$0x1]
      %v2440 = vperm.slane %v2438, 0
      %2442 = vmatpush.msra.mxu0 %v2436
      %2443 = vmatpush.msra.mxu0 %v2435
      %2444 = vmatpush.msra.mxu0 %v2434
      %2445 = vmatpush.msra.mxu0 %v2433
      %2446 = vmatpush.msra.mxu0 %v2432
      %2447 = vmatpush.msra.mxu0 %v2431
      %2448 = vmatpush.msra.mxu0 %v2430
      %2449 = vmatpush.msra.mxu0 %v2429
      %2450 = vmatpush.msra.mxu0 %v2428
      %2451 = vmatpush.msra.mxu0 %v2427
      %2452 = vmatpush.msra.mxu0 %v2426
      %2453 = vmatpush.msra.mxu0 %v2425
      %2454 = vmatpush.msra.mxu0 %v2424
      %2455 = vmatpush.msra.mxu0 %v2423
      %2456 = vmatpush.msra.mxu0 %v2422
      %2457 = vmatpush.msra.mxu0 %v2421
      %2458 = vmatmul.f32.gmra.mxu0 %v2372
      %v2459 = vpop.f32.mrf.mxu0
      %v2460 = vadd.f32 %v2440, %v2459
      %2461 = vmatmul.f32.gmra.mxu0 %v2373
      %v2462 = vpop.f32.mrf.mxu0
      %v2463 = vadd.f32 %v2440, %v2462
      %2464 = vmatmul.f32.gmra.mxu0 %v2374
      %v2465 = vpop.f32.mrf.mxu0
      %v2466 = vadd.f32 %v2440, %v2465
      %2467 = vmatmul.f32.gmra.mxu0 %v2375
      %v2468 = vpop.f32.mrf.mxu0
      %v2469 = vadd.f32 %v2440, %v2468
      %2470 = vmatmul.f32.gmra.mxu0 %v2376
      %v2471 = vpop.f32.mrf.mxu0
      %v2472 = vadd.f32 %v2440, %v2471
      %2473 = vmatmul.f32.gmra.mxu0 %v2377
      %v2474 = vpop.f32.mrf.mxu0
      %v2475 = vadd.f32 %v2440, %v2474
      %2476 = vmatmul.f32.gmra.mxu0 %v2378
      %v2477 = vpop.f32.mrf.mxu0
      %v2478 = vadd.f32 %v2440, %v2477
      %2479 = vmatmul.f32.gmra.mxu0 %v2379
      %v2480 = vpop.f32.mrf.mxu0
      %v2481 = vadd.f32 %v2440, %v2480
      %2482 = vmatmul.f32.gmra.mxu0 %v2380
      %v2483 = vpop.f32.mrf.mxu0
      %v2484 = vadd.f32 %v2440, %v2483
      %2485 = vmatmul.f32.gmra.mxu0 %v2381
      %v2486 = vpop.f32.mrf.mxu0
      %v2487 = vadd.f32 %v2440, %v2486
      %2488 = vmatmul.f32.gmra.mxu0 %v2382
      %v2489 = vpop.f32.mrf.mxu0
      %v2490 = vadd.f32 %v2440, %v2489
      %2491 = vmatmul.f32.gmra.mxu0 %v2383
      %v2492 = vpop.f32.mrf.mxu0
      %v2493 = vadd.f32 %v2440, %v2492
      %2494 = vmatmul.f32.gmra.mxu0 %v2384
      %v2495 = vpop.f32.mrf.mxu0
      %v2496 = vadd.f32 %v2440, %v2495
      %2497 = vmatmul.f32.gmra.mxu0 %v2385
      %v2498 = vpop.f32.mrf.mxu0
      %v2499 = vadd.f32 %v2440, %v2498
      %2500 = vmatmul.f32.gmra.mxu0 %v2386
      %v2501 = vpop.f32.mrf.mxu0
      %v2502 = vadd.f32 %v2440, %v2501
      %2503 = vmatmul.f32.gmra.mxu0 %v2387
      %v2504 = vpop.f32.mrf.mxu0
      %v2505 = vadd.f32 %v2440, %v2504
      %2506 = vmatmul.f32.gmra.mxu0 %v2388
      %v2507 = vpop.f32.mrf.mxu0
      %v2508 = vadd.f32 %v2440, %v2507
      %2509 = vmatmul.f32.gmra.mxu0 %v2389
      %v2510 = vpop.f32.mrf.mxu0
      %v2511 = vadd.f32 %v2440, %v2510
      %2512 = vmatmul.f32.gmra.mxu0 %v2390
      %v2513 = vpop.f32.mrf.mxu0
      %v2514 = vadd.f32 %v2440, %v2513
      %2515 = vmatmul.f32.gmra.mxu0 %v2391
      %v2516 = vpop.f32.mrf.mxu0
      %v2517 = vadd.f32 %v2440, %v2516
      %2518 = vmatmul.f32.gmra.mxu0 %v2392
      %v2519 = vpop.f32.mrf.mxu0
      %v2520 = vadd.f32 %v2440, %v2519
      %2521 = vmatmul.f32.gmra.mxu0 %v2393
      %v2522 = vpop.f32.mrf.mxu0
      %v2523 = vadd.f32 %v2440, %v2522
      %2524 = vmatmul.f32.gmra.mxu0 %v2394
      %v2525 = vpop.f32.mrf.mxu0
      %v2526 = vadd.f32 %v2440, %v2525
      %2527 = vmatmul.f32.gmra.mxu0 %v2395
      %v2528 = vpop.f32.mrf.mxu0
      %v2529 = vadd.f32 %v2440, %v2528
      %2530 = vmatmul.f32.gmra.mxu0 %v2396
      %v2531 = vpop.f32.mrf.mxu0
      %v2532 = vadd.f32 %v2440, %v2531
      %2533 = vmatmul.f32.gmra.mxu0 %v2397
      %v2534 = vpop.f32.mrf.mxu0
      %v2535 = vadd.f32 %v2440, %v2534
      %2536 = vmatmul.f32.gmra.mxu0 %v2398
      %v2537 = vpop.f32.mrf.mxu0
      %v2538 = vadd.f32 %v2440, %v2537
      %2539 = vmatmul.f32.gmra.mxu0 %v2399
      %v2540 = vpop.f32.mrf.mxu0
      %v2541 = vadd.f32 %v2440, %v2540
      %2542 = vmatmul.f32.gmra.mxu0 %v2400
      %v2543 = vpop.f32.mrf.mxu0
      %v2544 = vadd.f32 %v2440, %v2543
      %2545 = vmatmul.f32.gmra.mxu0 %v2401
      %v2546 = vpop.f32.mrf.mxu0
      %v2547 = vadd.f32 %v2440, %v2546
      %2548 = vmatmul.f32.gmra.mxu0 %v2402
      %v2549 = vpop.f32.mrf.mxu0
      %v2550 = vadd.f32 %v2440, %v2549
      %2551 = vmatmul.f32.gmra.mxu0 %v2403
      %v2552 = vpop.f32.mrf.mxu0
      %v2553 = vadd.f32 %v2440, %v2552
      %2554 = vmatmul.f32.gmra.mxu0 %v2404
      %v2555 = vpop.f32.mrf.mxu0
      %v2556 = vadd.f32 %v2440, %v2555
      %2557 = vmatmul.f32.gmra.mxu0 %v2405
      %v2558 = vpop.f32.mrf.mxu0
      %v2559 = vadd.f32 %v2440, %v2558
      %2560 = vmatmul.f32.gmra.mxu0 %v2406
      %v2561 = vpop.f32.mrf.mxu0
      %v2562 = vadd.f32 %v2440, %v2561
      %2563 = vmatmul.f32.gmra.mxu0 %v2407
      %v2564 = vpop.f32.mrf.mxu0
      %v2565 = vadd.f32 %v2440, %v2564
      %2566 = vmatmul.f32.gmra.mxu0 %v2408
      %v2567 = vpop.f32.mrf.mxu0
      %v2568 = vadd.f32 %v2440, %v2567
      %2569 = vmatmul.f32.gmra.mxu0 %v2409
      %v2570 = vpop.f32.mrf.mxu0
      %v2571 = vadd.f32 %v2440, %v2570
      %2572 = vmatmul.f32.gmra.mxu0 %v2410
      %v2573 = vpop.f32.mrf.mxu0
      %v2574 = vadd.f32 %v2440, %v2573
      %2575 = vmatmul.f32.gmra.mxu0 %v2411
      %v2576 = vpop.f32.mrf.mxu0
      %v2577 = vadd.f32 %v2440, %v2576
      %2578 = vmatmul.f32.gmra.mxu0 %v2412
      %v2579 = vpop.f32.mrf.mxu0
      %v2580 = vadd.f32 %v2440, %v2579
      %2581 = vmatmul.f32.gmra.mxu0 %v2413
      %v2582 = vpop.f32.mrf.mxu0
      %v2583 = vadd.f32 %v2440, %v2582
      %2584 = vmatmul.f32.gmra.mxu0 %v2414
      %v2585 = vpop.f32.mrf.mxu0
      %v2586 = vadd.f32 %v2440, %v2585
      %2587 = vmatmul.f32.gmra.mxu0 %v2415
      %v2588 = vpop.f32.mrf.mxu0
      %v2589 = vadd.f32 %v2440, %v2588
      %2590 = vmatmul.f32.gmra.mxu0 %v2416
      %v2591 = vpop.f32.mrf.mxu0
      %v2592 = vadd.f32 %v2440, %v2591
      %2593 = vmatmul.f32.gmra.mxu0 %v2417
      %v2594 = vpop.f32.mrf.mxu0
      %v2595 = vadd.f32 %v2440, %v2594
      %2596 = vmatmul.f32.gmra.mxu0 %v2418
      %v2597 = vpop.f32.mrf.mxu0
      %v2598 = vadd.f32 %v2440, %v2597
      %2599 = vmatmul.f32.gmra.mxu0 %v2419
      %v2600 = vpop.f32.mrf.mxu0
      %v2601 = vadd.f32 %v2440, %v2600
      %2602 = vdwg.mxu0
      %v2603 = vmax.f32 %v2460, 0.0
      %v2604 = vmax.f32 %v2463, 0.0
      %v2605 = vmax.f32 %v2466, 0.0
      %v2606 = vmax.f32 %v2469, 0.0
      %v2607 = vmax.f32 %v2472, 0.0
      %v2608 = vmax.f32 %v2475, 0.0
      %v2609 = vmax.f32 %v2478, 0.0
      %v2610 = vmax.f32 %v2481, 0.0
      %v2611 = vmax.f32 %v2484, 0.0
      %v2612 = vmax.f32 %v2487, 0.0
      %v2613 = vmax.f32 %v2490, 0.0
      %v2614 = vmax.f32 %v2493, 0.0
      %v2615 = vmax.f32 %v2496, 0.0
      %v2616 = vmax.f32 %v2499, 0.0
      %v2617 = vmax.f32 %v2502, 0.0
      %v2618 = vmax.f32 %v2505, 0.0
      %v2619 = vmax.f32 %v2508, 0.0
      %v2620 = vmax.f32 %v2511, 0.0
      %v2621 = vmax.f32 %v2514, 0.0
      %v2622 = vmax.f32 %v2517, 0.0
      %v2623 = vmax.f32 %v2520, 0.0
      %v2624 = vmax.f32 %v2523, 0.0
      %v2625 = vmax.f32 %v2526, 0.0
      %v2626 = vmax.f32 %v2529, 0.0
      %v2627 = vmax.f32 %v2532, 0.0
      %v2628 = vmax.f32 %v2535, 0.0
      %v2629 = vmax.f32 %v2538, 0.0
      %v2630 = vmax.f32 %v2541, 0.0
      %v2631 = vmax.f32 %v2544, 0.0
      %v2632 = vmax.f32 %v2547, 0.0
      %v2633 = vmax.f32 %v2550, 0.0
      %v2634 = vmax.f32 %v2553, 0.0
      %v2635 = vmax.f32 %v2556, 0.0
      %v2636 = vmax.f32 %v2559, 0.0
      %v2637 = vmax.f32 %v2562, 0.0
      %v2638 = vmax.f32 %v2565, 0.0
      %v2639 = vmax.f32 %v2568, 0.0
      %v2640 = vmax.f32 %v2571, 0.0
      %v2641 = vmax.f32 %v2574, 0.0
      %v2642 = vmax.f32 %v2577, 0.0
      %v2643 = vmax.f32 %v2580, 0.0
      %v2644 = vmax.f32 %v2583, 0.0
      %v2645 = vmax.f32 %v2586, 0.0
      %v2646 = vmax.f32 %v2589, 0.0
      %v2647 = vmax.f32 %v2592, 0.0
      %v2648 = vmax.f32 %v2595, 0.0
      %v2649 = vmax.f32 %v2598, 0.0
      %v2650 = vmax.f32 %v2601, 0.0
      %s2651 = scalar_lea.vmem %s5, 256
      %v2652 = vld [vmem:[%s2651] sm:$0xff]
      %v2653 = vld [vmem:[%s2651 + $0x8] sm:$0xff]
      %v2654 = vld [vmem:[%s2651 + $0x10] sm:$0xff]
      %v2655 = vld [vmem:[%s2651 + $0x18] sm:$0xff]
      %v2656 = vld [vmem:[%s2651 + $0x20] sm:$0xff]
      %v2657 = vld [vmem:[%s2651 + $0x28] sm:$0xff]
      %v2658 = vld [vmem:[%s2651 + $0x30] sm:$0xff]
      %v2659 = vld [vmem:[%s2651 + $0x38] sm:$0xff]
      %v2660 = vld [vmem:[%s2651 + $0x40] sm:$0xff]
      %v2661 = vld [vmem:[%s2651 + $0x48] sm:$0xff]
      %v2662 = vld [vmem:[%s2651 + $0x50] sm:$0xff]
      %v2663 = vld [vmem:[%s2651 + $0x58] sm:$0xff]
      %v2664 = vld [vmem:[%s2651 + $0x60] sm:$0xff]
      %v2665 = vld [vmem:[%s2651 + $0x68] sm:$0xff]
      %v2666 = vld [vmem:[%s2651 + $0x70] sm:$0xff]
      %v2667 = vld [vmem:[%s2651 + $0x78] sm:$0xff]
      %s2668 = scalar_lea.vmem %s6, 2
      %v2669 = vld [vmem:[%s2668] sm:$0x1]
      %v2671 = vperm.slane %v2669, 0
      %2673 = vmatpush.msra.mxu0 %v2667
      %2674 = vmatpush.msra.mxu0 %v2666
      %2675 = vmatpush.msra.mxu0 %v2665
      %2676 = vmatpush.msra.mxu0 %v2664
      %2677 = vmatpush.msra.mxu0 %v2663
      %2678 = vmatpush.msra.mxu0 %v2662
      %2679 = vmatpush.msra.mxu0 %v2661
      %2680 = vmatpush.msra.mxu0 %v2660
      %2681 = vmatpush.msra.mxu0 %v2659
      %2682 = vmatpush.msra.mxu0 %v2658
      %2683 = vmatpush.msra.mxu0 %v2657
      %2684 = vmatpush.msra.mxu0 %v2656
      %2685 = vmatpush.msra.mxu0 %v2655
      %2686 = vmatpush.msra.mxu0 %v2654
      %2687 = vmatpush.msra.mxu0 %v2653
      %2688 = vmatpush.msra.mxu0 %v2652
      %2689 = vmatmul.f32.gmra.mxu0 %v2603
      %v2690 = vpop.f32.mrf.mxu0
      %v2691 = vadd.f32 %v2671, %v2690
      %2692 = vmatmul.f32.gmra.mxu0 %v2604
      %v2693 = vpop.f32.mrf.mxu0
      %v2694 = vadd.f32 %v2671, %v2693
      %2695 = vmatmul.f32.gmra.mxu0 %v2605
      %v2696 = vpop.f32.mrf.mxu0
      %v2697 = vadd.f32 %v2671, %v2696
      %2698 = vmatmul.f32.gmra.mxu0 %v2606
      %v2699 = vpop.f32.mrf.mxu0
      %v2700 = vadd.f32 %v2671, %v2699
      %2701 = vmatmul.f32.gmra.mxu0 %v2607
      %v2702 = vpop.f32.mrf.mxu0
      %v2703 = vadd.f32 %v2671, %v2702
      %2704 = vmatmul.f32.gmra.mxu0 %v2608
      %v2705 = vpop.f32.mrf.mxu0
      %v2706 = vadd.f32 %v2671, %v2705
      %2707 = vmatmul.f32.gmra.mxu0 %v2609
      %v2708 = vpop.f32.mrf.mxu0
      %v2709 = vadd.f32 %v2671, %v2708
      %2710 = vmatmul.f32.gmra.mxu0 %v2610
      %v2711 = vpop.f32.mrf.mxu0
      %v2712 = vadd.f32 %v2671, %v2711
      %2713 = vmatmul.f32.gmra.mxu0 %v2611
      %v2714 = vpop.f32.mrf.mxu0
      %v2715 = vadd.f32 %v2671, %v2714
      %2716 = vmatmul.f32.gmra.mxu0 %v2612
      %v2717 = vpop.f32.mrf.mxu0
      %v2718 = vadd.f32 %v2671, %v2717
      %2719 = vmatmul.f32.gmra.mxu0 %v2613
      %v2720 = vpop.f32.mrf.mxu0
      %v2721 = vadd.f32 %v2671, %v2720
      %2722 = vmatmul.f32.gmra.mxu0 %v2614
      %v2723 = vpop.f32.mrf.mxu0
      %v2724 = vadd.f32 %v2671, %v2723
      %2725 = vmatmul.f32.gmra.mxu0 %v2615
      %v2726 = vpop.f32.mrf.mxu0
      %v2727 = vadd.f32 %v2671, %v2726
      %2728 = vmatmul.f32.gmra.mxu0 %v2616
      %v2729 = vpop.f32.mrf.mxu0
      %v2730 = vadd.f32 %v2671, %v2729
      %2731 = vmatmul.f32.gmra.mxu0 %v2617
      %v2732 = vpop.f32.mrf.mxu0
      %v2733 = vadd.f32 %v2671, %v2732
      %2734 = vmatmul.f32.gmra.mxu0 %v2618
      %v2735 = vpop.f32.mrf.mxu0
      %v2736 = vadd.f32 %v2671, %v2735
      %2737 = vmatmul.f32.gmra.mxu0 %v2619
      %v2738 = vpop.f32.mrf.mxu0
      %v2739 = vadd.f32 %v2671, %v2738
      %2740 = vmatmul.f32.gmra.mxu0 %v2620
      %v2741 = vpop.f32.mrf.mxu0
      %v2742 = vadd.f32 %v2671, %v2741
      %2743 = vmatmul.f32.gmra.mxu0 %v2621
      %v2744 = vpop.f32.mrf.mxu0
      %v2745 = vadd.f32 %v2671, %v2744
      %2746 = vmatmul.f32.gmra.mxu0 %v2622
      %v2747 = vpop.f32.mrf.mxu0
      %v2748 = vadd.f32 %v2671, %v2747
      %2749 = vmatmul.f32.gmra.mxu0 %v2623
      %v2750 = vpop.f32.mrf.mxu0
      %v2751 = vadd.f32 %v2671, %v2750
      %2752 = vmatmul.f32.gmra.mxu0 %v2624
      %v2753 = vpop.f32.mrf.mxu0
      %v2754 = vadd.f32 %v2671, %v2753
      %2755 = vmatmul.f32.gmra.mxu0 %v2625
      %v2756 = vpop.f32.mrf.mxu0
      %v2757 = vadd.f32 %v2671, %v2756
      %2758 = vmatmul.f32.gmra.mxu0 %v2626
      %v2759 = vpop.f32.mrf.mxu0
      %v2760 = vadd.f32 %v2671, %v2759
      %2761 = vmatmul.f32.gmra.mxu0 %v2627
      %v2762 = vpop.f32.mrf.mxu0
      %v2763 = vadd.f32 %v2671, %v2762
      %2764 = vmatmul.f32.gmra.mxu0 %v2628
      %v2765 = vpop.f32.mrf.mxu0
      %v2766 = vadd.f32 %v2671, %v2765
      %2767 = vmatmul.f32.gmra.mxu0 %v2629
      %v2768 = vpop.f32.mrf.mxu0
      %v2769 = vadd.f32 %v2671, %v2768
      %2770 = vmatmul.f32.gmra.mxu0 %v2630
      %v2771 = vpop.f32.mrf.mxu0
      %v2772 = vadd.f32 %v2671, %v2771
      %2773 = vmatmul.f32.gmra.mxu0 %v2631
      %v2774 = vpop.f32.mrf.mxu0
      %v2775 = vadd.f32 %v2671, %v2774
      %2776 = vmatmul.f32.gmra.mxu0 %v2632
      %v2777 = vpop.f32.mrf.mxu0
      %v2778 = vadd.f32 %v2671, %v2777
      %2779 = vmatmul.f32.gmra.mxu0 %v2633
      %v2780 = vpop.f32.mrf.mxu0
      %v2781 = vadd.f32 %v2671, %v2780
      %2782 = vmatmul.f32.gmra.mxu0 %v2634
      %v2783 = vpop.f32.mrf.mxu0
      %v2784 = vadd.f32 %v2671, %v2783
      %2785 = vmatmul.f32.gmra.mxu0 %v2635
      %v2786 = vpop.f32.mrf.mxu0
      %v2787 = vadd.f32 %v2671, %v2786
      %2788 = vmatmul.f32.gmra.mxu0 %v2636
      %v2789 = vpop.f32.mrf.mxu0
      %v2790 = vadd.f32 %v2671, %v2789
      %2791 = vmatmul.f32.gmra.mxu0 %v2637
      %v2792 = vpop.f32.mrf.mxu0
      %v2793 = vadd.f32 %v2671, %v2792
      %2794 = vmatmul.f32.gmra.mxu0 %v2638
      %v2795 = vpop.f32.mrf.mxu0
      %v2796 = vadd.f32 %v2671, %v2795
      %2797 = vmatmul.f32.gmra.mxu0 %v2639
      %v2798 = vpop.f32.mrf.mxu0
      %v2799 = vadd.f32 %v2671, %v2798
      %2800 = vmatmul.f32.gmra.mxu0 %v2640
      %v2801 = vpop.f32.mrf.mxu0
      %v2802 = vadd.f32 %v2671, %v2801
      %2803 = vmatmul.f32.gmra.mxu0 %v2641
      %v2804 = vpop.f32.mrf.mxu0
      %v2805 = vadd.f32 %v2671, %v2804
      %2806 = vmatmul.f32.gmra.mxu0 %v2642
      %v2807 = vpop.f32.mrf.mxu0
      %v2808 = vadd.f32 %v2671, %v2807
      %2809 = vmatmul.f32.gmra.mxu0 %v2643
      %v2810 = vpop.f32.mrf.mxu0
      %v2811 = vadd.f32 %v2671, %v2810
      %2812 = vmatmul.f32.gmra.mxu0 %v2644
      %v2813 = vpop.f32.mrf.mxu0
      %v2814 = vadd.f32 %v2671, %v2813
      %2815 = vmatmul.f32.gmra.mxu0 %v2645
      %v2816 = vpop.f32.mrf.mxu0
      %v2817 = vadd.f32 %v2671, %v2816
      %2818 = vmatmul.f32.gmra.mxu0 %v2646
      %v2819 = vpop.f32.mrf.mxu0
      %v2820 = vadd.f32 %v2671, %v2819
      %2821 = vmatmul.f32.gmra.mxu0 %v2647
      %v2822 = vpop.f32.mrf.mxu0
      %v2823 = vadd.f32 %v2671, %v2822
      %2824 = vmatmul.f32.gmra.mxu0 %v2648
      %v2825 = vpop.f32.mrf.mxu0
      %v2826 = vadd.f32 %v2671, %v2825
      %2827 = vmatmul.f32.gmra.mxu0 %v2649
      %v2828 = vpop.f32.mrf.mxu0
      %v2829 = vadd.f32 %v2671, %v2828
      %2830 = vmatmul.f32.gmra.mxu0 %v2650
      %v2831 = vpop.f32.mrf.mxu0
      %v2832 = vadd.f32 %v2671, %v2831
      %2833 = vdwg.mxu0
      %v2834 = vadd.f32 %v2324, %v2691
      %v2835 = vadd.f32 %v2325, %v2694
      %v2836 = vadd.f32 %v2326, %v2697
      %v2837 = vadd.f32 %v2327, %v2700
      %v2838 = vadd.f32 %v2328, %v2703
      %v2839 = vadd.f32 %v2329, %v2706
      %v2840 = vadd.f32 %v2330, %v2709
      %v2841 = vadd.f32 %v2331, %v2712
      %v2842 = vadd.f32 %v2332, %v2715
      %v2843 = vadd.f32 %v2333, %v2718
      %v2844 = vadd.f32 %v2334, %v2721
      %v2845 = vadd.f32 %v2335, %v2724
      %v2846 = vadd.f32 %v2336, %v2727
      %v2847 = vadd.f32 %v2337, %v2730
      %v2848 = vadd.f32 %v2338, %v2733
      %v2849 = vadd.f32 %v2339, %v2736
      %v2850 = vadd.f32 %v2340, %v2739
      %v2851 = vadd.f32 %v2341, %v2742
      %v2852 = vadd.f32 %v2342, %v2745
      %v2853 = vadd.f32 %v2343, %v2748
      %v2854 = vadd.f32 %v2344, %v2751
      %v2855 = vadd.f32 %v2345, %v2754
      %v2856 = vadd.f32 %v2346, %v2757
      %v2857 = vadd.f32 %v2347, %v2760
      %v2858 = vadd.f32 %v2348, %v2763
      %v2859 = vadd.f32 %v2349, %v2766
      %v2860 = vadd.f32 %v2350, %v2769
      %v2861 = vadd.f32 %v2351, %v2772
      %v2862 = vadd.f32 %v2352, %v2775
      %v2863 = vadd.f32 %v2353, %v2778
      %v2864 = vadd.f32 %v2354, %v2781
      %v2865 = vadd.f32 %v2355, %v2784
      %v2866 = vadd.f32 %v2356, %v2787
      %v2867 = vadd.f32 %v2357, %v2790
      %v2868 = vadd.f32 %v2358, %v2793
      %v2869 = vadd.f32 %v2359, %v2796
      %v2870 = vadd.f32 %v2360, %v2799
      %v2871 = vadd.f32 %v2361, %v2802
      %v2872 = vadd.f32 %v2362, %v2805
      %v2873 = vadd.f32 %v2363, %v2808
      %v2874 = vadd.f32 %v2364, %v2811
      %v2875 = vadd.f32 %v2365, %v2814
      %v2876 = vadd.f32 %v2366, %v2817
      %v2877 = vadd.f32 %v2367, %v2820
      %v2878 = vadd.f32 %v2368, %v2823
      %v2879 = vadd.f32 %v2369, %v2826
      %v2880 = vadd.f32 %v2370, %v2829
      %v2881 = vadd.f32 %v2371, %v2832
      %v2882 = vmax.f32 %v2834, 0.0
      %v2883 = vmax.f32 %v2835, 0.0
      %v2884 = vmax.f32 %v2836, 0.0
      %v2885 = vmax.f32 %v2837, 0.0
      %v2886 = vmax.f32 %v2838, 0.0
      %v2887 = vmax.f32 %v2839, 0.0
      %v2888 = vmax.f32 %v2840, 0.0
      %v2889 = vmax.f32 %v2841, 0.0
      %v2890 = vmax.f32 %v2842, 0.0
      %v2891 = vmax.f32 %v2843, 0.0
      %v2892 = vmax.f32 %v2844, 0.0
      %v2893 = vmax.f32 %v2845, 0.0
      %v2894 = vmax.f32 %v2846, 0.0
      %v2895 = vmax.f32 %v2847, 0.0
      %v2896 = vmax.f32 %v2848, 0.0
      %v2897 = vmax.f32 %v2849, 0.0
      %v2898 = vmax.f32 %v2850, 0.0
      %v2899 = vmax.f32 %v2851, 0.0
      %v2900 = vmax.f32 %v2852, 0.0
      %v2901 = vmax.f32 %v2853, 0.0
      %v2902 = vmax.f32 %v2854, 0.0
      %v2903 = vmax.f32 %v2855, 0.0
      %v2904 = vmax.f32 %v2856, 0.0
      %v2905 = vmax.f32 %v2857, 0.0
      %v2906 = vmax.f32 %v2858, 0.0
      %v2907 = vmax.f32 %v2859, 0.0
      %v2908 = vmax.f32 %v2860, 0.0
      %v2909 = vmax.f32 %v2861, 0.0
      %v2910 = vmax.f32 %v2862, 0.0
      %v2911 = vmax.f32 %v2863, 0.0
      %v2912 = vmax.f32 %v2864, 0.0
      %v2913 = vmax.f32 %v2865, 0.0
      %v2914 = vmax.f32 %v2866, 0.0
      %v2915 = vmax.f32 %v2867, 0.0
      %v2916 = vmax.f32 %v2868, 0.0
      %v2917 = vmax.f32 %v2869, 0.0
      %v2918 = vmax.f32 %v2870, 0.0
      %v2919 = vmax.f32 %v2871, 0.0
      %v2920 = vmax.f32 %v2872, 0.0
      %v2921 = vmax.f32 %v2873, 0.0
      %v2922 = vmax.f32 %v2874, 0.0
      %v2923 = vmax.f32 %v2875, 0.0
      %v2924 = vmax.f32 %v2876, 0.0
      %v2925 = vmax.f32 %v2877, 0.0
      %v2926 = vmax.f32 %v2878, 0.0
      %v2927 = vmax.f32 %v2879, 0.0
      %v2928 = vmax.f32 %v2880, 0.0
      %v2929 = vmax.f32 %v2881, 0.0
      %s2930 = scalar_lea.vmem %s3, 384
      %v2931 = vld [vmem:[%s2930] sm:$0xff]
      %v2932 = vld [vmem:[%s2930 + $0x8] sm:$0xff]
      %v2933 = vld [vmem:[%s2930 + $0x10] sm:$0xff]
      %v2934 = vld [vmem:[%s2930 + $0x18] sm:$0xff]
      %v2935 = vld [vmem:[%s2930 + $0x20] sm:$0xff]
      %v2936 = vld [vmem:[%s2930 + $0x28] sm:$0xff]
      %v2937 = vld [vmem:[%s2930 + $0x30] sm:$0xff]
      %v2938 = vld [vmem:[%s2930 + $0x38] sm:$0xff]
      %v2939 = vld [vmem:[%s2930 + $0x40] sm:$0xff]
      %v2940 = vld [vmem:[%s2930 + $0x48] sm:$0xff]
      %v2941 = vld [vmem:[%s2930 + $0x50] sm:$0xff]
      %v2942 = vld [vmem:[%s2930 + $0x58] sm:$0xff]
      %v2943 = vld [vmem:[%s2930 + $0x60] sm:$0xff]
      %v2944 = vld [vmem:[%s2930 + $0x68] sm:$0xff]
      %v2945 = vld [vmem:[%s2930 + $0x70] sm:$0xff]
      %v2946 = vld [vmem:[%s2930 + $0x78] sm:$0xff]
      %s2947 = scalar_lea.vmem %s4, 3
      %v2948 = vld [vmem:[%s2947] sm:$0x1]
      %v2950 = vperm.slane %v2948, 0
      %2952 = vmatpush.msra.mxu0 %v2946
      %2953 = vmatpush.msra.mxu0 %v2945
      %2954 = vmatpush.msra.mxu0 %v2944
      %2955 = vmatpush.msra.mxu0 %v2943
      %2956 = vmatpush.msra.mxu0 %v2942
      %2957 = vmatpush.msra.mxu0 %v2941
      %2958 = vmatpush.msra.mxu0 %v2940
      %2959 = vmatpush.msra.mxu0 %v2939
      %2960 = vmatpush.msra.mxu0 %v2938
      %2961 = vmatpush.msra.mxu0 %v2937
      %2962 = vmatpush.msra.mxu0 %v2936
      %2963 = vmatpush.msra.mxu0 %v2935
      %2964 = vmatpush.msra.mxu0 %v2934
      %2965 = vmatpush.msra.mxu0 %v2933
      %2966 = vmatpush.msra.mxu0 %v2932
      %2967 = vmatpush.msra.mxu0 %v2931
      %2968 = vmatmul.f32.gmra.mxu0 %v2882
      %v2969 = vpop.f32.mrf.mxu0
      %v2970 = vadd.f32 %v2950, %v2969
      %2971 = vmatmul.f32.gmra.mxu0 %v2883
      %v2972 = vpop.f32.mrf.mxu0
      %v2973 = vadd.f32 %v2950, %v2972
      %2974 = vmatmul.f32.gmra.mxu0 %v2884
      %v2975 = vpop.f32.mrf.mxu0
      %v2976 = vadd.f32 %v2950, %v2975
      %2977 = vmatmul.f32.gmra.mxu0 %v2885
      %v2978 = vpop.f32.mrf.mxu0
      %v2979 = vadd.f32 %v2950, %v2978
      %2980 = vmatmul.f32.gmra.mxu0 %v2886
      %v2981 = vpop.f32.mrf.mxu0
      %v2982 = vadd.f32 %v2950, %v2981
      %2983 = vmatmul.f32.gmra.mxu0 %v2887
      %v2984 = vpop.f32.mrf.mxu0
      %v2985 = vadd.f32 %v2950, %v2984
      %2986 = vmatmul.f32.gmra.mxu0 %v2888
      %v2987 = vpop.f32.mrf.mxu0
      %v2988 = vadd.f32 %v2950, %v2987
      %2989 = vmatmul.f32.gmra.mxu0 %v2889
      %v2990 = vpop.f32.mrf.mxu0
      %v2991 = vadd.f32 %v2950, %v2990
      %2992 = vmatmul.f32.gmra.mxu0 %v2890
      %v2993 = vpop.f32.mrf.mxu0
      %v2994 = vadd.f32 %v2950, %v2993
      %2995 = vmatmul.f32.gmra.mxu0 %v2891
      %v2996 = vpop.f32.mrf.mxu0
      %v2997 = vadd.f32 %v2950, %v2996
      %2998 = vmatmul.f32.gmra.mxu0 %v2892
      %v2999 = vpop.f32.mrf.mxu0
      %v3000 = vadd.f32 %v2950, %v2999
      %3001 = vmatmul.f32.gmra.mxu0 %v2893
      %v3002 = vpop.f32.mrf.mxu0
      %v3003 = vadd.f32 %v2950, %v3002
      %3004 = vmatmul.f32.gmra.mxu0 %v2894
      %v3005 = vpop.f32.mrf.mxu0
      %v3006 = vadd.f32 %v2950, %v3005
      %3007 = vmatmul.f32.gmra.mxu0 %v2895
      %v3008 = vpop.f32.mrf.mxu0
      %v3009 = vadd.f32 %v2950, %v3008
      %3010 = vmatmul.f32.gmra.mxu0 %v2896
      %v3011 = vpop.f32.mrf.mxu0
      %v3012 = vadd.f32 %v2950, %v3011
      %3013 = vmatmul.f32.gmra.mxu0 %v2897
      %v3014 = vpop.f32.mrf.mxu0
      %v3015 = vadd.f32 %v2950, %v3014
      %3016 = vmatmul.f32.gmra.mxu0 %v2898
      %v3017 = vpop.f32.mrf.mxu0
      %v3018 = vadd.f32 %v2950, %v3017
      %3019 = vmatmul.f32.gmra.mxu0 %v2899
      %v3020 = vpop.f32.mrf.mxu0
      %v3021 = vadd.f32 %v2950, %v3020
      %3022 = vmatmul.f32.gmra.mxu0 %v2900
      %v3023 = vpop.f32.mrf.mxu0
      %v3024 = vadd.f32 %v2950, %v3023
      %3025 = vmatmul.f32.gmra.mxu0 %v2901
      %v3026 = vpop.f32.mrf.mxu0
      %v3027 = vadd.f32 %v2950, %v3026
      %3028 = vmatmul.f32.gmra.mxu0 %v2902
      %v3029 = vpop.f32.mrf.mxu0
      %v3030 = vadd.f32 %v2950, %v3029
      %3031 = vmatmul.f32.gmra.mxu0 %v2903
      %v3032 = vpop.f32.mrf.mxu0
      %v3033 = vadd.f32 %v2950, %v3032
      %3034 = vmatmul.f32.gmra.mxu0 %v2904
      %v3035 = vpop.f32.mrf.mxu0
      %v3036 = vadd.f32 %v2950, %v3035
      %3037 = vmatmul.f32.gmra.mxu0 %v2905
      %v3038 = vpop.f32.mrf.mxu0
      %v3039 = vadd.f32 %v2950, %v3038
      %3040 = vmatmul.f32.gmra.mxu0 %v2906
      %v3041 = vpop.f32.mrf.mxu0
      %v3042 = vadd.f32 %v2950, %v3041
      %3043 = vmatmul.f32.gmra.mxu0 %v2907
      %v3044 = vpop.f32.mrf.mxu0
      %v3045 = vadd.f32 %v2950, %v3044
      %3046 = vmatmul.f32.gmra.mxu0 %v2908
      %v3047 = vpop.f32.mrf.mxu0
      %v3048 = vadd.f32 %v2950, %v3047
      %3049 = vmatmul.f32.gmra.mxu0 %v2909
      %v3050 = vpop.f32.mrf.mxu0
      %v3051 = vadd.f32 %v2950, %v3050
      %3052 = vmatmul.f32.gmra.mxu0 %v2910
      %v3053 = vpop.f32.mrf.mxu0
      %v3054 = vadd.f32 %v2950, %v3053
      %3055 = vmatmul.f32.gmra.mxu0 %v2911
      %v3056 = vpop.f32.mrf.mxu0
      %v3057 = vadd.f32 %v2950, %v3056
      %3058 = vmatmul.f32.gmra.mxu0 %v2912
      %v3059 = vpop.f32.mrf.mxu0
      %v3060 = vadd.f32 %v2950, %v3059
      %3061 = vmatmul.f32.gmra.mxu0 %v2913
      %v3062 = vpop.f32.mrf.mxu0
      %v3063 = vadd.f32 %v2950, %v3062
      %3064 = vmatmul.f32.gmra.mxu0 %v2914
      %v3065 = vpop.f32.mrf.mxu0
      %v3066 = vadd.f32 %v2950, %v3065
      %3067 = vmatmul.f32.gmra.mxu0 %v2915
      %v3068 = vpop.f32.mrf.mxu0
      %v3069 = vadd.f32 %v2950, %v3068
      %3070 = vmatmul.f32.gmra.mxu0 %v2916
      %v3071 = vpop.f32.mrf.mxu0
      %v3072 = vadd.f32 %v2950, %v3071
      %3073 = vmatmul.f32.gmra.mxu0 %v2917
      %v3074 = vpop.f32.mrf.mxu0
      %v3075 = vadd.f32 %v2950, %v3074
      %3076 = vmatmul.f32.gmra.mxu0 %v2918
      %v3077 = vpop.f32.mrf.mxu0
      %v3078 = vadd.f32 %v2950, %v3077
      %3079 = vmatmul.f32.gmra.mxu0 %v2919
      %v3080 = vpop.f32.mrf.mxu0
      %v3081 = vadd.f32 %v2950, %v3080
      %3082 = vmatmul.f32.gmra.mxu0 %v2920
      %v3083 = vpop.f32.mrf.mxu0
      %v3084 = vadd.f32 %v2950, %v3083
      %3085 = vmatmul.f32.gmra.mxu0 %v2921
      %v3086 = vpop.f32.mrf.mxu0
      %v3087 = vadd.f32 %v2950, %v3086
      %3088 = vmatmul.f32.gmra.mxu0 %v2922
      %v3089 = vpop.f32.mrf.mxu0
      %v3090 = vadd.f32 %v2950, %v3089
      %3091 = vmatmul.f32.gmra.mxu0 %v2923
      %v3092 = vpop.f32.mrf.mxu0
      %v3093 = vadd.f32 %v2950, %v3092
      %3094 = vmatmul.f32.gmra.mxu0 %v2924
      %v3095 = vpop.f32.mrf.mxu0
      %v3096 = vadd.f32 %v2950, %v3095
      %3097 = vmatmul.f32.gmra.mxu0 %v2925
      %v3098 = vpop.f32.mrf.mxu0
      %v3099 = vadd.f32 %v2950, %v3098
      %3100 = vmatmul.f32.gmra.mxu0 %v2926
      %v3101 = vpop.f32.mrf.mxu0
      %v3102 = vadd.f32 %v2950, %v3101
      %3103 = vmatmul.f32.gmra.mxu0 %v2927
      %v3104 = vpop.f32.mrf.mxu0
      %v3105 = vadd.f32 %v2950, %v3104
      %3106 = vmatmul.f32.gmra.mxu0 %v2928
      %v3107 = vpop.f32.mrf.mxu0
      %v3108 = vadd.f32 %v2950, %v3107
      %3109 = vmatmul.f32.gmra.mxu0 %v2929
      %v3110 = vpop.f32.mrf.mxu0
      %v3111 = vadd.f32 %v2950, %v3110
      %3112 = vdwg.mxu0
      %v3113 = vmax.f32 %v2970, 0.0
      %v3114 = vmax.f32 %v2973, 0.0
      %v3115 = vmax.f32 %v2976, 0.0
      %v3116 = vmax.f32 %v2979, 0.0
      %v3117 = vmax.f32 %v2982, 0.0
      %v3118 = vmax.f32 %v2985, 0.0
      %v3119 = vmax.f32 %v2988, 0.0
      %v3120 = vmax.f32 %v2991, 0.0
      %v3121 = vmax.f32 %v2994, 0.0
      %v3122 = vmax.f32 %v2997, 0.0
      %v3123 = vmax.f32 %v3000, 0.0
      %v3124 = vmax.f32 %v3003, 0.0
      %v3125 = vmax.f32 %v3006, 0.0
      %v3126 = vmax.f32 %v3009, 0.0
      %v3127 = vmax.f32 %v3012, 0.0
      %v3128 = vmax.f32 %v3015, 0.0
      %v3129 = vmax.f32 %v3018, 0.0
      %v3130 = vmax.f32 %v3021, 0.0
      %v3131 = vmax.f32 %v3024, 0.0
      %v3132 = vmax.f32 %v3027, 0.0
      %v3133 = vmax.f32 %v3030, 0.0
      %v3134 = vmax.f32 %v3033, 0.0
      %v3135 = vmax.f32 %v3036, 0.0
      %v3136 = vmax.f32 %v3039, 0.0
      %v3137 = vmax.f32 %v3042, 0.0
      %v3138 = vmax.f32 %v3045, 0.0
      %v3139 = vmax.f32 %v3048, 0.0
      %v3140 = vmax.f32 %v3051, 0.0
      %v3141 = vmax.f32 %v3054, 0.0
      %v3142 = vmax.f32 %v3057, 0.0
      %v3143 = vmax.f32 %v3060, 0.0
      %v3144 = vmax.f32 %v3063, 0.0
      %v3145 = vmax.f32 %v3066, 0.0
      %v3146 = vmax.f32 %v3069, 0.0
      %v3147 = vmax.f32 %v3072, 0.0
      %v3148 = vmax.f32 %v3075, 0.0
      %v3149 = vmax.f32 %v3078, 0.0
      %v3150 = vmax.f32 %v3081, 0.0
      %v3151 = vmax.f32 %v3084, 0.0
      %v3152 = vmax.f32 %v3087, 0.0
      %v3153 = vmax.f32 %v3090, 0.0
      %v3154 = vmax.f32 %v3093, 0.0
      %v3155 = vmax.f32 %v3096, 0.0
      %v3156 = vmax.f32 %v3099, 0.0
      %v3157 = vmax.f32 %v3102, 0.0
      %v3158 = vmax.f32 %v3105, 0.0
      %v3159 = vmax.f32 %v3108, 0.0
      %v3160 = vmax.f32 %v3111, 0.0
      %s3161 = scalar_lea.vmem %s5, 384
      %v3162 = vld [vmem:[%s3161] sm:$0xff]
      %v3163 = vld [vmem:[%s3161 + $0x8] sm:$0xff]
      %v3164 = vld [vmem:[%s3161 + $0x10] sm:$0xff]
      %v3165 = vld [vmem:[%s3161 + $0x18] sm:$0xff]
      %v3166 = vld [vmem:[%s3161 + $0x20] sm:$0xff]
      %v3167 = vld [vmem:[%s3161 + $0x28] sm:$0xff]
      %v3168 = vld [vmem:[%s3161 + $0x30] sm:$0xff]
      %v3169 = vld [vmem:[%s3161 + $0x38] sm:$0xff]
      %v3170 = vld [vmem:[%s3161 + $0x40] sm:$0xff]
      %v3171 = vld [vmem:[%s3161 + $0x48] sm:$0xff]
      %v3172 = vld [vmem:[%s3161 + $0x50] sm:$0xff]
      %v3173 = vld [vmem:[%s3161 + $0x58] sm:$0xff]
      %v3174 = vld [vmem:[%s3161 + $0x60] sm:$0xff]
      %v3175 = vld [vmem:[%s3161 + $0x68] sm:$0xff]
      %v3176 = vld [vmem:[%s3161 + $0x70] sm:$0xff]
      %v3177 = vld [vmem:[%s3161 + $0x78] sm:$0xff]
      %s3178 = scalar_lea.vmem %s6, 3
      %v3179 = vld [vmem:[%s3178] sm:$0x1]
      %v3181 = vperm.slane %v3179, 0
      %3183 = vmatpush.msra.mxu0 %v3177
      %3184 = vmatpush.msra.mxu0 %v3176
      %3185 = vmatpush.msra.mxu0 %v3175
      %3186 = vmatpush.msra.mxu0 %v3174
      %3187 = vmatpush.msra.mxu0 %v3173
      %3188 = vmatpush.msra.mxu0 %v3172
      %3189 = vmatpush.msra.mxu0 %v3171
      %3190 = vmatpush.msra.mxu0 %v3170
      %3191 = vmatpush.msra.mxu0 %v3169
      %3192 = vmatpush.msra.mxu0 %v3168
      %3193 = vmatpush.msra.mxu0 %v3167
      %3194 = vmatpush.msra.mxu0 %v3166
      %3195 = vmatpush.msra.mxu0 %v3165
      %3196 = vmatpush.msra.mxu0 %v3164
      %3197 = vmatpush.msra.mxu0 %v3163
      %3198 = vmatpush.msra.mxu0 %v3162
      %3199 = vmatmul.f32.gmra.mxu0 %v3113
      %v3200 = vpop.f32.mrf.mxu0
      %v3201 = vadd.f32 %v3181, %v3200
      %3202 = vmatmul.f32.gmra.mxu0 %v3114
      %v3203 = vpop.f32.mrf.mxu0
      %v3204 = vadd.f32 %v3181, %v3203
      %3205 = vmatmul.f32.gmra.mxu0 %v3115
      %v3206 = vpop.f32.mrf.mxu0
      %v3207 = vadd.f32 %v3181, %v3206
      %3208 = vmatmul.f32.gmra.mxu0 %v3116
      %v3209 = vpop.f32.mrf.mxu0
      %v3210 = vadd.f32 %v3181, %v3209
      %3211 = vmatmul.f32.gmra.mxu0 %v3117
      %v3212 = vpop.f32.mrf.mxu0
      %v3213 = vadd.f32 %v3181, %v3212
      %3214 = vmatmul.f32.gmra.mxu0 %v3118
      %v3215 = vpop.f32.mrf.mxu0
      %v3216 = vadd.f32 %v3181, %v3215
      %3217 = vmatmul.f32.gmra.mxu0 %v3119
      %v3218 = vpop.f32.mrf.mxu0
      %v3219 = vadd.f32 %v3181, %v3218
      %3220 = vmatmul.f32.gmra.mxu0 %v3120
      %v3221 = vpop.f32.mrf.mxu0
      %v3222 = vadd.f32 %v3181, %v3221
      %3223 = vmatmul.f32.gmra.mxu0 %v3121
      %v3224 = vpop.f32.mrf.mxu0
      %v3225 = vadd.f32 %v3181, %v3224
      %3226 = vmatmul.f32.gmra.mxu0 %v3122
      %v3227 = vpop.f32.mrf.mxu0
      %v3228 = vadd.f32 %v3181, %v3227
      %3229 = vmatmul.f32.gmra.mxu0 %v3123
      %v3230 = vpop.f32.mrf.mxu0
      %v3231 = vadd.f32 %v3181, %v3230
      %3232 = vmatmul.f32.gmra.mxu0 %v3124
      %v3233 = vpop.f32.mrf.mxu0
      %v3234 = vadd.f32 %v3181, %v3233
      %3235 = vmatmul.f32.gmra.mxu0 %v3125
      %v3236 = vpop.f32.mrf.mxu0
      %v3237 = vadd.f32 %v3181, %v3236
      %3238 = vmatmul.f32.gmra.mxu0 %v3126
      %v3239 = vpop.f32.mrf.mxu0
      %v3240 = vadd.f32 %v3181, %v3239
      %3241 = vmatmul.f32.gmra.mxu0 %v3127
      %v3242 = vpop.f32.mrf.mxu0
      %v3243 = vadd.f32 %v3181, %v3242
      %3244 = vmatmul.f32.gmra.mxu0 %v3128
      %v3245 = vpop.f32.mrf.mxu0
      %v3246 = vadd.f32 %v3181, %v3245
      %3247 = vmatmul.f32.gmra.mxu0 %v3129
      %v3248 = vpop.f32.mrf.mxu0
      %v3249 = vadd.f32 %v3181, %v3248
      %3250 = vmatmul.f32.gmra.mxu0 %v3130
      %v3251 = vpop.f32.mrf.mxu0
      %v3252 = vadd.f32 %v3181, %v3251
      %3253 = vmatmul.f32.gmra.mxu0 %v3131
      %v3254 = vpop.f32.mrf.mxu0
      %v3255 = vadd.f32 %v3181, %v3254
      %3256 = vmatmul.f32.gmra.mxu0 %v3132
      %v3257 = vpop.f32.mrf.mxu0
      %v3258 = vadd.f32 %v3181, %v3257
      %3259 = vmatmul.f32.gmra.mxu0 %v3133
      %v3260 = vpop.f32.mrf.mxu0
      %v3261 = vadd.f32 %v3181, %v3260
      %3262 = vmatmul.f32.gmra.mxu0 %v3134
      %v3263 = vpop.f32.mrf.mxu0
      %v3264 = vadd.f32 %v3181, %v3263
      %3265 = vmatmul.f32.gmra.mxu0 %v3135
      %v3266 = vpop.f32.mrf.mxu0
      %v3267 = vadd.f32 %v3181, %v3266
      %3268 = vmatmul.f32.gmra.mxu0 %v3136
      %v3269 = vpop.f32.mrf.mxu0
      %v3270 = vadd.f32 %v3181, %v3269
      %3271 = vmatmul.f32.gmra.mxu0 %v3137
      %v3272 = vpop.f32.mrf.mxu0
      %v3273 = vadd.f32 %v3181, %v3272
      %3274 = vmatmul.f32.gmra.mxu0 %v3138
      %v3275 = vpop.f32.mrf.mxu0
      %v3276 = vadd.f32 %v3181, %v3275
      %3277 = vmatmul.f32.gmra.mxu0 %v3139
      %v3278 = vpop.f32.mrf.mxu0
      %v3279 = vadd.f32 %v3181, %v3278
      %3280 = vmatmul.f32.gmra.mxu0 %v3140
      %v3281 = vpop.f32.mrf.mxu0
      %v3282 = vadd.f32 %v3181, %v3281
      %3283 = vmatmul.f32.gmra.mxu0 %v3141
      %v3284 = vpop.f32.mrf.mxu0
      %v3285 = vadd.f32 %v3181, %v3284
      %3286 = vmatmul.f32.gmra.mxu0 %v3142
      %v3287 = vpop.f32.mrf.mxu0
      %v3288 = vadd.f32 %v3181, %v3287
      %3289 = vmatmul.f32.gmra.mxu0 %v3143
      %v3290 = vpop.f32.mrf.mxu0
      %v3291 = vadd.f32 %v3181, %v3290
      %3292 = vmatmul.f32.gmra.mxu0 %v3144
      %v3293 = vpop.f32.mrf.mxu0
      %v3294 = vadd.f32 %v3181, %v3293
      %3295 = vmatmul.f32.gmra.mxu0 %v3145
      %v3296 = vpop.f32.mrf.mxu0
      %v3297 = vadd.f32 %v3181, %v3296
      %3298 = vmatmul.f32.gmra.mxu0 %v3146
      %v3299 = vpop.f32.mrf.mxu0
      %v3300 = vadd.f32 %v3181, %v3299
      %3301 = vmatmul.f32.gmra.mxu0 %v3147
      %v3302 = vpop.f32.mrf.mxu0
      %v3303 = vadd.f32 %v3181, %v3302
      %3304 = vmatmul.f32.gmra.mxu0 %v3148
      %v3305 = vpop.f32.mrf.mxu0
      %v3306 = vadd.f32 %v3181, %v3305
      %3307 = vmatmul.f32.gmra.mxu0 %v3149
      %v3308 = vpop.f32.mrf.mxu0
      %v3309 = vadd.f32 %v3181, %v3308
      %3310 = vmatmul.f32.gmra.mxu0 %v3150
      %v3311 = vpop.f32.mrf.mxu0
      %v3312 = vadd.f32 %v3181, %v3311
      %3313 = vmatmul.f32.gmra.mxu0 %v3151
      %v3314 = vpop.f32.mrf.mxu0
      %v3315 = vadd.f32 %v3181, %v3314
      %3316 = vmatmul.f32.gmra.mxu0 %v3152
      %v3317 = vpop.f32.mrf.mxu0
      %v3318 = vadd.f32 %v3181, %v3317
      %3319 = vmatmul.f32.gmra.mxu0 %v3153
      %v3320 = vpop.f32.mrf.mxu0
      %v3321 = vadd.f32 %v3181, %v3320
      %3322 = vmatmul.f32.gmra.mxu0 %v3154
      %v3323 = vpop.f32.mrf.mxu0
      %v3324 = vadd.f32 %v3181, %v3323
      %3325 = vmatmul.f32.gmra.mxu0 %v3155
      %v3326 = vpop.f32.mrf.mxu0
      %v3327 = vadd.f32 %v3181, %v3326
      %3328 = vmatmul.f32.gmra.mxu0 %v3156
      %v3329 = vpop.f32.mrf.mxu0
      %v3330 = vadd.f32 %v3181, %v3329
      %3331 = vmatmul.f32.gmra.mxu0 %v3157
      %v3332 = vpop.f32.mrf.mxu0
      %v3333 = vadd.f32 %v3181, %v3332
      %3334 = vmatmul.f32.gmra.mxu0 %v3158
      %v3335 = vpop.f32.mrf.mxu0
      %v3336 = vadd.f32 %v3181, %v3335
      %3337 = vmatmul.f32.gmra.mxu0 %v3159
      %v3338 = vpop.f32.mrf.mxu0
      %v3339 = vadd.f32 %v3181, %v3338
      %3340 = vmatmul.f32.gmra.mxu0 %v3160
      %v3341 = vpop.f32.mrf.mxu0
      %v3342 = vadd.f32 %v3181, %v3341
      %3343 = vdwg.mxu0
      %v3344 = vadd.f32 %v2834, %v3201
      %v3345 = vadd.f32 %v2835, %v3204
      %v3346 = vadd.f32 %v2836, %v3207
      %v3347 = vadd.f32 %v2837, %v3210
      %v3348 = vadd.f32 %v2838, %v3213
      %v3349 = vadd.f32 %v2839, %v3216
      %v3350 = vadd.f32 %v2840, %v3219
      %v3351 = vadd.f32 %v2841, %v3222
      %v3352 = vadd.f32 %v2842, %v3225
      %v3353 = vadd.f32 %v2843, %v3228
      %v3354 = vadd.f32 %v2844, %v3231
      %v3355 = vadd.f32 %v2845, %v3234
      %v3356 = vadd.f32 %v2846, %v3237
      %v3357 = vadd.f32 %v2847, %v3240
      %v3358 = vadd.f32 %v2848, %v3243
      %v3359 = vadd.f32 %v2849, %v3246
      %v3360 = vadd.f32 %v2850, %v3249
      %v3361 = vadd.f32 %v2851, %v3252
      %v3362 = vadd.f32 %v2852, %v3255
      %v3363 = vadd.f32 %v2853, %v3258
      %v3364 = vadd.f32 %v2854, %v3261
      %v3365 = vadd.f32 %v2855, %v3264
      %v3366 = vadd.f32 %v2856, %v3267
      %v3367 = vadd.f32 %v2857, %v3270
      %v3368 = vadd.f32 %v2858, %v3273
      %v3369 = vadd.f32 %v2859, %v3276
      %v3370 = vadd.f32 %v2860, %v3279
      %v3371 = vadd.f32 %v2861, %v3282
      %v3372 = vadd.f32 %v2862, %v3285
      %v3373 = vadd.f32 %v2863, %v3288
      %v3374 = vadd.f32 %v2864, %v3291
      %v3375 = vadd.f32 %v2865, %v3294
      %v3376 = vadd.f32 %v2866, %v3297
      %v3377 = vadd.f32 %v2867, %v3300
      %v3378 = vadd.f32 %v2868, %v3303
      %v3379 = vadd.f32 %v2869, %v3306
      %v3380 = vadd.f32 %v2870, %v3309
      %v3381 = vadd.f32 %v2871, %v3312
      %v3382 = vadd.f32 %v2872, %v3315
      %v3383 = vadd.f32 %v2873, %v3318
      %v3384 = vadd.f32 %v2874, %v3321
      %v3385 = vadd.f32 %v2875, %v3324
      %v3386 = vadd.f32 %v2876, %v3327
      %v3387 = vadd.f32 %v2877, %v3330
      %v3388 = vadd.f32 %v2878, %v3333
      %v3389 = vadd.f32 %v2879, %v3336
      %v3390 = vadd.f32 %v2880, %v3339
      %v3391 = vadd.f32 %v2881, %v3342
      %v3392 = vmax.f32 %v3344, 0.0
      %v3393 = vmax.f32 %v3345, 0.0
      %v3394 = vmax.f32 %v3346, 0.0
      %v3395 = vmax.f32 %v3347, 0.0
      %v3396 = vmax.f32 %v3348, 0.0
      %v3397 = vmax.f32 %v3349, 0.0
      %v3398 = vmax.f32 %v3350, 0.0
      %v3399 = vmax.f32 %v3351, 0.0
      %v3400 = vmax.f32 %v3352, 0.0
      %v3401 = vmax.f32 %v3353, 0.0
      %v3402 = vmax.f32 %v3354, 0.0
      %v3403 = vmax.f32 %v3355, 0.0
      %v3404 = vmax.f32 %v3356, 0.0
      %v3405 = vmax.f32 %v3357, 0.0
      %v3406 = vmax.f32 %v3358, 0.0
      %v3407 = vmax.f32 %v3359, 0.0
      %v3408 = vmax.f32 %v3360, 0.0
      %v3409 = vmax.f32 %v3361, 0.0
      %v3410 = vmax.f32 %v3362, 0.0
      %v3411 = vmax.f32 %v3363, 0.0
      %v3412 = vmax.f32 %v3364, 0.0
      %v3413 = vmax.f32 %v3365, 0.0
      %v3414 = vmax.f32 %v3366, 0.0
      %v3415 = vmax.f32 %v3367, 0.0
      %v3416 = vmax.f32 %v3368, 0.0
      %v3417 = vmax.f32 %v3369, 0.0
      %v3418 = vmax.f32 %v3370, 0.0
      %v3419 = vmax.f32 %v3371, 0.0
      %v3420 = vmax.f32 %v3372, 0.0
      %v3421 = vmax.f32 %v3373, 0.0
      %v3422 = vmax.f32 %v3374, 0.0
      %v3423 = vmax.f32 %v3375, 0.0
      %v3424 = vmax.f32 %v3376, 0.0
      %v3425 = vmax.f32 %v3377, 0.0
      %v3426 = vmax.f32 %v3378, 0.0
      %v3427 = vmax.f32 %v3379, 0.0
      %v3428 = vmax.f32 %v3380, 0.0
      %v3429 = vmax.f32 %v3381, 0.0
      %v3430 = vmax.f32 %v3382, 0.0
      %v3431 = vmax.f32 %v3383, 0.0
      %v3432 = vmax.f32 %v3384, 0.0
      %v3433 = vmax.f32 %v3385, 0.0
      %v3434 = vmax.f32 %v3386, 0.0
      %v3435 = vmax.f32 %v3387, 0.0
      %v3436 = vmax.f32 %v3388, 0.0
      %v3437 = vmax.f32 %v3389, 0.0
      %v3438 = vmax.f32 %v3390, 0.0
      %v3439 = vmax.f32 %v3391, 0.0
      %s3440 = scalar_lea.vmem %s3, 512
      %v3441 = vld [vmem:[%s3440] sm:$0xff]
      %v3442 = vld [vmem:[%s3440 + $0x8] sm:$0xff]
      %v3443 = vld [vmem:[%s3440 + $0x10] sm:$0xff]
      %v3444 = vld [vmem:[%s3440 + $0x18] sm:$0xff]
      %v3445 = vld [vmem:[%s3440 + $0x20] sm:$0xff]
      %v3446 = vld [vmem:[%s3440 + $0x28] sm:$0xff]
      %v3447 = vld [vmem:[%s3440 + $0x30] sm:$0xff]
      %v3448 = vld [vmem:[%s3440 + $0x38] sm:$0xff]
      %v3449 = vld [vmem:[%s3440 + $0x40] sm:$0xff]
      %v3450 = vld [vmem:[%s3440 + $0x48] sm:$0xff]
      %v3451 = vld [vmem:[%s3440 + $0x50] sm:$0xff]
      %v3452 = vld [vmem:[%s3440 + $0x58] sm:$0xff]
      %v3453 = vld [vmem:[%s3440 + $0x60] sm:$0xff]
      %v3454 = vld [vmem:[%s3440 + $0x68] sm:$0xff]
      %v3455 = vld [vmem:[%s3440 + $0x70] sm:$0xff]
      %v3456 = vld [vmem:[%s3440 + $0x78] sm:$0xff]
      %s3457 = scalar_lea.vmem %s4, 4
      %v3458 = vld [vmem:[%s3457] sm:$0x1]
      %v3460 = vperm.slane %v3458, 0
      %3462 = vmatpush.msra.mxu0 %v3456
      %3463 = vmatpush.msra.mxu0 %v3455
      %3464 = vmatpush.msra.mxu0 %v3454
      %3465 = vmatpush.msra.mxu0 %v3453
      %3466 = vmatpush.msra.mxu0 %v3452
      %3467 = vmatpush.msra.mxu0 %v3451
      %3468 = vmatpush.msra.mxu0 %v3450
      %3469 = vmatpush.msra.mxu0 %v3449
      %3470 = vmatpush.msra.mxu0 %v3448
      %3471 = vmatpush.msra.mxu0 %v3447
      %3472 = vmatpush.msra.mxu0 %v3446
      %3473 = vmatpush.msra.mxu0 %v3445
      %3474 = vmatpush.msra.mxu0 %v3444
      %3475 = vmatpush.msra.mxu0 %v3443
      %3476 = vmatpush.msra.mxu0 %v3442
      %3477 = vmatpush.msra.mxu0 %v3441
      %3478 = vmatmul.f32.gmra.mxu0 %v3392
      %v3479 = vpop.f32.mrf.mxu0
      %v3480 = vadd.f32 %v3460, %v3479
      %3481 = vmatmul.f32.gmra.mxu0 %v3393
      %v3482 = vpop.f32.mrf.mxu0
      %v3483 = vadd.f32 %v3460, %v3482
      %3484 = vmatmul.f32.gmra.mxu0 %v3394
      %v3485 = vpop.f32.mrf.mxu0
      %v3486 = vadd.f32 %v3460, %v3485
      %3487 = vmatmul.f32.gmra.mxu0 %v3395
      %v3488 = vpop.f32.mrf.mxu0
      %v3489 = vadd.f32 %v3460, %v3488
      %3490 = vmatmul.f32.gmra.mxu0 %v3396
      %v3491 = vpop.f32.mrf.mxu0
      %v3492 = vadd.f32 %v3460, %v3491
      %3493 = vmatmul.f32.gmra.mxu0 %v3397
      %v3494 = vpop.f32.mrf.mxu0
      %v3495 = vadd.f32 %v3460, %v3494
      %3496 = vmatmul.f32.gmra.mxu0 %v3398
      %v3497 = vpop.f32.mrf.mxu0
      %v3498 = vadd.f32 %v3460, %v3497
      %3499 = vmatmul.f32.gmra.mxu0 %v3399
      %v3500 = vpop.f32.mrf.mxu0
      %v3501 = vadd.f32 %v3460, %v3500
      %3502 = vmatmul.f32.gmra.mxu0 %v3400
      %v3503 = vpop.f32.mrf.mxu0
      %v3504 = vadd.f32 %v3460, %v3503
      %3505 = vmatmul.f32.gmra.mxu0 %v3401
      %v3506 = vpop.f32.mrf.mxu0
      %v3507 = vadd.f32 %v3460, %v3506
      %3508 = vmatmul.f32.gmra.mxu0 %v3402
      %v3509 = vpop.f32.mrf.mxu0
      %v3510 = vadd.f32 %v3460, %v3509
      %3511 = vmatmul.f32.gmra.mxu0 %v3403
      %v3512 = vpop.f32.mrf.mxu0
      %v3513 = vadd.f32 %v3460, %v3512
      %3514 = vmatmul.f32.gmra.mxu0 %v3404
      %v3515 = vpop.f32.mrf.mxu0
      %v3516 = vadd.f32 %v3460, %v3515
      %3517 = vmatmul.f32.gmra.mxu0 %v3405
      %v3518 = vpop.f32.mrf.mxu0
      %v3519 = vadd.f32 %v3460, %v3518
      %3520 = vmatmul.f32.gmra.mxu0 %v3406
      %v3521 = vpop.f32.mrf.mxu0
      %v3522 = vadd.f32 %v3460, %v3521
      %3523 = vmatmul.f32.gmra.mxu0 %v3407
      %v3524 = vpop.f32.mrf.mxu0
      %v3525 = vadd.f32 %v3460, %v3524
      %3526 = vmatmul.f32.gmra.mxu0 %v3408
      %v3527 = vpop.f32.mrf.mxu0
      %v3528 = vadd.f32 %v3460, %v3527
      %3529 = vmatmul.f32.gmra.mxu0 %v3409
      %v3530 = vpop.f32.mrf.mxu0
      %v3531 = vadd.f32 %v3460, %v3530
      %3532 = vmatmul.f32.gmra.mxu0 %v3410
      %v3533 = vpop.f32.mrf.mxu0
      %v3534 = vadd.f32 %v3460, %v3533
      %3535 = vmatmul.f32.gmra.mxu0 %v3411
      %v3536 = vpop.f32.mrf.mxu0
      %v3537 = vadd.f32 %v3460, %v3536
      %3538 = vmatmul.f32.gmra.mxu0 %v3412
      %v3539 = vpop.f32.mrf.mxu0
      %v3540 = vadd.f32 %v3460, %v3539
      %3541 = vmatmul.f32.gmra.mxu0 %v3413
      %v3542 = vpop.f32.mrf.mxu0
      %v3543 = vadd.f32 %v3460, %v3542
      %3544 = vmatmul.f32.gmra.mxu0 %v3414
      %v3545 = vpop.f32.mrf.mxu0
      %v3546 = vadd.f32 %v3460, %v3545
      %3547 = vmatmul.f32.gmra.mxu0 %v3415
      %v3548 = vpop.f32.mrf.mxu0
      %v3549 = vadd.f32 %v3460, %v3548
      %3550 = vmatmul.f32.gmra.mxu0 %v3416
      %v3551 = vpop.f32.mrf.mxu0
      %v3552 = vadd.f32 %v3460, %v3551
      %3553 = vmatmul.f32.gmra.mxu0 %v3417
      %v3554 = vpop.f32.mrf.mxu0
      %v3555 = vadd.f32 %v3460, %v3554
      %3556 = vmatmul.f32.gmra.mxu0 %v3418
      %v3557 = vpop.f32.mrf.mxu0
      %v3558 = vadd.f32 %v3460, %v3557
      %3559 = vmatmul.f32.gmra.mxu0 %v3419
      %v3560 = vpop.f32.mrf.mxu0
      %v3561 = vadd.f32 %v3460, %v3560
      %3562 = vmatmul.f32.gmra.mxu0 %v3420
      %v3563 = vpop.f32.mrf.mxu0
      %v3564 = vadd.f32 %v3460, %v3563
      %3565 = vmatmul.f32.gmra.mxu0 %v3421
      %v3566 = vpop.f32.mrf.mxu0
      %v3567 = vadd.f32 %v3460, %v3566
      %3568 = vmatmul.f32.gmra.mxu0 %v3422
      %v3569 = vpop.f32.mrf.mxu0
      %v3570 = vadd.f32 %v3460, %v3569
      %3571 = vmatmul.f32.gmra.mxu0 %v3423
      %v3572 = vpop.f32.mrf.mxu0
      %v3573 = vadd.f32 %v3460, %v3572
      %3574 = vmatmul.f32.gmra.mxu0 %v3424
      %v3575 = vpop.f32.mrf.mxu0
      %v3576 = vadd.f32 %v3460, %v3575
      %3577 = vmatmul.f32.gmra.mxu0 %v3425
      %v3578 = vpop.f32.mrf.mxu0
      %v3579 = vadd.f32 %v3460, %v3578
      %3580 = vmatmul.f32.gmra.mxu0 %v3426
      %v3581 = vpop.f32.mrf.mxu0
      %v3582 = vadd.f32 %v3460, %v3581
      %3583 = vmatmul.f32.gmra.mxu0 %v3427
      %v3584 = vpop.f32.mrf.mxu0
      %v3585 = vadd.f32 %v3460, %v3584
      %3586 = vmatmul.f32.gmra.mxu0 %v3428
      %v3587 = vpop.f32.mrf.mxu0
      %v3588 = vadd.f32 %v3460, %v3587
      %3589 = vmatmul.f32.gmra.mxu0 %v3429
      %v3590 = vpop.f32.mrf.mxu0
      %v3591 = vadd.f32 %v3460, %v3590
      %3592 = vmatmul.f32.gmra.mxu0 %v3430
      %v3593 = vpop.f32.mrf.mxu0
      %v3594 = vadd.f32 %v3460, %v3593
      %3595 = vmatmul.f32.gmra.mxu0 %v3431
      %v3596 = vpop.f32.mrf.mxu0
      %v3597 = vadd.f32 %v3460, %v3596
      %3598 = vmatmul.f32.gmra.mxu0 %v3432
      %v3599 = vpop.f32.mrf.mxu0
      %v3600 = vadd.f32 %v3460, %v3599
      %3601 = vmatmul.f32.gmra.mxu0 %v3433
      %v3602 = vpop.f32.mrf.mxu0
      %v3603 = vadd.f32 %v3460, %v3602
      %3604 = vmatmul.f32.gmra.mxu0 %v3434
      %v3605 = vpop.f32.mrf.mxu0
      %v3606 = vadd.f32 %v3460, %v3605
      %3607 = vmatmul.f32.gmra.mxu0 %v3435
      %v3608 = vpop.f32.mrf.mxu0
      %v3609 = vadd.f32 %v3460, %v3608
      %3610 = vmatmul.f32.gmra.mxu0 %v3436
      %v3611 = vpop.f32.mrf.mxu0
      %v3612 = vadd.f32 %v3460, %v3611
      %3613 = vmatmul.f32.gmra.mxu0 %v3437
      %v3614 = vpop.f32.mrf.mxu0
      %v3615 = vadd.f32 %v3460, %v3614
      %3616 = vmatmul.f32.gmra.mxu0 %v3438
      %v3617 = vpop.f32.mrf.mxu0
      %v3618 = vadd.f32 %v3460, %v3617
      %3619 = vmatmul.f32.gmra.mxu0 %v3439
      %v3620 = vpop.f32.mrf.mxu0
      %v3621 = vadd.f32 %v3460, %v3620
      %3622 = vdwg.mxu0
      %v3623 = vmax.f32 %v3480, 0.0
      %v3624 = vmax.f32 %v3483, 0.0
      %v3625 = vmax.f32 %v3486, 0.0
      %v3626 = vmax.f32 %v3489, 0.0
      %v3627 = vmax.f32 %v3492, 0.0
      %v3628 = vmax.f32 %v3495, 0.0
      %v3629 = vmax.f32 %v3498, 0.0
      %v3630 = vmax.f32 %v3501, 0.0
      %v3631 = vmax.f32 %v3504, 0.0
      %v3632 = vmax.f32 %v3507, 0.0
      %v3633 = vmax.f32 %v3510, 0.0
      %v3634 = vmax.f32 %v3513, 0.0
      %v3635 = vmax.f32 %v3516, 0.0
      %v3636 = vmax.f32 %v3519, 0.0
      %v3637 = vmax.f32 %v3522, 0.0
      %v3638 = vmax.f32 %v3525, 0.0
      %v3639 = vmax.f32 %v3528, 0.0
      %v3640 = vmax.f32 %v3531, 0.0
      %v3641 = vmax.f32 %v3534, 0.0
      %v3642 = vmax.f32 %v3537, 0.0
      %v3643 = vmax.f32 %v3540, 0.0
      %v3644 = vmax.f32 %v3543, 0.0
      %v3645 = vmax.f32 %v3546, 0.0
      %v3646 = vmax.f32 %v3549, 0.0
      %v3647 = vmax.f32 %v3552, 0.0
      %v3648 = vmax.f32 %v3555, 0.0
      %v3649 = vmax.f32 %v3558, 0.0
      %v3650 = vmax.f32 %v3561, 0.0
      %v3651 = vmax.f32 %v3564, 0.0
      %v3652 = vmax.f32 %v3567, 0.0
      %v3653 = vmax.f32 %v3570, 0.0
      %v3654 = vmax.f32 %v3573, 0.0
      %v3655 = vmax.f32 %v3576, 0.0
      %v3656 = vmax.f32 %v3579, 0.0
      %v3657 = vmax.f32 %v3582, 0.0
      %v3658 = vmax.f32 %v3585, 0.0
      %v3659 = vmax.f32 %v3588, 0.0
      %v3660 = vmax.f32 %v3591, 0.0
      %v3661 = vmax.f32 %v3594, 0.0
      %v3662 = vmax.f32 %v3597, 0.0
      %v3663 = vmax.f32 %v3600, 0.0
      %v3664 = vmax.f32 %v3603, 0.0
      %v3665 = vmax.f32 %v3606, 0.0
      %v3666 = vmax.f32 %v3609, 0.0
      %v3667 = vmax.f32 %v3612, 0.0
      %v3668 = vmax.f32 %v3615, 0.0
      %v3669 = vmax.f32 %v3618, 0.0
      %v3670 = vmax.f32 %v3621, 0.0
      %s3671 = scalar_lea.vmem %s5, 512
      %v3672 = vld [vmem:[%s3671] sm:$0xff]
      %v3673 = vld [vmem:[%s3671 + $0x8] sm:$0xff]
      %v3674 = vld [vmem:[%s3671 + $0x10] sm:$0xff]
      %v3675 = vld [vmem:[%s3671 + $0x18] sm:$0xff]
      %v3676 = vld [vmem:[%s3671 + $0x20] sm:$0xff]
      %v3677 = vld [vmem:[%s3671 + $0x28] sm:$0xff]
      %v3678 = vld [vmem:[%s3671 + $0x30] sm:$0xff]
      %v3679 = vld [vmem:[%s3671 + $0x38] sm:$0xff]
      %v3680 = vld [vmem:[%s3671 + $0x40] sm:$0xff]
      %v3681 = vld [vmem:[%s3671 + $0x48] sm:$0xff]
      %v3682 = vld [vmem:[%s3671 + $0x50] sm:$0xff]
      %v3683 = vld [vmem:[%s3671 + $0x58] sm:$0xff]
      %v3684 = vld [vmem:[%s3671 + $0x60] sm:$0xff]
      %v3685 = vld [vmem:[%s3671 + $0x68] sm:$0xff]
      %v3686 = vld [vmem:[%s3671 + $0x70] sm:$0xff]
      %v3687 = vld [vmem:[%s3671 + $0x78] sm:$0xff]
      %s3688 = scalar_lea.vmem %s6, 4
      %v3689 = vld [vmem:[%s3688] sm:$0x1]
      %v3691 = vperm.slane %v3689, 0
      %3693 = vmatpush.msra.mxu0 %v3687
      %3694 = vmatpush.msra.mxu0 %v3686
      %3695 = vmatpush.msra.mxu0 %v3685
      %3696 = vmatpush.msra.mxu0 %v3684
      %3697 = vmatpush.msra.mxu0 %v3683
      %3698 = vmatpush.msra.mxu0 %v3682
      %3699 = vmatpush.msra.mxu0 %v3681
      %3700 = vmatpush.msra.mxu0 %v3680
      %3701 = vmatpush.msra.mxu0 %v3679
      %3702 = vmatpush.msra.mxu0 %v3678
      %3703 = vmatpush.msra.mxu0 %v3677
      %3704 = vmatpush.msra.mxu0 %v3676
      %3705 = vmatpush.msra.mxu0 %v3675
      %3706 = vmatpush.msra.mxu0 %v3674
      %3707 = vmatpush.msra.mxu0 %v3673
      %3708 = vmatpush.msra.mxu0 %v3672
      %3709 = vmatmul.f32.gmra.mxu0 %v3623
      %v3710 = vpop.f32.mrf.mxu0
      %v3711 = vadd.f32 %v3691, %v3710
      %3712 = vmatmul.f32.gmra.mxu0 %v3624
      %v3713 = vpop.f32.mrf.mxu0
      %v3714 = vadd.f32 %v3691, %v3713
      %3715 = vmatmul.f32.gmra.mxu0 %v3625
      %v3716 = vpop.f32.mrf.mxu0
      %v3717 = vadd.f32 %v3691, %v3716
      %3718 = vmatmul.f32.gmra.mxu0 %v3626
      %v3719 = vpop.f32.mrf.mxu0
      %v3720 = vadd.f32 %v3691, %v3719
      %3721 = vmatmul.f32.gmra.mxu0 %v3627
      %v3722 = vpop.f32.mrf.mxu0
      %v3723 = vadd.f32 %v3691, %v3722
      %3724 = vmatmul.f32.gmra.mxu0 %v3628
      %v3725 = vpop.f32.mrf.mxu0
      %v3726 = vadd.f32 %v3691, %v3725
      %3727 = vmatmul.f32.gmra.mxu0 %v3629
      %v3728 = vpop.f32.mrf.mxu0
      %v3729 = vadd.f32 %v3691, %v3728
      %3730 = vmatmul.f32.gmra.mxu0 %v3630
      %v3731 = vpop.f32.mrf.mxu0
      %v3732 = vadd.f32 %v3691, %v3731
      %3733 = vmatmul.f32.gmra.mxu0 %v3631
      %v3734 = vpop.f32.mrf.mxu0
      %v3735 = vadd.f32 %v3691, %v3734
      %3736 = vmatmul.f32.gmra.mxu0 %v3632
      %v3737 = vpop.f32.mrf.mxu0
      %v3738 = vadd.f32 %v3691, %v3737
      %3739 = vmatmul.f32.gmra.mxu0 %v3633
      %v3740 = vpop.f32.mrf.mxu0
      %v3741 = vadd.f32 %v3691, %v3740
      %3742 = vmatmul.f32.gmra.mxu0 %v3634
      %v3743 = vpop.f32.mrf.mxu0
      %v3744 = vadd.f32 %v3691, %v3743
      %3745 = vmatmul.f32.gmra.mxu0 %v3635
      %v3746 = vpop.f32.mrf.mxu0
      %v3747 = vadd.f32 %v3691, %v3746
      %3748 = vmatmul.f32.gmra.mxu0 %v3636
      %v3749 = vpop.f32.mrf.mxu0
      %v3750 = vadd.f32 %v3691, %v3749
      %3751 = vmatmul.f32.gmra.mxu0 %v3637
      %v3752 = vpop.f32.mrf.mxu0
      %v3753 = vadd.f32 %v3691, %v3752
      %3754 = vmatmul.f32.gmra.mxu0 %v3638
      %v3755 = vpop.f32.mrf.mxu0
      %v3756 = vadd.f32 %v3691, %v3755
      %3757 = vmatmul.f32.gmra.mxu0 %v3639
      %v3758 = vpop.f32.mrf.mxu0
      %v3759 = vadd.f32 %v3691, %v3758
      %3760 = vmatmul.f32.gmra.mxu0 %v3640
      %v3761 = vpop.f32.mrf.mxu0
      %v3762 = vadd.f32 %v3691, %v3761
      %3763 = vmatmul.f32.gmra.mxu0 %v3641
      %v3764 = vpop.f32.mrf.mxu0
      %v3765 = vadd.f32 %v3691, %v3764
      %3766 = vmatmul.f32.gmra.mxu0 %v3642
      %v3767 = vpop.f32.mrf.mxu0
      %v3768 = vadd.f32 %v3691, %v3767
      %3769 = vmatmul.f32.gmra.mxu0 %v3643
      %v3770 = vpop.f32.mrf.mxu0
      %v3771 = vadd.f32 %v3691, %v3770
      %3772 = vmatmul.f32.gmra.mxu0 %v3644
      %v3773 = vpop.f32.mrf.mxu0
      %v3774 = vadd.f32 %v3691, %v3773
      %3775 = vmatmul.f32.gmra.mxu0 %v3645
      %v3776 = vpop.f32.mrf.mxu0
      %v3777 = vadd.f32 %v3691, %v3776
      %3778 = vmatmul.f32.gmra.mxu0 %v3646
      %v3779 = vpop.f32.mrf.mxu0
      %v3780 = vadd.f32 %v3691, %v3779
      %3781 = vmatmul.f32.gmra.mxu0 %v3647
      %v3782 = vpop.f32.mrf.mxu0
      %v3783 = vadd.f32 %v3691, %v3782
      %3784 = vmatmul.f32.gmra.mxu0 %v3648
      %v3785 = vpop.f32.mrf.mxu0
      %v3786 = vadd.f32 %v3691, %v3785
      %3787 = vmatmul.f32.gmra.mxu0 %v3649
      %v3788 = vpop.f32.mrf.mxu0
      %v3789 = vadd.f32 %v3691, %v3788
      %3790 = vmatmul.f32.gmra.mxu0 %v3650
      %v3791 = vpop.f32.mrf.mxu0
      %v3792 = vadd.f32 %v3691, %v3791
      %3793 = vmatmul.f32.gmra.mxu0 %v3651
      %v3794 = vpop.f32.mrf.mxu0
      %v3795 = vadd.f32 %v3691, %v3794
      %3796 = vmatmul.f32.gmra.mxu0 %v3652
      %v3797 = vpop.f32.mrf.mxu0
      %v3798 = vadd.f32 %v3691, %v3797
      %3799 = vmatmul.f32.gmra.mxu0 %v3653
      %v3800 = vpop.f32.mrf.mxu0
      %v3801 = vadd.f32 %v3691, %v3800
      %3802 = vmatmul.f32.gmra.mxu0 %v3654
      %v3803 = vpop.f32.mrf.mxu0
      %v3804 = vadd.f32 %v3691, %v3803
      %3805 = vmatmul.f32.gmra.mxu0 %v3655
      %v3806 = vpop.f32.mrf.mxu0
      %v3807 = vadd.f32 %v3691, %v3806
      %3808 = vmatmul.f32.gmra.mxu0 %v3656
      %v3809 = vpop.f32.mrf.mxu0
      %v3810 = vadd.f32 %v3691, %v3809
      %3811 = vmatmul.f32.gmra.mxu0 %v3657
      %v3812 = vpop.f32.mrf.mxu0
      %v3813 = vadd.f32 %v3691, %v3812
      %3814 = vmatmul.f32.gmra.mxu0 %v3658
      %v3815 = vpop.f32.mrf.mxu0
      %v3816 = vadd.f32 %v3691, %v3815
      %3817 = vmatmul.f32.gmra.mxu0 %v3659
      %v3818 = vpop.f32.mrf.mxu0
      %v3819 = vadd.f32 %v3691, %v3818
      %3820 = vmatmul.f32.gmra.mxu0 %v3660
      %v3821 = vpop.f32.mrf.mxu0
      %v3822 = vadd.f32 %v3691, %v3821
      %3823 = vmatmul.f32.gmra.mxu0 %v3661
      %v3824 = vpop.f32.mrf.mxu0
      %v3825 = vadd.f32 %v3691, %v3824
      %3826 = vmatmul.f32.gmra.mxu0 %v3662
      %v3827 = vpop.f32.mrf.mxu0
      %v3828 = vadd.f32 %v3691, %v3827
      %3829 = vmatmul.f32.gmra.mxu0 %v3663
      %v3830 = vpop.f32.mrf.mxu0
      %v3831 = vadd.f32 %v3691, %v3830
      %3832 = vmatmul.f32.gmra.mxu0 %v3664
      %v3833 = vpop.f32.mrf.mxu0
      %v3834 = vadd.f32 %v3691, %v3833
      %3835 = vmatmul.f32.gmra.mxu0 %v3665
      %v3836 = vpop.f32.mrf.mxu0
      %v3837 = vadd.f32 %v3691, %v3836
      %3838 = vmatmul.f32.gmra.mxu0 %v3666
      %v3839 = vpop.f32.mrf.mxu0
      %v3840 = vadd.f32 %v3691, %v3839
      %3841 = vmatmul.f32.gmra.mxu0 %v3667
      %v3842 = vpop.f32.mrf.mxu0
      %v3843 = vadd.f32 %v3691, %v3842
      %3844 = vmatmul.f32.gmra.mxu0 %v3668
      %v3845 = vpop.f32.mrf.mxu0
      %v3846 = vadd.f32 %v3691, %v3845
      %3847 = vmatmul.f32.gmra.mxu0 %v3669
      %v3848 = vpop.f32.mrf.mxu0
      %v3849 = vadd.f32 %v3691, %v3848
      %3850 = vmatmul.f32.gmra.mxu0 %v3670
      %v3851 = vpop.f32.mrf.mxu0
      %v3852 = vadd.f32 %v3691, %v3851
      %3853 = vdwg.mxu0
      %v3854 = vadd.f32 %v3344, %v3711
      %v3855 = vadd.f32 %v3345, %v3714
      %v3856 = vadd.f32 %v3346, %v3717
      %v3857 = vadd.f32 %v3347, %v3720
      %v3858 = vadd.f32 %v3348, %v3723
      %v3859 = vadd.f32 %v3349, %v3726
      %v3860 = vadd.f32 %v3350, %v3729
      %v3861 = vadd.f32 %v3351, %v3732
      %v3862 = vadd.f32 %v3352, %v3735
      %v3863 = vadd.f32 %v3353, %v3738
      %v3864 = vadd.f32 %v3354, %v3741
      %v3865 = vadd.f32 %v3355, %v3744
      %v3866 = vadd.f32 %v3356, %v3747
      %v3867 = vadd.f32 %v3357, %v3750
      %v3868 = vadd.f32 %v3358, %v3753
      %v3869 = vadd.f32 %v3359, %v3756
      %v3870 = vadd.f32 %v3360, %v3759
      %v3871 = vadd.f32 %v3361, %v3762
      %v3872 = vadd.f32 %v3362, %v3765
      %v3873 = vadd.f32 %v3363, %v3768
      %v3874 = vadd.f32 %v3364, %v3771
      %v3875 = vadd.f32 %v3365, %v3774
      %v3876 = vadd.f32 %v3366, %v3777
      %v3877 = vadd.f32 %v3367, %v3780
      %v3878 = vadd.f32 %v3368, %v3783
      %v3879 = vadd.f32 %v3369, %v3786
      %v3880 = vadd.f32 %v3370, %v3789
      %v3881 = vadd.f32 %v3371, %v3792
      %v3882 = vadd.f32 %v3372, %v3795
      %v3883 = vadd.f32 %v3373, %v3798
      %v3884 = vadd.f32 %v3374, %v3801
      %v3885 = vadd.f32 %v3375, %v3804
      %v3886 = vadd.f32 %v3376, %v3807
      %v3887 = vadd.f32 %v3377, %v3810
      %v3888 = vadd.f32 %v3378, %v3813
      %v3889 = vadd.f32 %v3379, %v3816
      %v3890 = vadd.f32 %v3380, %v3819
      %v3891 = vadd.f32 %v3381, %v3822
      %v3892 = vadd.f32 %v3382, %v3825
      %v3893 = vadd.f32 %v3383, %v3828
      %v3894 = vadd.f32 %v3384, %v3831
      %v3895 = vadd.f32 %v3385, %v3834
      %v3896 = vadd.f32 %v3386, %v3837
      %v3897 = vadd.f32 %v3387, %v3840
      %v3898 = vadd.f32 %v3388, %v3843
      %v3899 = vadd.f32 %v3389, %v3846
      %v3900 = vadd.f32 %v3390, %v3849
      %v3901 = vadd.f32 %v3391, %v3852
      %vm3902 = vcmp.gt.f32.partialorder %v3854, 0.0
      %vm3903 = vcmp.gt.f32.partialorder %v3855, 0.0
      %vm3904 = vcmp.gt.f32.partialorder %v3856, 0.0
      %vm3905 = vcmp.gt.f32.partialorder %v3857, 0.0
      %vm3906 = vcmp.gt.f32.partialorder %v3858, 0.0
      %vm3907 = vcmp.gt.f32.partialorder %v3859, 0.0
      %vm3908 = vcmp.gt.f32.partialorder %v3860, 0.0
      %vm3909 = vcmp.gt.f32.partialorder %v3861, 0.0
      %vm3910 = vcmp.gt.f32.partialorder %v3862, 0.0
      %vm3911 = vcmp.gt.f32.partialorder %v3863, 0.0
      %vm3912 = vcmp.gt.f32.partialorder %v3864, 0.0
      %vm3913 = vcmp.gt.f32.partialorder %v3865, 0.0
      %vm3914 = vcmp.gt.f32.partialorder %v3866, 0.0
      %vm3915 = vcmp.gt.f32.partialorder %v3867, 0.0
      %vm3916 = vcmp.gt.f32.partialorder %v3868, 0.0
      %vm3917 = vcmp.gt.f32.partialorder %v3869, 0.0
      %vm3918 = vcmp.gt.f32.partialorder %v3870, 0.0
      %vm3919 = vcmp.gt.f32.partialorder %v3871, 0.0
      %vm3920 = vcmp.gt.f32.partialorder %v3872, 0.0
      %vm3921 = vcmp.gt.f32.partialorder %v3873, 0.0
      %vm3922 = vcmp.gt.f32.partialorder %v3874, 0.0
      %vm3923 = vcmp.gt.f32.partialorder %v3875, 0.0
      %vm3924 = vcmp.gt.f32.partialorder %v3876, 0.0
      %vm3925 = vcmp.gt.f32.partialorder %v3877, 0.0
      %vm3926 = vcmp.gt.f32.partialorder %v3878, 0.0
      %vm3927 = vcmp.gt.f32.partialorder %v3879, 0.0
      %vm3928 = vcmp.gt.f32.partialorder %v3880, 0.0
      %vm3929 = vcmp.gt.f32.partialorder %v3881, 0.0
      %vm3930 = vcmp.gt.f32.partialorder %v3882, 0.0
      %vm3931 = vcmp.gt.f32.partialorder %v3883, 0.0
      %vm3932 = vcmp.gt.f32.partialorder %v3884, 0.0
      %vm3933 = vcmp.gt.f32.partialorder %v3885, 0.0
      %vm3934 = vcmp.gt.f32.partialorder %v3886, 0.0
      %vm3935 = vcmp.gt.f32.partialorder %v3887, 0.0
      %vm3936 = vcmp.gt.f32.partialorder %v3888, 0.0
      %vm3937 = vcmp.gt.f32.partialorder %v3889, 0.0
      %vm3938 = vcmp.gt.f32.partialorder %v3890, 0.0
      %vm3939 = vcmp.gt.f32.partialorder %v3891, 0.0
      %vm3940 = vcmp.gt.f32.partialorder %v3892, 0.0
      %vm3941 = vcmp.gt.f32.partialorder %v3893, 0.0
      %vm3942 = vcmp.gt.f32.partialorder %v3894, 0.0
      %vm3943 = vcmp.gt.f32.partialorder %v3895, 0.0
      %vm3944 = vcmp.gt.f32.partialorder %v3896, 0.0
      %vm3945 = vcmp.gt.f32.partialorder %v3897, 0.0
      %vm3946 = vcmp.gt.f32.partialorder %v3898, 0.0
      %vm3947 = vcmp.gt.f32.partialorder %v3899, 0.0
      %vm3948 = vcmp.gt.f32.partialorder %v3900, 0.0
      %vm3949 = vcmp.gt.f32.partialorder %v3901, 0.0
      %v3950 = vmul.f32 %v3854, 0.2
      %v3951 = vmul.f32 %v3855, 0.2
      %v3952 = vmul.f32 %v3856, 0.2
      %v3953 = vmul.f32 %v3857, 0.2
      %v3954 = vmul.f32 %v3858, 0.2
      %v3955 = vmul.f32 %v3859, 0.2
      %v3956 = vmul.f32 %v3860, 0.2
      %v3957 = vmul.f32 %v3861, 0.2
      %v3958 = vmul.f32 %v3862, 0.2
      %v3959 = vmul.f32 %v3863, 0.2
      %v3960 = vmul.f32 %v3864, 0.2
      %v3961 = vmul.f32 %v3865, 0.2
      %v3962 = vmul.f32 %v3866, 0.2
      %v3963 = vmul.f32 %v3867, 0.2
      %v3964 = vmul.f32 %v3868, 0.2
      %v3965 = vmul.f32 %v3869, 0.2
      %v3966 = vmul.f32 %v3870, 0.2
      %v3967 = vmul.f32 %v3871, 0.2
      %v3968 = vmul.f32 %v3872, 0.2
      %v3969 = vmul.f32 %v3873, 0.2
      %v3970 = vmul.f32 %v3874, 0.2
      %v3971 = vmul.f32 %v3875, 0.2
      %v3972 = vmul.f32 %v3876, 0.2
      %v3973 = vmul.f32 %v3877, 0.2
      %v3974 = vmul.f32 %v3878, 0.2
      %v3975 = vmul.f32 %v3879, 0.2
      %v3976 = vmul.f32 %v3880, 0.2
      %v3977 = vmul.f32 %v3881, 0.2
      %v3978 = vmul.f32 %v3882, 0.2
      %v3979 = vmul.f32 %v3883, 0.2
      %v3980 = vmul.f32 %v3884, 0.2
      %v3981 = vmul.f32 %v3885, 0.2
      %v3982 = vmul.f32 %v3886, 0.2
      %v3983 = vmul.f32 %v3887, 0.2
      %v3984 = vmul.f32 %v3888, 0.2
      %v3985 = vmul.f32 %v3889, 0.2
      %v3986 = vmul.f32 %v3890, 0.2
      %v3987 = vmul.f32 %v3891, 0.2
      %v3988 = vmul.f32 %v3892, 0.2
      %v3989 = vmul.f32 %v3893, 0.2
      %v3990 = vmul.f32 %v3894, 0.2
      %v3991 = vmul.f32 %v3895, 0.2
      %v3992 = vmul.f32 %v3896, 0.2
      %v3993 = vmul.f32 %v3897, 0.2
      %v3994 = vmul.f32 %v3898, 0.2
      %v3995 = vmul.f32 %v3899, 0.2
      %v3996 = vmul.f32 %v3900, 0.2
      %v3997 = vmul.f32 %v3901, 0.2
      %v3998 = vsel %vm3902, %v3854, %v3950
      %v3999 = vsel %vm3903, %v3855, %v3951
      %v4000 = vsel %vm3904, %v3856, %v3952
      %v4001 = vsel %vm3905, %v3857, %v3953
      %v4002 = vsel %vm3906, %v3858, %v3954
      %v4003 = vsel %vm3907, %v3859, %v3955
      %v4004 = vsel %vm3908, %v3860, %v3956
      %v4005 = vsel %vm3909, %v3861, %v3957
      %v4006 = vsel %vm3910, %v3862, %v3958
      %v4007 = vsel %vm3911, %v3863, %v3959
      %v4008 = vsel %vm3912, %v3864, %v3960
      %v4009 = vsel %vm3913, %v3865, %v3961
      %v4010 = vsel %vm3914, %v3866, %v3962
      %v4011 = vsel %vm3915, %v3867, %v3963
      %v4012 = vsel %vm3916, %v3868, %v3964
      %v4013 = vsel %vm3917, %v3869, %v3965
      %v4014 = vsel %vm3918, %v3870, %v3966
      %v4015 = vsel %vm3919, %v3871, %v3967
      %v4016 = vsel %vm3920, %v3872, %v3968
      %v4017 = vsel %vm3921, %v3873, %v3969
      %v4018 = vsel %vm3922, %v3874, %v3970
      %v4019 = vsel %vm3923, %v3875, %v3971
      %v4020 = vsel %vm3924, %v3876, %v3972
      %v4021 = vsel %vm3925, %v3877, %v3973
      %v4022 = vsel %vm3926, %v3878, %v3974
      %v4023 = vsel %vm3927, %v3879, %v3975
      %v4024 = vsel %vm3928, %v3880, %v3976
      %v4025 = vsel %vm3929, %v3881, %v3977
      %v4026 = vsel %vm3930, %v3882, %v3978
      %v4027 = vsel %vm3931, %v3883, %v3979
      %v4028 = vsel %vm3932, %v3884, %v3980
      %v4029 = vsel %vm3933, %v3885, %v3981
      %v4030 = vsel %vm3934, %v3886, %v3982
      %v4031 = vsel %vm3935, %v3887, %v3983
      %v4032 = vsel %vm3936, %v3888, %v3984
      %v4033 = vsel %vm3937, %v3889, %v3985
      %v4034 = vsel %vm3938, %v3890, %v3986
      %v4035 = vsel %vm3939, %v3891, %v3987
      %v4036 = vsel %vm3940, %v3892, %v3988
      %v4037 = vsel %vm3941, %v3893, %v3989
      %v4038 = vsel %vm3942, %v3894, %v3990
      %v4039 = vsel %vm3943, %v3895, %v3991
      %v4040 = vsel %vm3944, %v3896, %v3992
      %v4041 = vsel %vm3945, %v3897, %v3993
      %v4042 = vsel %vm3946, %v3898, %v3994
      %v4043 = vsel %vm3947, %v3899, %v3995
      %v4044 = vsel %vm3948, %v3900, %v3996
      %v4045 = vsel %vm3949, %v3901, %v3997
      %v4046 = vld [vmem:[%s7] sm:$0x1]
      %v4047 = vld [vmem:[#allocation2] sm:$0x1]
      %4049 = vset.pattern.permute.xlu0 0
      %4050 = vperm.xlu0 %4049, %v4047
      %v4051 = vpop.permute.xlu0 %4050
      %v4053 = vperm.slane %v4051, 0
      %4054 = vmatpush.xpose.msra.mxu0 %v4013
      %4055 = vmatpush.xpose.msra.mxu0 %v4012
      %4056 = vmatpush.xpose.msra.mxu0 %v4011
      %4057 = vmatpush.xpose.msra.mxu0 %v4010
      %4058 = vmatpush.xpose.msra.mxu0 %v4009
      %4059 = vmatpush.xpose.msra.mxu0 %v4008
      %4060 = vmatpush.xpose.msra.mxu0 %v4007
      %4061 = vmatpush.xpose.msra.mxu0 %v4006
      %4062 = vmatpush.xpose.msra.mxu0 %v4005
      %4063 = vmatpush.xpose.msra.mxu0 %v4004
      %4064 = vmatpush.xpose.msra.mxu0 %v4003
      %4065 = vmatpush.xpose.msra.mxu0 %v4002
      %4066 = vmatpush.xpose.msra.mxu0 %v4001
      %4067 = vmatpush.xpose.msra.mxu0 %v4000
      %4068 = vmatpush.xpose.msra.mxu0 %v3999
      %4069 = vmatpush.xpose.msra.mxu0 %v3998
      %4070 = vmatmul.f32.gmra.mxu0 %v4046
      %v4071 = vpop.f32.mrf.mxu0
      %v4072 = vadd.f32 %v4053, %v4071
      %4073 = vdwg.mxu0
      %4074 = vmatpush.xpose.msra.mxu0 %v4029
      %4075 = vmatpush.xpose.msra.mxu0 %v4028
      %4076 = vmatpush.xpose.msra.mxu0 %v4027
      %4077 = vmatpush.xpose.msra.mxu0 %v4026
      %4078 = vmatpush.xpose.msra.mxu0 %v4025
      %4079 = vmatpush.xpose.msra.mxu0 %v4024
      %4080 = vmatpush.xpose.msra.mxu0 %v4023
      %4081 = vmatpush.xpose.msra.mxu0 %v4022
      %4082 = vmatpush.xpose.msra.mxu0 %v4021
      %4083 = vmatpush.xpose.msra.mxu0 %v4020
      %4084 = vmatpush.xpose.msra.mxu0 %v4019
      %4085 = vmatpush.xpose.msra.mxu0 %v4018
      %4086 = vmatpush.xpose.msra.mxu0 %v4017
      %4087 = vmatpush.xpose.msra.mxu0 %v4016
      %4088 = vmatpush.xpose.msra.mxu0 %v4015
      %4089 = vmatpush.xpose.msra.mxu0 %v4014
      %4090 = vmatmul.f32.gmra.mxu0 %v4046
      %v4091 = vpop.f32.mrf.mxu0
      %v4092 = vadd.f32 %v4053, %v4091
      %4093 = vdwg.mxu0
      %4094 = vmatpush.xpose.msra.mxu0 %v4045
      %4095 = vmatpush.xpose.msra.mxu0 %v4044
      %4096 = vmatpush.xpose.msra.mxu0 %v4043
      %4097 = vmatpush.xpose.msra.mxu0 %v4042
      %4098 = vmatpush.xpose.msra.mxu0 %v4041
      %4099 = vmatpush.xpose.msra.mxu0 %v4040
      %4100 = vmatpush.xpose.msra.mxu0 %v4039
      %4101 = vmatpush.xpose.msra.mxu0 %v4038
      %4102 = vmatpush.xpose.msra.mxu0 %v4037
      %4103 = vmatpush.xpose.msra.mxu0 %v4036
      %4104 = vmatpush.xpose.msra.mxu0 %v4035
      %4105 = vmatpush.xpose.msra.mxu0 %v4034
      %4106 = vmatpush.xpose.msra.mxu0 %v4033
      %4107 = vmatpush.xpose.msra.mxu0 %v4032
      %4108 = vmatpush.xpose.msra.mxu0 %v4031
      %4109 = vmatpush.xpose.msra.mxu0 %v4030
      %4110 = vmatmul.f32.gmra.mxu0 %v4046
      %v4111 = vpop.f32.mrf.mxu0
      %v4112 = vadd.f32 %v4053, %v4111
      %4113 = vdwg.mxu0
      %v4114 = vxor.u32 %v4072, 2147483648
      %v4115 = vxor.u32 %v4092, 2147483648
      %v4116 = vxor.u32 %v4112, 2147483648
      %v4117 = vmul.f32 %v4114, 1.442695
      %v4118 = vpow.pop %v4117
      %v4119 = vmul.f32 %v4115, 1.442695
      %v4120 = vpow.pop %v4119
      %v4121 = vmul.f32 %v4116, 1.442695
      %v4122 = vpow.pop %v4121
      %v4123 = vadd.f32 %v4118, 1.0
      %v4124 = vadd.f32 %v4120, 1.0
      %v4125 = vadd.f32 %v4122, 1.0
      %v4126 = vrcp.pop %v4123
      %v4127 = vmul.f32 %v4123, %v4126
      %v4128 = vsub.f32 1.0, %v4127
      %v4129 = vmul.f32 %v4126, %v4128
      %v4130 = vadd.f32 %v4126, %v4129
      %vm4131 = vweird.f32 %v4123
      %vm4132 = vweird.f32 %v4126
      %vm4133 = vmor %vm4131, %vm4132
      %v4134 = vsel %vm4133, %v4126, %v4130
      %v4135 = vand.u32 2147483647, %v4123
      %vm4136 = vcmp.eq.f32.partialorder %v4135, 8.507059e+37
      %v4137 = vand.u32 %v4123, 2147483648
      %v4138 = vor.u32 1.1754944e-38, %v4137
      %v4139 = vsel %vm4136, %v4138, %v4134
      %v4140 = vmul.f32 1.0, %v4139
      %v4141 = vrcp.pop %v4124
      %v4142 = vmul.f32 %v4124, %v4141
      %v4143 = vsub.f32 1.0, %v4142
      %v4144 = vmul.f32 %v4141, %v4143
      %v4145 = vadd.f32 %v4141, %v4144
      %vm4146 = vweird.f32 %v4124
      %vm4147 = vweird.f32 %v4141
      %vm4148 = vmor %vm4146, %vm4147
      %v4149 = vsel %vm4148, %v4141, %v4145
      %v4150 = vand.u32 2147483647, %v4124
      %vm4151 = vcmp.eq.f32.partialorder %v4150, 8.507059e+37
      %v4152 = vand.u32 %v4124, 2147483648
      %v4153 = vor.u32 1.1754944e-38, %v4152
      %v4154 = vsel %vm4151, %v4153, %v4149
      %v4155 = vmul.f32 1.0, %v4154
      %v4156 = vrcp.pop %v4125
      %v4157 = vmul.f32 %v4125, %v4156
      %v4158 = vsub.f32 1.0, %v4157
      %v4159 = vmul.f32 %v4156, %v4158
      %v4160 = vadd.f32 %v4156, %v4159
      %vm4161 = vweird.f32 %v4125
      %vm4162 = vweird.f32 %v4156
      %vm4163 = vmor %vm4161, %vm4162
      %v4164 = vsel %vm4163, %v4156, %v4160
      %v4165 = vand.u32 2147483647, %v4125
      %vm4166 = vcmp.eq.f32.partialorder %v4165, 8.507059e+37
      %v4167 = vand.u32 %v4125, 2147483648
      %v4168 = vor.u32 1.1754944e-38, %v4167
      %v4169 = vsel %vm4166, %v4168, %v4164
      %v4170 = vmul.f32 1.0, %v4169
      %v4174 = vrot.slane %v4155, 7
      %v4175 = vrot.slane %v4170, 6
      %vm4176 = vcmask 1040384
      %v4177 = vsel %vm4176, %v4140, %v4174
      %vm4178 = vcmask 1041408
      %v4179 = vsel %vm4178, %v4177, %v4175
      %v4181 = vlaneseq
      %vm4182 = vcmp.ge.s32.totalorder %v4181, 0
      %vm4183 = vcmp.lt.s32.totalorder %v4181, 384
      %vm4184 = vmand %vm4182, %vm4183
      %4185 = vst.msk [vmem:[%s384] sm:$0x7] %vm4184, %v4179
      %s4186 = smul.u32 3, %s27
      %p4187 = scmp.lt.s32.totalorder %s26, 1
      %s4188 = scalar_select %p4187, %s26, 1
      %p4189 = scmp.lt.s32.totalorder %s4186, 2
      %s4190 = scalar_select %p4189, %s4186, 2
      %s4191 = smul.addr %s4188, 3
      %s4192 = sadd.s32 %s4190, %s4191
      %s4193 = scalar_lea.vmem %s9, %s4192
      // Predicated region
      $region57: #{occ_simple_decoder.1} parent=55 // pred_check
        %p4194 = pneg %p255
      $region58: #{occ_simple_decoder.1} parent=55 // pred_check_branch
        %4196 = sbr.rel (%p4194) target = $region60
      $region59: #{occ_simple_decoder.1} parent=55 // pred_region
        %s4197 = smul.u32 3, %s27
      $region60: #{occ_simple_decoder.1} parent=55 // pred_fallthru
        _
    $region56: #{occ_simple_decoder.1} parent=5 // pred_fallthru
      _
    %p4198 = scmp.le.s32.totalorder 2, %s17
    // Predicated region
    $region61: #{occ_simple_decoder.1} parent=5 // pred_check
      %p4199 = pneg %p4198
    $region62: #{occ_simple_decoder.1} parent=5 // pred_check_branch
      %4201 = sbr.rel (%p4199) target = $region64
    $region63: #{occ_simple_decoder.1} parent=5 // pred_region
      %s4202 = ssub.s32 %s17, 2
      // Predicated region
      $region65: #{occ_simple_decoder.1} parent=63 // pred_check
        %p4203 = pneg %p261
      $region66: #{occ_simple_decoder.1} parent=63 // pred_check_branch
        %4205 = sbr.rel (%p4203) target = $region68
      $region67: #{occ_simple_decoder.1} parent=63 // pred_region
        %s4206 = smul.u32 3, %s29
        %p4207 = scmp.lt.s32.totalorder %s28, 1
        %s4208 = scalar_select %p4207, %s28, 1
        %p4209 = scmp.lt.s32.totalorder %s4206, 2
        %s4210 = scalar_select %p4209, %s4206, 2
        %s4211 = smul.addr %s4208, 3
        %s4212 = sadd.s32 %s4210, %s4211
        %s4213 = scalar_lea.vmem %s9, %s4212
      $region68: #{occ_simple_decoder.1} parent=63 // pred_fallthru
        _
    $region64: #{occ_simple_decoder.1} parent=5 // pred_fallthru
      _
  $region6: #{occ_simple_decoder.1} parent=0 // loop_footer
    %s21 = sadd.s32 1, %s17
  $region7: #{occ_simple_decoder.1} parent=0 // loop_footer_branch
    %16 = sbr.rel target = $region3
  $region8: #{occ_simple_decoder.1} parent=0 // loop_exit
    _

</llo_original>
